<compile_context>
chip_gen: v7x
topology: tpu7x:2x2x1
jax: 0.10.0
libtpu: 0.0.40
codegen_flags: <defaults>
</compile_context>

<pallas_src>
import math
import jax
import jax.numpy as jnp
from jax.experimental import pallas as pl
from jax.experimental import pallas as _pl_unused  # keep namespace tidy
from jax.experimental.pallas import tpu as pltpu  # noqa: F401  (not needed for this tiny kernel)

# ------------------------- small config (matches module hyperparam structure) ---
N_VOCAB   = 16
N_LAYERS  = 3            # module arg; encoder stacks N_LAYERS - 1 = 2 layers
N_ENC     = N_LAYERS - 1
PAD_ID    = 0
FINALE_ID = 2
D_MODEL   = 64
D_EMB     = 64
D_INNER   = 128
N_HEAD    = 4
D_K       = 16
D_V       = 16
N_SEQ_MAX = 16
SCALE_EMB = True
EPS       = 1e-6

B   = 2
S   = 8
BS  = B * S
HDK = N_HEAD * D_K
HDV = N_HEAD * D_V

# ------------------------- packed-slab layouts -----------------------------------
# bf16 weight slab, width 128.  Every matrix starts at column 0 and at a row offset
# that is a multiple of 16 (bf16 native tile = (16, 128)) so matmul operand slices
# need no relayout.
R_EMB        = 0                               # (N_VOCAB, D_MODEL)
R_OUT        = 16                              # fused (mu|logvar) proj (D_MODEL, 128)
R_L0         = 80                              # first encoder layer block
W_VO_OFF     = N_HEAD * D_MODEL                # per-head Wvo after per-head A
W_W1_OFF     = 2 * N_HEAD * D_MODEL            # FFN W1 (D_MODEL, D_INNER)
W_W2_OFF     = W_W1_OFF + D_MODEL              # FFN W2 (D_INNER, D_MODEL)
W_LAYER_ROWS = W_W2_OFF + D_INNER              # = 704
W_ROWS       = R_L0 + N_ENC * W_LAYER_ROWS     # = 1488

# f32 small-param slab, width 128 (pos enc, LN gains/biases, FFN biases).
P_POS        = 0                               # (BS, D_MODEL)
P_LN0        = 16                              # row 16 = gain, row 17 = bias
P_L0         = 18
P_LAYER_ROWS = 6                               # ln1_g, ln1_b, ln2_g, ln2_b, b1, b2
P_ROWS       = P_L0 + N_ENC * P_LAYER_ROWS     # = 30

# f32 dynamic slab (per-call): rows [0:BS): [:, 0:BS]=additive attention bias,
# [:, 128]=token ids (as exact small floats); rows [BS:BS+8): finale selector (B used).
DYN_ROWS = BS + 8
DYN_COLS = 256


# ------------------------- in-kernel helpers ------------------------------------
def _layer_norm(x, g, b):
    # torch.nn.LayerNorm(eps=1e-6): population variance over last dim
    mu = jnp.mean(x, axis=-1, keepdims=True)
    var = jnp.mean((x - mu) ** 2, axis=-1, keepdims=True)
    return (x - mu) * jax.lax.rsqrt(var + EPS) * g + b


# ------------------------- fused Pallas kernel ----------------------------------
def seqvae_kernel(dyn_ref, w_ref, p_ref, out_ref):
    f32 = jnp.float32
    bf16 = jnp.bfloat16

    bias = dyn_ref[0:BS, 0:BS]                       # (BS, BS) additive mask (0 / -1e9)
    ids = dyn_ref[0:BS, 128:129].astype(jnp.int32)   # (BS, 1) token ids
    sel = dyn_ref[BS:BS + 8, 0:BS]                   # (8, BS) finale selector (rows >= B are 0)

    # ---- embedding as one-hot matmul + positional encoding + LayerNorm ----
    vocab = jax.lax.broadcasted_iota(jnp.int32, (BS, N_VOCAB), 1)
    one_hot = (vocab == ids).astype(bf16)            # (BS, V)
    emb = w_ref[R_EMB:R_EMB + N_VOCAB, 0:D_MODEL]    # (V, D) bf16
    x = jnp.dot(one_hot, emb, preferred_element_type=f32)          # (BS, D) f32
    if SCALE_EMB:
        x = x * (D_MODEL ** 0.5)
    x = x + p_ref[P_POS:P_POS + BS, 0:D_MODEL]
    x = _layer_norm(x, p_ref[P_LN0:P_LN0 + 1, 0:D_MODEL],
                    p_ref[P_LN0 + 1:P_LN0 + 2, 0:D_MODEL])

    # ---- static-unrolled encoder layers (post-norm MHA + FFN, dropout = eval identity) ----
    # NOTE: a fully-masked query row degenerates to a softmax over all (masked) keys, same
    # -1e9 masked_fill + softmax behavior class as the reference; such rows are never finale
    # tokens so they never reach the output.
    for l in range(N_ENC):
        wbase = R_L0 + l * W_LAYER_ROWS
        pbase = P_L0 + l * P_LAYER_ROWS
        xb = x.astype(bf16)

        y = jnp.zeros((BS, D_MODEL), f32)
        for h in range(N_HEAD):                      # static unrolled head loop
            a_w = w_ref[wbase + h * D_MODEL:wbase + (h + 1) * D_MODEL, 0:D_MODEL]
            vo_w = w_ref[wbase + W_VO_OFF + h * D_MODEL:
                         wbase + W_VO_OFF + (h + 1) * D_MODEL, 0:D_MODEL]
            # scores_h = x @ (Wq_h Wk_h^T / sqrt(dk)) @ x^T -- no transpose, no lane slices
            t = jnp.dot(xb, a_w, preferred_element_type=f32)                 # (BS, D)
            s = jax.lax.dot_general(t.astype(bf16), xb,
                                    (((1,), (1,)), ((), ())),
                                    preferred_element_type=f32) + bias       # (BS, BS)
            # manual softmax; reciprocal on the EUP (free slot here)
            s = s - jnp.max(s, axis=-1, keepdims=True)
            e = jnp.exp(s)
            p = e * pl.reciprocal(jnp.sum(e, axis=-1, keepdims=True), approx=True)
            # head contribution: p_h @ (x @ (Wv_h Wo_h)) -- folded V/O projection
            vo = jnp.dot(xb, vo_w, preferred_element_type=f32)               # (BS, D)
            y = y + jnp.dot(p.astype(bf16), vo.astype(bf16),
                            preferred_element_type=f32)

        y = y + x
        y = _layer_norm(y, p_ref[pbase + 0:pbase + 1, 0:D_MODEL],
                        p_ref[pbase + 1:pbase + 2, 0:D_MODEL])

        yb = y.astype(bf16)
        w1 = w_ref[wbase + W_W1_OFF:wbase + W_W1_OFF + D_MODEL, 0:D_INNER]
        w2 = w_ref[wbase + W_W2_OFF:wbase + W_W2_OFF + D_INNER, 0:D_MODEL]
        b1 = p_ref[pbase + 4:pbase + 5, 0:D_INNER]
        b2 = p_ref[pbase + 5:pbase + 6, 0:D_MODEL]
        h1 = jnp.maximum(jnp.dot(yb, w1, preferred_element_type=f32) + b1, 0.0)
        h2 = jnp.dot(h1.astype(bf16), w2, preferred_element_type=f32) + b2
        x = _layer_norm(h2 + y, p_ref[pbase + 2:pbase + 3, 0:D_MODEL],
                        p_ref[pbase + 3:pbase + 4, 0:D_MODEL])

    # ---- on-device finale selection (selector matmul) + fused (mu|logvar) projection ----
    # TODO(synk): the reference `enc_output[seq == finale_id]` is a dynamic-count boolean
    # gather; with static shapes we assume exactly one finale token per sequence (multiple
    # finales would be summed, zero finales yields a zero row).
    finale_x = jnp.dot(sel, x, preferred_element_type=f32)                   # (8, D)
    w_out = w_ref[R_OUT:R_OUT + D_MODEL, 0:2 * D_EMB]                        # (D, 128)
    out_ref[...] = jnp.dot(finale_x.astype(bf16), w_out,
                           preferred_element_type=f32)                       # (8, 128)


# ------------------------- glue (plain JAX, all inside one jit) -------------------
def sinusoid_table(n_pos, d_hid):
    pos = jnp.arange(n_pos, dtype=jnp.float32)[:, None]
    i = jnp.arange(d_hid)[None, :]
    angle = pos / jnp.power(10000.0, (2 * (i // 2)).astype(jnp.float32) / d_hid)
    return jnp.where(i % 2 == 0, jnp.sin(angle), jnp.cos(angle)).astype(jnp.float32)


@jax.jit
def _forward(seq, wslab, pslab):
    flat = seq.reshape(-1).astype(jnp.int32)
    bidx = jnp.repeat(jnp.arange(B), S)
    pidx = jnp.tile(jnp.arange(S), B)
    # additive attention bias over the flattened (B*S) token axis:
    # 0 where (same batch) & (key pos <= query pos) & (key != pad); -1e9 elsewhere.
    keep = ((bidx[:, None] == bidx[None, :]) &
            (pidx[None, :] <= pidx[:, None]) &
            (flat != PAD_ID)[None, :])
    bias = jnp.where(keep, 0.0, -1e9).astype(jnp.float32)
    # finale selector: sel[b, j] = 1 iff flattened token j belongs to batch b and is FINALE.
    sel = ((bidx[None, :] == jnp.arange(B)[:, None]) &
           (flat == FINALE_ID)[None, :]).astype(jnp.float32)

    dyn = jnp.zeros((DYN_ROWS, DYN_COLS), jnp.float32)
    dyn = dyn.at[:BS, :BS].set(bias)
    dyn = dyn.at[:BS, 128].set(flat.astype(jnp.float32))
    dyn = dyn.at[BS:BS + B, :BS].set(sel)

    out = pl.pallas_call(
        seqvae_kernel,
        out_shape=jax.ShapeDtypeStruct((8, 2 * D_EMB), jnp.float32),
        # no grid / no BlockSpecs: the three packed slabs are whole-array VMEM blocks
    )(dyn, wslab, pslab)
    return out[:B, :D_EMB], out[:B, D_EMB:2 * D_EMB]


def seqvae_encoder_finale(seq, params):
    return _forward(seq, params["wslab"], params["pslab"])


# ------------------------- parameters (packed slabs) ------------------------------
def init_params(key):
    keys = list(jax.random.split(key, 32))

    def nrm(shape, scale=0.05):
        return (scale * jax.random.normal(keys.pop(), shape)).astype(jnp.float32)

    wslab = jnp.zeros((W_ROWS, 128), jnp.float32)
    pslab = jnp.zeros((P_ROWS, 128), jnp.float32)

    emb = nrm((N_VOCAB, D_MODEL), 1.0).at[PAD_ID].set(0.0)      # padding_idx row is zero
    wslab = wslab.at[R_EMB:R_EMB + N_VOCAB, :D_MODEL].set(emb)
    # fused bias-free (mu | logvar) projection -> lane-dense 128-wide output
    w_out = jnp.concatenate([nrm((D_MODEL, D_EMB)), nrm((D_MODEL, D_EMB))], axis=1)
    wslab = wslab.at[R_OUT:R_OUT + D_MODEL, :2 * D_EMB].set(w_out)

    pos = jnp.tile(sinusoid_table(N_SEQ_MAX, D_MODEL)[:S], (B, 1))   # (BS, D)
    pslab = pslab.at[P_POS:P_POS + BS, :D_MODEL].set(pos)
    pslab = pslab.at[P_LN0, :D_MODEL].set(1.0)                        # ln0 gain (bias row stays 0)

    inv_temp = 1.0 / math.sqrt(D_K)
    for l in range(N_ENC):
        wq = nrm((D_MODEL, HDK))
        wk = nrm((D_MODEL, HDK))
        wv = nrm((D_MODEL, HDV))
        wo = nrm((HDV, D_MODEL))
        w1 = nrm((D_MODEL, D_INNER))
        w2 = nrm((D_INNER, D_MODEL))

        wbase = R_L0 + l * W_LAYER_ROWS
        for h in range(N_HEAD):
            # fold 1/sqrt(d_k) and the K projection into a single per-head bilinear weight
            a_h = (wq[:, h * D_K:(h + 1) * D_K] @ wk[:, h * D_K:(h + 1) * D_K].T) * inv_temp
            # fold the V projection into the output projection
            vo_h = wv[:, h * D_V:(h + 1) * D_V] @ wo[h * D_V:(h + 1) * D_V, :]
            r = wbase + h * D_MODEL
            wslab = wslab.at[r:r + D_MODEL, :D_MODEL].set(a_h)
            r = wbase + W_VO_OFF + h * D_MODEL
            wslab = wslab.at[r:r + D_MODEL, :D_MODEL].set(vo_h)
        wslab = wslab.at[wbase + W_W1_OFF:wbase + W_W1_OFF + D_MODEL, :D_INNER].set(w1)
        wslab = wslab.at[wbase + W_W2_OFF:wbase + W_W2_OFF + D_INNER, :D_MODEL].set(w2)

        pbase = P_L0 + l * P_LAYER_ROWS
        pslab = pslab.at[pbase + 0, :D_MODEL].set(1.0)      # ln1 gain
        pslab = pslab.at[pbase + 2, :D_MODEL].set(1.0)      # ln2 gain
        pslab = pslab.at[pbase + 4, :D_INNER].set(nrm((D_INNER,)))   # FFN b1
        pslab = pslab.at[pbase + 5, :D_MODEL].set(nrm((D_MODEL,)))   # FFN b2

    return {"wslab": wslab.astype(jnp.bfloat16), "pslab": pslab}


# ------------------------- main ---------------------------------------------------
if __name__ == "__main__":
    key = jax.random.PRNGKey(0)
    kp, ks = jax.random.split(key)
    params = init_params(kp)

    seq = jax.random.randint(ks, (B, S), 3, N_VOCAB, dtype=jnp.int32)
    seq = seq.at[:, -2].set(FINALE_ID)   # exactly one finale token per sequence
    seq = seq.at[:, -1].set(PAD_ID)      # trailing padding

    mu, logvar = seqvae_encoder_finale(seq, params)
    jax.block_until_ready((mu, logvar))

    assert mu.shape == (B, D_EMB) and logvar.shape == (B, D_EMB)
    assert bool(jnp.all(jnp.isfinite(mu))) and bool(jnp.all(jnp.isfinite(logvar)))
    print("KERNEL_OK")
</pallas_src>

<mosaic_0001>
module attributes {stable_mosaic.version = 11 : i64} {
  func.func @seqvae_kernel(%arg0: memref<24x256xf32, #tpu.memory_space<vmem>>, %arg1: memref<1488x128xbf16, #tpu.memory_space<vmem>>, %arg2: memref<30x128xf32, #tpu.memory_space<vmem>>, %arg3: memref<8x128xf32, #tpu.memory_space<vmem>>) attributes {dimension_semantics = [], scalar_prefetch = 0 : i64, scratch_operands = 0 : i64, tpu.core_type = #tpu.core_type<tc>} {
    %c0 = arith.constant 0 : index
    %c0_0 = arith.constant 0 : index
    %0 = vector.load %arg0[%c0, %c0_0] : memref<24x256xf32, #tpu.memory_space<vmem>>, vector<16x16xf32>
    %c0_1 = arith.constant 0 : index
    %c128 = arith.constant 128 : index
    %1 = vector.load %arg0[%c0_1, %c128] : memref<24x256xf32, #tpu.memory_space<vmem>>, vector<16x1xf32>
    %2 = arith.fptosi %1 : vector<16x1xf32> to vector<16x1xi32>
    %c16 = arith.constant 16 : index
    %c0_2 = arith.constant 0 : index
    %3 = vector.load %arg0[%c16, %c0_2] : memref<24x256xf32, #tpu.memory_space<vmem>>, vector<8x16xf32>
    %4 = tpu.iota {dimensions = array<i32: 1>} : vector<16x16xi32>
    %5 = vector.broadcast %2 : vector<16x1xi32> to vector<16x16xi32>
    %6 = arith.cmpi eq, %4, %5 : vector<16x16xi32>
    %7 = arith.extui %6 : vector<16x16xi1> to vector<16x16xi32>
    %8 = arith.sitofp %7 : vector<16x16xi32> to vector<16x16xf32>
    %9 = arith.truncf %8 : vector<16x16xf32> to vector<16x16xbf16>
    %c0_3 = arith.constant 0 : index
    %c0_4 = arith.constant 0 : index
    %10 = vector.load %arg1[%c0_3, %c0_4] : memref<1488x128xbf16, #tpu.memory_space<vmem>>, vector<16x64xbf16>
    %cst = arith.constant dense<0.000000e+00> : vector<16x64xf32>
    %11 = tpu.matmul %9, %10, %cst {dimension_numbers = #tpu.dot_dimension_numbers<[1], [0], [0], [1], [0, 0, 1, 1], [], []>} : vector<16x16xbf16>, vector<16x64xbf16>, vector<16x64xf32> -> vector<16x64xf32>
    %cst_5 = arith.constant 8.000000e+00 : f32
    %12 = vector.broadcast %cst_5 : f32 to vector<16x64xf32>
    %13 = arith.mulf %11, %12 : vector<16x64xf32>
    %c0_6 = arith.constant 0 : index
    %c0_7 = arith.constant 0 : index
    %14 = vector.load %arg2[%c0_6, %c0_7] : memref<30x128xf32, #tpu.memory_space<vmem>>, vector<16x64xf32>
    %15 = arith.addf %13, %14 : vector<16x64xf32>
    %c16_8 = arith.constant 16 : index
    %c0_9 = arith.constant 0 : index
    %16 = vector.load %arg2[%c16_8, %c0_9] : memref<30x128xf32, #tpu.memory_space<vmem>>, vector<1x64xf32>
    %c17 = arith.constant 17 : index
    %c0_10 = arith.constant 0 : index
    %17 = vector.load %arg2[%c17, %c0_10] : memref<30x128xf32, #tpu.memory_space<vmem>>, vector<1x64xf32>
    %cst_11 = arith.constant dense<0.000000e+00> : vector<16xf32>
    %18 = vector.multi_reduction <add>, %15, %cst_11 [1] : vector<16x64xf32> to vector<16xf32>
    %19 = vector.shape_cast %18 : vector<16xf32> to vector<16x1xf32>
    %cst_12 = arith.constant 6.400000e+01 : f32
    %20 = vector.broadcast %cst_12 : f32 to vector<16x1xf32>
    %21 = arith.divf %19, %20 : vector<16x1xf32>
    %22 = vector.broadcast %21 : vector<16x1xf32> to vector<16x64xf32>
    %23 = arith.subf %15, %22 : vector<16x64xf32>
    %24 = arith.mulf %23, %23 : vector<16x64xf32>
    %cst_13 = arith.constant dense<0.000000e+00> : vector<16xf32>
    %25 = vector.multi_reduction <add>, %24, %cst_13 [1] : vector<16x64xf32> to vector<16xf32>
    %26 = vector.shape_cast %25 : vector<16xf32> to vector<16x1xf32>
    %cst_14 = arith.constant 6.400000e+01 : f32
    %27 = vector.broadcast %cst_14 : f32 to vector<16x1xf32>
    %28 = arith.divf %26, %27 : vector<16x1xf32>
    %29 = vector.broadcast %21 : vector<16x1xf32> to vector<16x64xf32>
    %30 = arith.subf %15, %29 : vector<16x64xf32>
    %cst_15 = arith.constant 9.99999997E-7 : f32
    %31 = vector.broadcast %cst_15 : f32 to vector<16x1xf32>
    %32 = arith.addf %28, %31 : vector<16x1xf32>
    %33 = math.rsqrt %32 : vector<16x1xf32>
    %34 = vector.broadcast %33 : vector<16x1xf32> to vector<16x64xf32>
    %35 = arith.mulf %30, %34 : vector<16x64xf32>
    %36 = vector.broadcast %16 : vector<1x64xf32> to vector<16x64xf32>
    %37 = arith.mulf %35, %36 : vector<16x64xf32>
    %38 = vector.broadcast %17 : vector<1x64xf32> to vector<16x64xf32>
    %39 = arith.addf %37, %38 : vector<16x64xf32>
    %40 = arith.truncf %39 : vector<16x64xf32> to vector<16x64xbf16>
    %cst_16 = arith.constant 0.000000e+00 : f32
    %41 = vector.broadcast %cst_16 : f32 to vector<16x64xf32>
    %c80 = arith.constant 80 : index
    %c0_17 = arith.constant 0 : index
    %42 = vector.load %arg1[%c80, %c0_17] : memref<1488x128xbf16, #tpu.memory_space<vmem>>, vector<64x64xbf16>
    %c336 = arith.constant 336 : index
    %c0_18 = arith.constant 0 : index
    %43 = vector.load %arg1[%c336, %c0_18] : memref<1488x128xbf16, #tpu.memory_space<vmem>>, vector<64x64xbf16>
    %cst_19 = arith.constant dense<0.000000e+00> : vector<16x64xf32>
    %44 = tpu.matmul %40, %42, %cst_19 {dimension_numbers = #tpu.dot_dimension_numbers<[1], [0], [0], [1], [0, 0, 1, 1], [], []>} : vector<16x64xbf16>, vector<64x64xbf16>, vector<16x64xf32> -> vector<16x64xf32>
    %45 = arith.truncf %44 : vector<16x64xf32> to vector<16x64xbf16>
    %cst_20 = arith.constant dense<0.000000e+00> : vector<16x16xf32>
    %46 = tpu.matmul %45, %40, %cst_20 {dimension_numbers = #tpu.dot_dimension_numbers<[1], [1], [0], [0], [0, 0, 1, 0], [], []>} : vector<16x64xbf16>, vector<16x64xbf16>, vector<16x16xf32> -> vector<16x16xf32>
    %47 = arith.addf %46, %0 : vector<16x16xf32>
    %cst_21 = arith.constant dense<0xFF800000> : vector<16xf32>
    %48 = vector.multi_reduction <maximumf>, %47, %cst_21 [1] : vector<16x16xf32> to vector<16xf32>
    %49 = vector.shape_cast %48 : vector<16xf32> to vector<16x1xf32>
    %50 = vector.broadcast %49 : vector<16x1xf32> to vector<16x16xf32>
    %51 = arith.subf %47, %50 : vector<16x16xf32>
    %52 = math.exp %51 : vector<16x16xf32>
    %cst_22 = arith.constant dense<0.000000e+00> : vector<16xf32>
    %53 = vector.multi_reduction <add>, %52, %cst_22 [1] : vector<16x16xf32> to vector<16xf32>
    %54 = vector.shape_cast %53 : vector<16xf32> to vector<16x1xf32>
    %55 = tpu.reciprocal %54 {approx = true} : vector<16x1xf32> -> vector<16x1xf32>
    %56 = vector.broadcast %55 : vector<16x1xf32> to vector<16x16xf32>
    %57 = arith.mulf %52, %56 : vector<16x16xf32>
    %cst_23 = arith.constant dense<0.000000e+00> : vector<16x64xf32>
    %58 = tpu.matmul %40, %43, %cst_23 {dimension_numbers = #tpu.dot_dimension_numbers<[1], [0], [0], [1], [0, 0, 1, 1], [], []>} : vector<16x64xbf16>, vector<64x64xbf16>, vector<16x64xf32> -> vector<16x64xf32>
    %59 = arith.truncf %57 : vector<16x16xf32> to vector<16x16xbf16>
    %60 = arith.truncf %58 : vector<16x64xf32> to vector<16x64xbf16>
    %cst_24 = arith.constant dense<0.000000e+00> : vector<16x64xf32>
    %61 = tpu.matmul %59, %60, %cst_24 {dimension_numbers = #tpu.dot_dimension_numbers<[1], [0], [0], [1], [0, 0, 1, 1], [], []>} : vector<16x16xbf16>, vector<16x64xbf16>, vector<16x64xf32> -> vector<16x64xf32>
    %62 = arith.addf %41, %61 : vector<16x64xf32>
    %c144 = arith.constant 144 : index
    %c0_25 = arith.constant 0 : index
    %63 = vector.load %arg1[%c144, %c0_25] : memref<1488x128xbf16, #tpu.memory_space<vmem>>, vector<64x64xbf16>
    %c400 = arith.constant 400 : index
    %c0_26 = arith.constant 0 : index
    %64 = vector.load %arg1[%c400, %c0_26] : memref<1488x128xbf16, #tpu.memory_space<vmem>>, vector<64x64xbf16>
    %cst_27 = arith.constant dense<0.000000e+00> : vector<16x64xf32>
    %65 = tpu.matmul %40, %63, %cst_27 {dimension_numbers = #tpu.dot_dimension_numbers<[1], [0], [0], [1], [0, 0, 1, 1], [], []>} : vector<16x64xbf16>, vector<64x64xbf16>, vector<16x64xf32> -> vector<16x64xf32>
    %66 = arith.truncf %65 : vector<16x64xf32> to vector<16x64xbf16>
    %cst_28 = arith.constant dense<0.000000e+00> : vector<16x16xf32>
    %67 = tpu.matmul %66, %40, %cst_28 {dimension_numbers = #tpu.dot_dimension_numbers<[1], [1], [0], [0], [0, 0, 1, 0], [], []>} : vector<16x64xbf16>, vector<16x64xbf16>, vector<16x16xf32> -> vector<16x16xf32>
    %68 = arith.addf %67, %0 : vector<16x16xf32>
    %cst_29 = arith.constant dense<0xFF800000> : vector<16xf32>
    %69 = vector.multi_reduction <maximumf>, %68, %cst_29 [1] : vector<16x16xf32> to vector<16xf32>
    %70 = vector.shape_cast %69 : vector<16xf32> to vector<16x1xf32>
    %71 = vector.broadcast %70 : vector<16x1xf32> to vector<16x16xf32>
    %72 = arith.subf %68, %71 : vector<16x16xf32>
    %73 = math.exp %72 : vector<16x16xf32>
    %cst_30 = arith.constant dense<0.000000e+00> : vector<16xf32>
    %74 = vector.multi_reduction <add>, %73, %cst_30 [1] : vector<16x16xf32> to vector<16xf32>
    %75 = vector.shape_cast %74 : vector<16xf32> to vector<16x1xf32>
    %76 = tpu.reciprocal %75 {approx = true} : vector<16x1xf32> -> vector<16x1xf32>
    %77 = vector.broadcast %76 : vector<16x1xf32> to vector<16x16xf32>
    %78 = arith.mulf %73, %77 : vector<16x16xf32>
    %cst_31 = arith.constant dense<0.000000e+00> : vector<16x64xf32>
    %79 = tpu.matmul %40, %64, %cst_31 {dimension_numbers = #tpu.dot_dimension_numbers<[1], [0], [0], [1], [0, 0, 1, 1], [], []>} : vector<16x64xbf16>, vector<64x64xbf16>, vector<16x64xf32> -> vector<16x64xf32>
    %80 = arith.truncf %78 : vector<16x16xf32> to vector<16x16xbf16>
    %81 = arith.truncf %79 : vector<16x64xf32> to vector<16x64xbf16>
    %cst_32 = arith.constant dense<0.000000e+00> : vector<16x64xf32>
    %82 = tpu.matmul %80, %81, %cst_32 {dimension_numbers = #tpu.dot_dimension_numbers<[1], [0], [0], [1], [0, 0, 1, 1], [], []>} : vector<16x16xbf16>, vector<16x64xbf16>, vector<16x64xf32> -> vector<16x64xf32>
    %83 = arith.addf %62, %82 : vector<16x64xf32>
    %c208 = arith.constant 208 : index
    %c0_33 = arith.constant 0 : index
    %84 = vector.load %arg1[%c208, %c0_33] : memref<1488x128xbf16, #tpu.memory_space<vmem>>, vector<64x64xbf16>
    %c464 = arith.constant 464 : index
    %c0_34 = arith.constant 0 : index
    %85 = vector.load %arg1[%c464, %c0_34] : memref<1488x128xbf16, #tpu.memory_space<vmem>>, vector<64x64xbf16>
    %cst_35 = arith.constant dense<0.000000e+00> : vector<16x64xf32>
    %86 = tpu.matmul %40, %84, %cst_35 {dimension_numbers = #tpu.dot_dimension_numbers<[1], [0], [0], [1], [0, 0, 1, 1], [], []>} : vector<16x64xbf16>, vector<64x64xbf16>, vector<16x64xf32> -> vector<16x64xf32>
    %87 = arith.truncf %86 : vector<16x64xf32> to vector<16x64xbf16>
    %cst_36 = arith.constant dense<0.000000e+00> : vector<16x16xf32>
    %88 = tpu.matmul %87, %40, %cst_36 {dimension_numbers = #tpu.dot_dimension_numbers<[1], [1], [0], [0], [0, 0, 1, 0], [], []>} : vector<16x64xbf16>, vector<16x64xbf16>, vector<16x16xf32> -> vector<16x16xf32>
    %89 = arith.addf %88, %0 : vector<16x16xf32>
    %cst_37 = arith.constant dense<0xFF800000> : vector<16xf32>
    %90 = vector.multi_reduction <maximumf>, %89, %cst_37 [1] : vector<16x16xf32> to vector<16xf32>
    %91 = vector.shape_cast %90 : vector<16xf32> to vector<16x1xf32>
    %92 = vector.broadcast %91 : vector<16x1xf32> to vector<16x16xf32>
    %93 = arith.subf %89, %92 : vector<16x16xf32>
    %94 = math.exp %93 : vector<16x16xf32>
    %cst_38 = arith.constant dense<0.000000e+00> : vector<16xf32>
    %95 = vector.multi_reduction <add>, %94, %cst_38 [1] : vector<16x16xf32> to vector<16xf32>
    %96 = vector.shape_cast %95 : vector<16xf32> to vector<16x1xf32>
    %97 = tpu.reciprocal %96 {approx = true} : vector<16x1xf32> -> vector<16x1xf32>
    %98 = vector.broadcast %97 : vector<16x1xf32> to vector<16x16xf32>
    %99 = arith.mulf %94, %98 : vector<16x16xf32>
    %cst_39 = arith.constant dense<0.000000e+00> : vector<16x64xf32>
    %100 = tpu.matmul %40, %85, %cst_39 {dimension_numbers = #tpu.dot_dimension_numbers<[1], [0], [0], [1], [0, 0, 1, 1], [], []>} : vector<16x64xbf16>, vector<64x64xbf16>, vector<16x64xf32> -> vector<16x64xf32>
    %101 = arith.truncf %99 : vector<16x16xf32> to vector<16x16xbf16>
    %102 = arith.truncf %100 : vector<16x64xf32> to vector<16x64xbf16>
    %cst_40 = arith.constant dense<0.000000e+00> : vector<16x64xf32>
    %103 = tpu.matmul %101, %102, %cst_40 {dimension_numbers = #tpu.dot_dimension_numbers<[1], [0], [0], [1], [0, 0, 1, 1], [], []>} : vector<16x16xbf16>, vector<16x64xbf16>, vector<16x64xf32> -> vector<16x64xf32>
    %104 = arith.addf %83, %103 : vector<16x64xf32>
    %c272 = arith.constant 272 : index
    %c0_41 = arith.constant 0 : index
    %105 = vector.load %arg1[%c272, %c0_41] : memref<1488x128xbf16, #tpu.memory_space<vmem>>, vector<64x64xbf16>
    %c528 = arith.constant 528 : index
    %c0_42 = arith.constant 0 : index
    %106 = vector.load %arg1[%c528, %c0_42] : memref<1488x128xbf16, #tpu.memory_space<vmem>>, vector<64x64xbf16>
    %cst_43 = arith.constant dense<0.000000e+00> : vector<16x64xf32>
    %107 = tpu.matmul %40, %105, %cst_43 {dimension_numbers = #tpu.dot_dimension_numbers<[1], [0], [0], [1], [0, 0, 1, 1], [], []>} : vector<16x64xbf16>, vector<64x64xbf16>, vector<16x64xf32> -> vector<16x64xf32>
    %108 = arith.truncf %107 : vector<16x64xf32> to vector<16x64xbf16>
    %cst_44 = arith.constant dense<0.000000e+00> : vector<16x16xf32>
    %109 = tpu.matmul %108, %40, %cst_44 {dimension_numbers = #tpu.dot_dimension_numbers<[1], [1], [0], [0], [0, 0, 1, 0], [], []>} : vector<16x64xbf16>, vector<16x64xbf16>, vector<16x16xf32> -> vector<16x16xf32>
    %110 = arith.addf %109, %0 : vector<16x16xf32>
    %cst_45 = arith.constant dense<0xFF800000> : vector<16xf32>
    %111 = vector.multi_reduction <maximumf>, %110, %cst_45 [1] : vector<16x16xf32> to vector<16xf32>
    %112 = vector.shape_cast %111 : vector<16xf32> to vector<16x1xf32>
    %113 = vector.broadcast %112 : vector<16x1xf32> to vector<16x16xf32>
    %114 = arith.subf %110, %113 : vector<16x16xf32>
    %115 = math.exp %114 : vector<16x16xf32>
    %cst_46 = arith.constant dense<0.000000e+00> : vector<16xf32>
    %116 = vector.multi_reduction <add>, %115, %cst_46 [1] : vector<16x16xf32> to vector<16xf32>
    %117 = vector.shape_cast %116 : vector<16xf32> to vector<16x1xf32>
    %118 = tpu.reciprocal %117 {approx = true} : vector<16x1xf32> -> vector<16x1xf32>
    %119 = vector.broadcast %118 : vector<16x1xf32> to vector<16x16xf32>
    %120 = arith.mulf %115, %119 : vector<16x16xf32>
    %cst_47 = arith.constant dense<0.000000e+00> : vector<16x64xf32>
    %121 = tpu.matmul %40, %106, %cst_47 {dimension_numbers = #tpu.dot_dimension_numbers<[1], [0], [0], [1], [0, 0, 1, 1], [], []>} : vector<16x64xbf16>, vector<64x64xbf16>, vector<16x64xf32> -> vector<16x64xf32>
    %122 = arith.truncf %120 : vector<16x16xf32> to vector<16x16xbf16>
    %123 = arith.truncf %121 : vector<16x64xf32> to vector<16x64xbf16>
    %cst_48 = arith.constant dense<0.000000e+00> : vector<16x64xf32>
    %124 = tpu.matmul %122, %123, %cst_48 {dimension_numbers = #tpu.dot_dimension_numbers<[1], [0], [0], [1], [0, 0, 1, 1], [], []>} : vector<16x16xbf16>, vector<16x64xbf16>, vector<16x64xf32> -> vector<16x64xf32>
    %125 = arith.addf %104, %124 : vector<16x64xf32>
    %126 = arith.addf %125, %39 : vector<16x64xf32>
    %c18 = arith.constant 18 : index
    %c0_49 = arith.constant 0 : index
    %127 = vector.load %arg2[%c18, %c0_49] : memref<30x128xf32, #tpu.memory_space<vmem>>, vector<1x64xf32>
    %c19 = arith.constant 19 : index
    %c0_50 = arith.constant 0 : index
    %128 = vector.load %arg2[%c19, %c0_50] : memref<30x128xf32, #tpu.memory_space<vmem>>, vector<1x64xf32>
    %cst_51 = arith.constant dense<0.000000e+00> : vector<16xf32>
    %129 = vector.multi_reduction <add>, %126, %cst_51 [1] : vector<16x64xf32> to vector<16xf32>
    %130 = vector.shape_cast %129 : vector<16xf32> to vector<16x1xf32>
    %cst_52 = arith.constant 6.400000e+01 : f32
    %131 = vector.broadcast %cst_52 : f32 to vector<16x1xf32>
    %132 = arith.divf %130, %131 : vector<16x1xf32>
    %133 = vector.broadcast %132 : vector<16x1xf32> to vector<16x64xf32>
    %134 = arith.subf %126, %133 : vector<16x64xf32>
    %135 = arith.mulf %134, %134 : vector<16x64xf32>
    %cst_53 = arith.constant dense<0.000000e+00> : vector<16xf32>
    %136 = vector.multi_reduction <add>, %135, %cst_53 [1] : vector<16x64xf32> to vector<16xf32>
    %137 = vector.shape_cast %136 : vector<16xf32> to vector<16x1xf32>
    %cst_54 = arith.constant 6.400000e+01 : f32
    %138 = vector.broadcast %cst_54 : f32 to vector<16x1xf32>
    %139 = arith.divf %137, %138 : vector<16x1xf32>
    %140 = vector.broadcast %132 : vector<16x1xf32> to vector<16x64xf32>
    %141 = arith.subf %126, %140 : vector<16x64xf32>
    %cst_55 = arith.constant 9.99999997E-7 : f32
    %142 = vector.broadcast %cst_55 : f32 to vector<16x1xf32>
    %143 = arith.addf %139, %142 : vector<16x1xf32>
    %144 = math.rsqrt %143 : vector<16x1xf32>
    %145 = vector.broadcast %144 : vector<16x1xf32> to vector<16x64xf32>
    %146 = arith.mulf %141, %145 : vector<16x64xf32>
    %147 = vector.broadcast %127 : vector<1x64xf32> to vector<16x64xf32>
    %148 = arith.mulf %146, %147 : vector<16x64xf32>
    %149 = vector.broadcast %128 : vector<1x64xf32> to vector<16x64xf32>
    %150 = arith.addf %148, %149 : vector<16x64xf32>
    %151 = arith.truncf %150 : vector<16x64xf32> to vector<16x64xbf16>
    %c592 = arith.constant 592 : index
    %c0_56 = arith.constant 0 : index
    %152 = vector.load %arg1[%c592, %c0_56] : memref<1488x128xbf16, #tpu.memory_space<vmem>>, vector<64x128xbf16>
    %c656 = arith.constant 656 : index
    %c0_57 = arith.constant 0 : index
    %153 = vector.load %arg1[%c656, %c0_57] : memref<1488x128xbf16, #tpu.memory_space<vmem>>, vector<128x64xbf16>
    %c22 = arith.constant 22 : index
    %c0_58 = arith.constant 0 : index
    %154 = vector.load %arg2[%c22, %c0_58] : memref<30x128xf32, #tpu.memory_space<vmem>>, vector<1x128xf32>
    %c23 = arith.constant 23 : index
    %c0_59 = arith.constant 0 : index
    %155 = vector.load %arg2[%c23, %c0_59] : memref<30x128xf32, #tpu.memory_space<vmem>>, vector<1x64xf32>
    %cst_60 = arith.constant dense<0.000000e+00> : vector<16x128xf32>
    %156 = tpu.matmul %151, %152, %cst_60 {dimension_numbers = #tpu.dot_dimension_numbers<[1], [0], [0], [1], [0, 0, 1, 1], [], []>} : vector<16x64xbf16>, vector<64x128xbf16>, vector<16x128xf32> -> vector<16x128xf32>
    %157 = vector.broadcast %154 : vector<1x128xf32> to vector<16x128xf32>
    %158 = arith.addf %156, %157 : vector<16x128xf32>
    %cst_61 = arith.constant 0.000000e+00 : f32
    %159 = vector.broadcast %cst_61 : f32 to vector<16x128xf32>
    %160 = arith.maximumf %158, %159 : vector<16x128xf32>
    %161 = arith.truncf %160 : vector<16x128xf32> to vector<16x128xbf16>
    %cst_62 = arith.constant dense<0.000000e+00> : vector<16x64xf32>
    %162 = tpu.matmul %161, %153, %cst_62 {dimension_numbers = #tpu.dot_dimension_numbers<[1], [0], [0], [1], [0, 0, 1, 1], [], []>} : vector<16x128xbf16>, vector<128x64xbf16>, vector<16x64xf32> -> vector<16x64xf32>
    %163 = vector.broadcast %155 : vector<1x64xf32> to vector<16x64xf32>
    %164 = arith.addf %162, %163 : vector<16x64xf32>
    %165 = arith.addf %164, %150 : vector<16x64xf32>
    %c20 = arith.constant 20 : index
    %c0_63 = arith.constant 0 : index
    %166 = vector.load %arg2[%c20, %c0_63] : memref<30x128xf32, #tpu.memory_space<vmem>>, vector<1x64xf32>
    %c21 = arith.constant 21 : index
    %c0_64 = arith.constant 0 : index
    %167 = vector.load %arg2[%c21, %c0_64] : memref<30x128xf32, #tpu.memory_space<vmem>>, vector<1x64xf32>
    %cst_65 = arith.constant dense<0.000000e+00> : vector<16xf32>
    %168 = vector.multi_reduction <add>, %165, %cst_65 [1] : vector<16x64xf32> to vector<16xf32>
    %169 = vector.shape_cast %168 : vector<16xf32> to vector<16x1xf32>
    %cst_66 = arith.constant 6.400000e+01 : f32
    %170 = vector.broadcast %cst_66 : f32 to vector<16x1xf32>
    %171 = arith.divf %169, %170 : vector<16x1xf32>
    %172 = vector.broadcast %171 : vector<16x1xf32> to vector<16x64xf32>
    %173 = arith.subf %165, %172 : vector<16x64xf32>
    %174 = arith.mulf %173, %173 : vector<16x64xf32>
    %cst_67 = arith.constant dense<0.000000e+00> : vector<16xf32>
    %175 = vector.multi_reduction <add>, %174, %cst_67 [1] : vector<16x64xf32> to vector<16xf32>
    %176 = vector.shape_cast %175 : vector<16xf32> to vector<16x1xf32>
    %cst_68 = arith.constant 6.400000e+01 : f32
    %177 = vector.broadcast %cst_68 : f32 to vector<16x1xf32>
    %178 = arith.divf %176, %177 : vector<16x1xf32>
    %179 = vector.broadcast %171 : vector<16x1xf32> to vector<16x64xf32>
    %180 = arith.subf %165, %179 : vector<16x64xf32>
    %cst_69 = arith.constant 9.99999997E-7 : f32
    %181 = vector.broadcast %cst_69 : f32 to vector<16x1xf32>
    %182 = arith.addf %178, %181 : vector<16x1xf32>
    %183 = math.rsqrt %182 : vector<16x1xf32>
    %184 = vector.broadcast %183 : vector<16x1xf32> to vector<16x64xf32>
    %185 = arith.mulf %180, %184 : vector<16x64xf32>
    %186 = vector.broadcast %166 : vector<1x64xf32> to vector<16x64xf32>
    %187 = arith.mulf %185, %186 : vector<16x64xf32>
    %188 = vector.broadcast %167 : vector<1x64xf32> to vector<16x64xf32>
    %189 = arith.addf %187, %188 : vector<16x64xf32>
    %190 = arith.truncf %189 : vector<16x64xf32> to vector<16x64xbf16>
    %cst_70 = arith.constant 0.000000e+00 : f32
    %191 = vector.broadcast %cst_70 : f32 to vector<16x64xf32>
    %c784 = arith.constant 784 : index
    %c0_71 = arith.constant 0 : index
    %192 = vector.load %arg1[%c784, %c0_71] : memref<1488x128xbf16, #tpu.memory_space<vmem>>, vector<64x64xbf16>
    %c1040 = arith.constant 1040 : index
    %c0_72 = arith.constant 0 : index
    %193 = vector.load %arg1[%c1040, %c0_72] : memref<1488x128xbf16, #tpu.memory_space<vmem>>, vector<64x64xbf16>
    %cst_73 = arith.constant dense<0.000000e+00> : vector<16x64xf32>
    %194 = tpu.matmul %190, %192, %cst_73 {dimension_numbers = #tpu.dot_dimension_numbers<[1], [0], [0], [1], [0, 0, 1, 1], [], []>} : vector<16x64xbf16>, vector<64x64xbf16>, vector<16x64xf32> -> vector<16x64xf32>
    %195 = arith.truncf %194 : vector<16x64xf32> to vector<16x64xbf16>
    %cst_74 = arith.constant dense<0.000000e+00> : vector<16x16xf32>
    %196 = tpu.matmul %195, %190, %cst_74 {dimension_numbers = #tpu.dot_dimension_numbers<[1], [1], [0], [0], [0, 0, 1, 0], [], []>} : vector<16x64xbf16>, vector<16x64xbf16>, vector<16x16xf32> -> vector<16x16xf32>
    %197 = arith.addf %196, %0 : vector<16x16xf32>
    %cst_75 = arith.constant dense<0xFF800000> : vector<16xf32>
    %198 = vector.multi_reduction <maximumf>, %197, %cst_75 [1] : vector<16x16xf32> to vector<16xf32>
    %199 = vector.shape_cast %198 : vector<16xf32> to vector<16x1xf32>
    %200 = vector.broadcast %199 : vector<16x1xf32> to vector<16x16xf32>
    %201 = arith.subf %197, %200 : vector<16x16xf32>
    %202 = math.exp %201 : vector<16x16xf32>
    %cst_76 = arith.constant dense<0.000000e+00> : vector<16xf32>
    %203 = vector.multi_reduction <add>, %202, %cst_76 [1] : vector<16x16xf32> to vector<16xf32>
    %204 = vector.shape_cast %203 : vector<16xf32> to vector<16x1xf32>
    %205 = tpu.reciprocal %204 {approx = true} : vector<16x1xf32> -> vector<16x1xf32>
    %206 = vector.broadcast %205 : vector<16x1xf32> to vector<16x16xf32>
    %207 = arith.mulf %202, %206 : vector<16x16xf32>
    %cst_77 = arith.constant dense<0.000000e+00> : vector<16x64xf32>
    %208 = tpu.matmul %190, %193, %cst_77 {dimension_numbers = #tpu.dot_dimension_numbers<[1], [0], [0], [1], [0, 0, 1, 1], [], []>} : vector<16x64xbf16>, vector<64x64xbf16>, vector<16x64xf32> -> vector<16x64xf32>
    %209 = arith.truncf %207 : vector<16x16xf32> to vector<16x16xbf16>
    %210 = arith.truncf %208 : vector<16x64xf32> to vector<16x64xbf16>
    %cst_78 = arith.constant dense<0.000000e+00> : vector<16x64xf32>
    %211 = tpu.matmul %209, %210, %cst_78 {dimension_numbers = #tpu.dot_dimension_numbers<[1], [0], [0], [1], [0, 0, 1, 1], [], []>} : vector<16x16xbf16>, vector<16x64xbf16>, vector<16x64xf32> -> vector<16x64xf32>
    %212 = arith.addf %191, %211 : vector<16x64xf32>
    %c848 = arith.constant 848 : index
    %c0_79 = arith.constant 0 : index
    %213 = vector.load %arg1[%c848, %c0_79] : memref<1488x128xbf16, #tpu.memory_space<vmem>>, vector<64x64xbf16>
    %c1104 = arith.constant 1104 : index
    %c0_80 = arith.constant 0 : index
    %214 = vector.load %arg1[%c1104, %c0_80] : memref<1488x128xbf16, #tpu.memory_space<vmem>>, vector<64x64xbf16>
    %cst_81 = arith.constant dense<0.000000e+00> : vector<16x64xf32>
    %215 = tpu.matmul %190, %213, %cst_81 {dimension_numbers = #tpu.dot_dimension_numbers<[1], [0], [0], [1], [0, 0, 1, 1], [], []>} : vector<16x64xbf16>, vector<64x64xbf16>, vector<16x64xf32> -> vector<16x64xf32>
    %216 = arith.truncf %215 : vector<16x64xf32> to vector<16x64xbf16>
    %cst_82 = arith.constant dense<0.000000e+00> : vector<16x16xf32>
    %217 = tpu.matmul %216, %190, %cst_82 {dimension_numbers = #tpu.dot_dimension_numbers<[1], [1], [0], [0], [0, 0, 1, 0], [], []>} : vector<16x64xbf16>, vector<16x64xbf16>, vector<16x16xf32> -> vector<16x16xf32>
    %218 = arith.addf %217, %0 : vector<16x16xf32>
    %cst_83 = arith.constant dense<0xFF800000> : vector<16xf32>
    %219 = vector.multi_reduction <maximumf>, %218, %cst_83 [1] : vector<16x16xf32> to vector<16xf32>
    %220 = vector.shape_cast %219 : vector<16xf32> to vector<16x1xf32>
    %221 = vector.broadcast %220 : vector<16x1xf32> to vector<16x16xf32>
    %222 = arith.subf %218, %221 : vector<16x16xf32>
    %223 = math.exp %222 : vector<16x16xf32>
    %cst_84 = arith.constant dense<0.000000e+00> : vector<16xf32>
    %224 = vector.multi_reduction <add>, %223, %cst_84 [1] : vector<16x16xf32> to vector<16xf32>
    %225 = vector.shape_cast %224 : vector<16xf32> to vector<16x1xf32>
    %226 = tpu.reciprocal %225 {approx = true} : vector<16x1xf32> -> vector<16x1xf32>
    %227 = vector.broadcast %226 : vector<16x1xf32> to vector<16x16xf32>
    %228 = arith.mulf %223, %227 : vector<16x16xf32>
    %cst_85 = arith.constant dense<0.000000e+00> : vector<16x64xf32>
    %229 = tpu.matmul %190, %214, %cst_85 {dimension_numbers = #tpu.dot_dimension_numbers<[1], [0], [0], [1], [0, 0, 1, 1], [], []>} : vector<16x64xbf16>, vector<64x64xbf16>, vector<16x64xf32> -> vector<16x64xf32>
    %230 = arith.truncf %228 : vector<16x16xf32> to vector<16x16xbf16>
    %231 = arith.truncf %229 : vector<16x64xf32> to vector<16x64xbf16>
    %cst_86 = arith.constant dense<0.000000e+00> : vector<16x64xf32>
    %232 = tpu.matmul %230, %231, %cst_86 {dimension_numbers = #tpu.dot_dimension_numbers<[1], [0], [0], [1], [0, 0, 1, 1], [], []>} : vector<16x16xbf16>, vector<16x64xbf16>, vector<16x64xf32> -> vector<16x64xf32>
    %233 = arith.addf %212, %232 : vector<16x64xf32>
    %c912 = arith.constant 912 : index
    %c0_87 = arith.constant 0 : index
    %234 = vector.load %arg1[%c912, %c0_87] : memref<1488x128xbf16, #tpu.memory_space<vmem>>, vector<64x64xbf16>
    %c1168 = arith.constant 1168 : index
    %c0_88 = arith.constant 0 : index
    %235 = vector.load %arg1[%c1168, %c0_88] : memref<1488x128xbf16, #tpu.memory_space<vmem>>, vector<64x64xbf16>
    %cst_89 = arith.constant dense<0.000000e+00> : vector<16x64xf32>
    %236 = tpu.matmul %190, %234, %cst_89 {dimension_numbers = #tpu.dot_dimension_numbers<[1], [0], [0], [1], [0, 0, 1, 1], [], []>} : vector<16x64xbf16>, vector<64x64xbf16>, vector<16x64xf32> -> vector<16x64xf32>
    %237 = arith.truncf %236 : vector<16x64xf32> to vector<16x64xbf16>
    %cst_90 = arith.constant dense<0.000000e+00> : vector<16x16xf32>
    %238 = tpu.matmul %237, %190, %cst_90 {dimension_numbers = #tpu.dot_dimension_numbers<[1], [1], [0], [0], [0, 0, 1, 0], [], []>} : vector<16x64xbf16>, vector<16x64xbf16>, vector<16x16xf32> -> vector<16x16xf32>
    %239 = arith.addf %238, %0 : vector<16x16xf32>
    %cst_91 = arith.constant dense<0xFF800000> : vector<16xf32>
    %240 = vector.multi_reduction <maximumf>, %239, %cst_91 [1] : vector<16x16xf32> to vector<16xf32>
    %241 = vector.shape_cast %240 : vector<16xf32> to vector<16x1xf32>
    %242 = vector.broadcast %241 : vector<16x1xf32> to vector<16x16xf32>
    %243 = arith.subf %239, %242 : vector<16x16xf32>
    %244 = math.exp %243 : vector<16x16xf32>
    %cst_92 = arith.constant dense<0.000000e+00> : vector<16xf32>
    %245 = vector.multi_reduction <add>, %244, %cst_92 [1] : vector<16x16xf32> to vector<16xf32>
    %246 = vector.shape_cast %245 : vector<16xf32> to vector<16x1xf32>
    %247 = tpu.reciprocal %246 {approx = true} : vector<16x1xf32> -> vector<16x1xf32>
    %248 = vector.broadcast %247 : vector<16x1xf32> to vector<16x16xf32>
    %249 = arith.mulf %244, %248 : vector<16x16xf32>
    %cst_93 = arith.constant dense<0.000000e+00> : vector<16x64xf32>
    %250 = tpu.matmul %190, %235, %cst_93 {dimension_numbers = #tpu.dot_dimension_numbers<[1], [0], [0], [1], [0, 0, 1, 1], [], []>} : vector<16x64xbf16>, vector<64x64xbf16>, vector<16x64xf32> -> vector<16x64xf32>
    %251 = arith.truncf %249 : vector<16x16xf32> to vector<16x16xbf16>
    %252 = arith.truncf %250 : vector<16x64xf32> to vector<16x64xbf16>
    %cst_94 = arith.constant dense<0.000000e+00> : vector<16x64xf32>
    %253 = tpu.matmul %251, %252, %cst_94 {dimension_numbers = #tpu.dot_dimension_numbers<[1], [0], [0], [1], [0, 0, 1, 1], [], []>} : vector<16x16xbf16>, vector<16x64xbf16>, vector<16x64xf32> -> vector<16x64xf32>
    %254 = arith.addf %233, %253 : vector<16x64xf32>
    %c976 = arith.constant 976 : index
    %c0_95 = arith.constant 0 : index
    %255 = vector.load %arg1[%c976, %c0_95] : memref<1488x128xbf16, #tpu.memory_space<vmem>>, vector<64x64xbf16>
    %c1232 = arith.constant 1232 : index
    %c0_96 = arith.constant 0 : index
    %256 = vector.load %arg1[%c1232, %c0_96] : memref<1488x128xbf16, #tpu.memory_space<vmem>>, vector<64x64xbf16>
    %cst_97 = arith.constant dense<0.000000e+00> : vector<16x64xf32>
    %257 = tpu.matmul %190, %255, %cst_97 {dimension_numbers = #tpu.dot_dimension_numbers<[1], [0], [0], [1], [0, 0, 1, 1], [], []>} : vector<16x64xbf16>, vector<64x64xbf16>, vector<16x64xf32> -> vector<16x64xf32>
    %258 = arith.truncf %257 : vector<16x64xf32> to vector<16x64xbf16>
    %cst_98 = arith.constant dense<0.000000e+00> : vector<16x16xf32>
    %259 = tpu.matmul %258, %190, %cst_98 {dimension_numbers = #tpu.dot_dimension_numbers<[1], [1], [0], [0], [0, 0, 1, 0], [], []>} : vector<16x64xbf16>, vector<16x64xbf16>, vector<16x16xf32> -> vector<16x16xf32>
    %260 = arith.addf %259, %0 : vector<16x16xf32>
    %cst_99 = arith.constant dense<0xFF800000> : vector<16xf32>
    %261 = vector.multi_reduction <maximumf>, %260, %cst_99 [1] : vector<16x16xf32> to vector<16xf32>
    %262 = vector.shape_cast %261 : vector<16xf32> to vector<16x1xf32>
    %263 = vector.broadcast %262 : vector<16x1xf32> to vector<16x16xf32>
    %264 = arith.subf %260, %263 : vector<16x16xf32>
    %265 = math.exp %264 : vector<16x16xf32>
    %cst_100 = arith.constant dense<0.000000e+00> : vector<16xf32>
    %266 = vector.multi_reduction <add>, %265, %cst_100 [1] : vector<16x16xf32> to vector<16xf32>
    %267 = vector.shape_cast %266 : vector<16xf32> to vector<16x1xf32>
    %268 = tpu.reciprocal %267 {approx = true} : vector<16x1xf32> -> vector<16x1xf32>
    %269 = vector.broadcast %268 : vector<16x1xf32> to vector<16x16xf32>
    %270 = arith.mulf %265, %269 : vector<16x16xf32>
    %cst_101 = arith.constant dense<0.000000e+00> : vector<16x64xf32>
    %271 = tpu.matmul %190, %256, %cst_101 {dimension_numbers = #tpu.dot_dimension_numbers<[1], [0], [0], [1], [0, 0, 1, 1], [], []>} : vector<16x64xbf16>, vector<64x64xbf16>, vector<16x64xf32> -> vector<16x64xf32>
    %272 = arith.truncf %270 : vector<16x16xf32> to vector<16x16xbf16>
    %273 = arith.truncf %271 : vector<16x64xf32> to vector<16x64xbf16>
    %cst_102 = arith.constant dense<0.000000e+00> : vector<16x64xf32>
    %274 = tpu.matmul %272, %273, %cst_102 {dimension_numbers = #tpu.dot_dimension_numbers<[1], [0], [0], [1], [0, 0, 1, 1], [], []>} : vector<16x16xbf16>, vector<16x64xbf16>, vector<16x64xf32> -> vector<16x64xf32>
    %275 = arith.addf %254, %274 : vector<16x64xf32>
    %276 = arith.addf %275, %189 : vector<16x64xf32>
    %c24 = arith.constant 24 : index
    %c0_103 = arith.constant 0 : index
    %277 = vector.load %arg2[%c24, %c0_103] : memref<30x128xf32, #tpu.memory_space<vmem>>, vector<1x64xf32>
    %c25 = arith.constant 25 : index
    %c0_104 = arith.constant 0 : index
    %278 = vector.load %arg2[%c25, %c0_104] : memref<30x128xf32, #tpu.memory_space<vmem>>, vector<1x64xf32>
    %cst_105 = arith.constant dense<0.000000e+00> : vector<16xf32>
    %279 = vector.multi_reduction <add>, %276, %cst_105 [1] : vector<16x64xf32> to vector<16xf32>
    %280 = vector.shape_cast %279 : vector<16xf32> to vector<16x1xf32>
    %cst_106 = arith.constant 6.400000e+01 : f32
    %281 = vector.broadcast %cst_106 : f32 to vector<16x1xf32>
    %282 = arith.divf %280, %281 : vector<16x1xf32>
    %283 = vector.broadcast %282 : vector<16x1xf32> to vector<16x64xf32>
    %284 = arith.subf %276, %283 : vector<16x64xf32>
    %285 = arith.mulf %284, %284 : vector<16x64xf32>
    %cst_107 = arith.constant dense<0.000000e+00> : vector<16xf32>
    %286 = vector.multi_reduction <add>, %285, %cst_107 [1] : vector<16x64xf32> to vector<16xf32>
    %287 = vector.shape_cast %286 : vector<16xf32> to vector<16x1xf32>
    %cst_108 = arith.constant 6.400000e+01 : f32
    %288 = vector.broadcast %cst_108 : f32 to vector<16x1xf32>
    %289 = arith.divf %287, %288 : vector<16x1xf32>
    %290 = vector.broadcast %282 : vector<16x1xf32> to vector<16x64xf32>
    %291 = arith.subf %276, %290 : vector<16x64xf32>
    %cst_109 = arith.constant 9.99999997E-7 : f32
    %292 = vector.broadcast %cst_109 : f32 to vector<16x1xf32>
    %293 = arith.addf %289, %292 : vector<16x1xf32>
    %294 = math.rsqrt %293 : vector<16x1xf32>
    %295 = vector.broadcast %294 : vector<16x1xf32> to vector<16x64xf32>
    %296 = arith.mulf %291, %295 : vector<16x64xf32>
    %297 = vector.broadcast %277 : vector<1x64xf32> to vector<16x64xf32>
    %298 = arith.mulf %296, %297 : vector<16x64xf32>
    %299 = vector.broadcast %278 : vector<1x64xf32> to vector<16x64xf32>
    %300 = arith.addf %298, %299 : vector<16x64xf32>
    %301 = arith.truncf %300 : vector<16x64xf32> to vector<16x64xbf16>
    %c1296 = arith.constant 1296 : index
    %c0_110 = arith.constant 0 : index
    %302 = vector.load %arg1[%c1296, %c0_110] : memref<1488x128xbf16, #tpu.memory_space<vmem>>, vector<64x128xbf16>
    %c1360 = arith.constant 1360 : index
    %c0_111 = arith.constant 0 : index
    %303 = vector.load %arg1[%c1360, %c0_111] : memref<1488x128xbf16, #tpu.memory_space<vmem>>, vector<128x64xbf16>
    %c28 = arith.constant 28 : index
    %c0_112 = arith.constant 0 : index
    %304 = vector.load %arg2[%c28, %c0_112] : memref<30x128xf32, #tpu.memory_space<vmem>>, vector<1x128xf32>
    %c29 = arith.constant 29 : index
    %c0_113 = arith.constant 0 : index
    %305 = vector.load %arg2[%c29, %c0_113] : memref<30x128xf32, #tpu.memory_space<vmem>>, vector<1x64xf32>
    %cst_114 = arith.constant dense<0.000000e+00> : vector<16x128xf32>
    %306 = tpu.matmul %301, %302, %cst_114 {dimension_numbers = #tpu.dot_dimension_numbers<[1], [0], [0], [1], [0, 0, 1, 1], [], []>} : vector<16x64xbf16>, vector<64x128xbf16>, vector<16x128xf32> -> vector<16x128xf32>
    %307 = vector.broadcast %304 : vector<1x128xf32> to vector<16x128xf32>
    %308 = arith.addf %306, %307 : vector<16x128xf32>
    %cst_115 = arith.constant 0.000000e+00 : f32
    %309 = vector.broadcast %cst_115 : f32 to vector<16x128xf32>
    %310 = arith.maximumf %308, %309 : vector<16x128xf32>
    %311 = arith.truncf %310 : vector<16x128xf32> to vector<16x128xbf16>
    %cst_116 = arith.constant dense<0.000000e+00> : vector<16x64xf32>
    %312 = tpu.matmul %311, %303, %cst_116 {dimension_numbers = #tpu.dot_dimension_numbers<[1], [0], [0], [1], [0, 0, 1, 1], [], []>} : vector<16x128xbf16>, vector<128x64xbf16>, vector<16x64xf32> -> vector<16x64xf32>
    %313 = vector.broadcast %305 : vector<1x64xf32> to vector<16x64xf32>
    %314 = arith.addf %312, %313 : vector<16x64xf32>
    %315 = arith.addf %314, %300 : vector<16x64xf32>
    %c26 = arith.constant 26 : index
    %c0_117 = arith.constant 0 : index
    %316 = vector.load %arg2[%c26, %c0_117] : memref<30x128xf32, #tpu.memory_space<vmem>>, vector<1x64xf32>
    %c27 = arith.constant 27 : index
    %c0_118 = arith.constant 0 : index
    %317 = vector.load %arg2[%c27, %c0_118] : memref<30x128xf32, #tpu.memory_space<vmem>>, vector<1x64xf32>
    %cst_119 = arith.constant dense<0.000000e+00> : vector<16xf32>
    %318 = vector.multi_reduction <add>, %315, %cst_119 [1] : vector<16x64xf32> to vector<16xf32>
    %319 = vector.shape_cast %318 : vector<16xf32> to vector<16x1xf32>
    %cst_120 = arith.constant 6.400000e+01 : f32
    %320 = vector.broadcast %cst_120 : f32 to vector<16x1xf32>
    %321 = arith.divf %319, %320 : vector<16x1xf32>
    %322 = vector.broadcast %321 : vector<16x1xf32> to vector<16x64xf32>
    %323 = arith.subf %315, %322 : vector<16x64xf32>
    %324 = arith.mulf %323, %323 : vector<16x64xf32>
    %cst_121 = arith.constant dense<0.000000e+00> : vector<16xf32>
    %325 = vector.multi_reduction <add>, %324, %cst_121 [1] : vector<16x64xf32> to vector<16xf32>
    %326 = vector.shape_cast %325 : vector<16xf32> to vector<16x1xf32>
    %cst_122 = arith.constant 6.400000e+01 : f32
    %327 = vector.broadcast %cst_122 : f32 to vector<16x1xf32>
    %328 = arith.divf %326, %327 : vector<16x1xf32>
    %329 = vector.broadcast %321 : vector<16x1xf32> to vector<16x64xf32>
    %330 = arith.subf %315, %329 : vector<16x64xf32>
    %cst_123 = arith.constant 9.99999997E-7 : f32
    %331 = vector.broadcast %cst_123 : f32 to vector<16x1xf32>
    %332 = arith.addf %328, %331 : vector<16x1xf32>
    %333 = math.rsqrt %332 : vector<16x1xf32>
    %334 = vector.broadcast %333 : vector<16x1xf32> to vector<16x64xf32>
    %335 = arith.mulf %330, %334 : vector<16x64xf32>
    %336 = vector.broadcast %316 : vector<1x64xf32> to vector<16x64xf32>
    %337 = arith.mulf %335, %336 : vector<16x64xf32>
    %338 = vector.broadcast %317 : vector<1x64xf32> to vector<16x64xf32>
    %339 = arith.addf %337, %338 : vector<16x64xf32>
    %cst_124 = arith.constant dense<0.000000e+00> : vector<8x64xf32>
    %340 = tpu.matmul %3, %339, %cst_124 {dimension_numbers = #tpu.dot_dimension_numbers<[1], [0], [0], [1], [0, 0, 1, 1], [], []>} : vector<8x16xf32>, vector<16x64xf32>, vector<8x64xf32> -> vector<8x64xf32>
    %c16_125 = arith.constant 16 : index
    %c0_126 = arith.constant 0 : index
    %341 = vector.load %arg1[%c16_125, %c0_126] : memref<1488x128xbf16, #tpu.memory_space<vmem>>, vector<64x128xbf16>
    %342 = arith.truncf %340 : vector<8x64xf32> to vector<8x64xbf16>
    %cst_127 = arith.constant dense<0.000000e+00> : vector<8x128xf32>
    %343 = tpu.matmul %342, %341, %cst_127 {dimension_numbers = #tpu.dot_dimension_numbers<[1], [0], [0], [1], [0, 0, 1, 1], [], []>} : vector<8x64xbf16>, vector<64x128xbf16>, vector<8x128xf32> -> vector<8x128xf32>
    %c0_128 = arith.constant 0 : index
    %c0_129 = arith.constant 0 : index
    %344 = vector.load %arg3[%c0_128, %c0_129] : memref<8x128xf32, #tpu.memory_space<vmem>>, vector<8x128xf32>
    tpu.vector_store %arg3[%c0_128, %c0_129], %343 {strides = array<i32>} : memref<8x128xf32, #tpu.memory_space<vmem>>, vector<8x128xf32>,
    return
  }
}

</mosaic_0001>

<llo_original>
// kernel: le.8
$region0: #{le.8}
  %s0 = inlined_call_operand.vmem [shape: s32[2,8], index: 0, kind: input, shape index: {}]
  %s1 = inlined_call_operand.vmem [shape: s32[16], index: 1, kind: output, shape index: {}]
  $region1: #{le.8} parent=0
    #allocation0 [shape = 'u8[4096]{0}', space=vmem, size = 0x1000, scoped, tag = 'scoped mem for output reshape']
    #allocation1 [shape = 'u8[4096]{0}', space=vmem, size = 0x1000, scoped, tag = 'scoped mem for input reshape']
    %s3 = sshllo.u32 0, 2
    %v4 = vld [vmem:[%s0] sm:%s3]
    %5 = vst [vmem:[#allocation1] sm:%s3] %v4
    %v6 = vld [vmem:[#allocation1] sm:$0x1]
    %vm7 = vcmask 64512
    %8 = vst.msk [vmem:[#allocation0] sm:$0x1] %vm7, %v6
    %s9 = scalar_lea.vmem [#allocation1], 1
    %v10 = vld [vmem:[%s9] sm:$0x1]
    %11 = vrot.lane.b32.xlu0 %v10, 8
    %v12 = vpop.permute.xlu0 %11
    %vm13 = vcmask 130112
    %14 = vst.msk [vmem:[#allocation0] sm:$0x1] %vm13, %v12
    %s16 = sshllo.u32 0, 1
    %v18 = vld [vmem:[#allocation0] sm:%s16]
    %s19 = sshllo.u32 0, 1
    %20 = vst [vmem:[%s1] sm:%s19] %v18

// kernel: _forward.1
$region0: #{_forward.1}
  #allocation0 [shape = 'u32[]', space=smem, size = 0x4, offset = 0x4, fixed_abs, tag = 'smem constant byte address 0x4 - core index']
  #allocation1 [shape = 'u32[144,128]{1,0:T(1,128)}', space=vmem, size = 0x12000, scoped, tag = 'internal scratch']
  %s0 = inlined_call_operand.vmem [shape: f32[24,256], index: 0, kind: input, shape index: {}]
  %s1 = inlined_call_operand.hbm [shape: bf16[1488,128], index: 1, kind: input, shape index: {}]
  %s2 = inlined_call_operand.vmem [shape: f32[30,128], index: 2, kind: input, shape index: {}]
  %s3 = inlined_call_operand.vmem [shape: f32[8,128], index: 3, kind: output, shape index: {}]
  %s4 = sld [smem:[#allocation0]]
  $region26: #{_forward.1} parent=0
    _
  %s6 = ssub.s32 1, %s4
  %s7 = scalar_select 0, %s6, %s4
  $region1: #{_forward.1} parent=0
    #allocation2 [shape = 'u8[380928]{0}', space=vmem, size = 0x5d000, scoped, tag = 'input window, operand 1, single buffered']
    #allocation3 [shape = 's32[1]{0}', space=sflag, size = 0x4, scoped, tag = 'scoped memory for _forward.1']
    %8 = vsyncpa [#allocation3], 0
    // Predicated region
    $region2: #{_forward.1} parent=1 // pred_check
      _
    $region3: #{_forward.1} parent=1 // pred_check_branch
      %10 = sbr.rel (0) target = $region5
    $region4: #{_forward.1} parent=1 // pred_region
      _
    $region5: #{_forward.1} parent=1 // pred_fallthru
      _
    // Predicated region
    $region6: #{_forward.1} parent=1 // pred_check
      _
    $region7: #{_forward.1} parent=1 // pred_check_branch
      %12 = sbr.rel (0) target = $region9
    $region8: #{_forward.1} parent=1 // pred_region
      %s14 = ssub.s32 11904, 11904
      %15 = vsyncadd [#allocation3], %s14
      %s16 = sshll.u32 [#allocation2], 4
      %s17 = int_to_ptr.vmem [resolvable:$true] %s16
      %22 = dma.hbm_to_vmem [thread:$0]  %s1, 11904, %s17, [#allocation3], 64, 64, 4
    $region9: #{_forward.1} parent=1 // pred_fallthru
      _
    // Predicated region
    $region10: #{_forward.1} parent=1 // pred_check
      _
    $region11: #{_forward.1} parent=1 // pred_check_branch
      %24 = sbr.rel (0) target = $region13
    $region12: #{_forward.1} parent=1 // pred_region
      _
    $region13: #{_forward.1} parent=1 // pred_fallthru
      _
    // Predicated region
    $region14: #{_forward.1} parent=1 // pred_check
      _
    $region15: #{_forward.1} parent=1 // pred_check_branch
      %26 = sbr.rel (0) target = $region17
    $region16: #{_forward.1} parent=1 // pred_region
      %27 = dma.done [#allocation3], 11904
    $region17: #{_forward.1} parent=1 // pred_fallthru
      _
    %v29 = vld [vmem:[%s0] sm:$0xff]
    %v30 = vld [vmem:[%s0 + $0x10] sm:$0xff]
    %v31 = vld [vmem:[%s0 + $0x8] sm:$0xff]
    %v32 = vld [vmem:[%s0 + $0x18] sm:$0xff]
    %v33 = vcvt.f32.s32.to.zero.pseudo %v31
    %v34 = vcvt.f32.s32.to.zero.pseudo %v32
    %v35 = vld [vmem:[%s0 + $0x20] sm:$0xff]
    %v36 = vlaneseq
    %v37 = vand.u32 %v36, 127
    %38 = vset.pattern.permute.xlu0 0
    %39 = vperm.xlu0 %38, %v33
    %v40 = vpop.permute.xlu0 %39
    %41 = vset.pattern.permute.xlu0 0
    %42 = vperm.xlu0 %41, %v34
    %v43 = vpop.permute.xlu0 %42
    %vm44 = vcmp.eq.s32.totalorder %v37, %v40
    %vm45 = vcmp.eq.s32.totalorder %v37, %v43
    %v46 = vsel %vm44, 1, 0
    %v47 = vsel %vm45, 1, 0
    %v48 = vcvt.s32.f32 %v46
    %v49 = vcvt.s32.f32 %v47
    %v50 = vpack.c.bf16 %v49, %v48
    %v51 = vld [vmem:[#allocation2] sm:$0xf]
    %v52 = vld [vmem:[#allocation2 + $0x4] sm:$0xf]
    %v55 = vunpack.c.l.b16 %v51
    %v56 = vunpack.c.l.b16 %v52
    %v57 = vpack.c.b16 %v56, %v55
    %vm59 = vcmask 130048
    %v61 = vsel %vm59, %v50, 0
    %63 = vmatprep.subr.bf16.mxu0 0
    %64 = vmatpush1.bf16.msra.mxu0 %v57
    %65 = vmatprep.subr.bf16.mxu0 0
    %66 = vmatpush1.bf16.msra.mxu0 0
    %67 = vmatprep.subr.bf16.mxu0 0
    %68 = vmatpush1.bf16.msra.mxu0 0
    %69 = vmatprep.subr.bf16.mxu0 0
    %70 = vmatpush1.bf16.msra.mxu0 0
    %71 = vmatprep.subr.bf16.mxu0 0
    %72 = vmatpush1.bf16.msra.mxu0 0
    %73 = vmatprep.subr.bf16.mxu0 0
    %74 = vmatpush1.bf16.msra.mxu0 0
    %75 = vmatprep.subr.bf16.mxu0 0
    %76 = vmatpush1.bf16.msra.mxu0 0
    %77 = vmatprep.subr.bf16.mxu0 0
    %78 = vmatpush1.bf16.msra.mxu0 0
    %79 = vmatprep.subr.bf16.mxu0 0
    %80 = vmatpush1.bf16.msra.mxu0 0
    %81 = vmatprep.subr.bf16.mxu0 0
    %82 = vmatpush1.bf16.msra.mxu0 0
    %83 = vmatprep.subr.bf16.mxu0 0
    %84 = vmatpush1.bf16.msra.mxu0 0
    %85 = vmatprep.subr.bf16.mxu0 0
    %86 = vmatpush1.bf16.msra.mxu0 0
    %87 = vmatprep.subr.bf16.mxu0 0
    %88 = vmatpush1.bf16.msra.mxu0 0
    %89 = vmatprep.subr.bf16.mxu0 0
    %90 = vmatpush1.bf16.msra.mxu0 0
    %91 = vmatprep.subr.bf16.mxu0 0
    %92 = vmatpush1.bf16.msra.mxu0 0
    %93 = vmatprep.subr.bf16.mxu0 0
    %94 = vmatpush1.bf16.msra.mxu0 0
    %95 = vmatprep.mubr.bf16.mxu0 0
    %96 = vmatmul.mubr.bf16.gmra.mrb[0].mxu0 %v61
    %v97 = vpop.f32.mrb[0].mxu0
    %v98 = vadd.f32 0.0, %v97
    %v99 = vpop.f32.mrb[0].mxu0
    %v100 = vpop.f32.mrb[0].mxu0
    %v101 = vadd.f32 0.0, %v100
    %v102 = vpop.f32.mrb[0].mxu0
    %103 = vdwg.mxu0
    %v104 = vmul.f32 %v98, 8.0
    %v105 = vmul.f32 %v101, 8.0
    %v106 = vld [vmem:[%s2] sm:$0xff]
    %v107 = vld [vmem:[%s2 + $0x8] sm:$0xff]
    %v108 = vadd.f32 %v104, %v106
    %v109 = vadd.f32 %v105, %v107
    %v110 = vld [vmem:[%s2 + $0x10] sm:$0x1]
    %v111 = vld [vmem:[%s2 + $0x11] sm:$0x1]
    %vm112 = vcmask 523264
    %v113 = vsel %vm112, %v108, 0.0
    %114 = vadd.xlane.f32.xlu0 %v113
    %v115 = vpop.xlane.xlu0 %114
    %v116 = vsel %vm112, %v109, 0.0
    %117 = vadd.xlane.f32.xlu0 %v116
    %v118 = vpop.xlane.xlu0 %117
    %v119 = vrcp.pop 64.0
    %v120 = vmul.f32 %v115, %v119
    %v121 = vmul.f32 %v118, %v119
    %v122 = vsub.f32 %v108, %v120
    %v123 = vsub.f32 %v109, %v121
    %v124 = vmul.f32 %v122, %v122
    %v125 = vmul.f32 %v123, %v123
    %v126 = vsel %vm112, %v124, 0.0
    %127 = vadd.xlane.f32.xlu0 %v126
    %v128 = vpop.xlane.xlu0 %127
    %v129 = vsel %vm112, %v125, 0.0
    %130 = vadd.xlane.f32.xlu0 %v129
    %v131 = vpop.xlane.xlu0 %130
    %v132 = vmul.f32 %v128, %v119
    %v133 = vmul.f32 %v131, %v119
    %v134 = vadd.f32 %v132, 1e-06
    %v135 = vadd.f32 %v133, 1e-06
    %v136 = vrsqrt.pop %v134
    %v137 = vrsqrt.pop %v135
    %v138 = vmul.f32 %v122, %v136
    %v139 = vmul.f32 %v123, %v137
    %v140 = vlaneseq
    %v141 = vshrl.u32 %v140, 7
    %v142 = vsub.s32 0, %v141
    %v143 = vrot.slane %v110, %v142
    %v144 = vmul.f32 %v138, %v143
    %v145 = vmul.f32 %v139, %v143
    %v146 = vlaneseq
    %v147 = vshrl.u32 %v146, 7
    %v148 = vsub.s32 0, %v147
    %v149 = vrot.slane %v111, %v148
    %v150 = vadd.f32 %v144, %v149
    %v151 = vadd.f32 %v145, %v149
    %v152 = vpack.c.bf16 %v151, %v150
    %v153 = vld [vmem:[#allocation2 + $0x28] sm:$0xf]
    %v154 = vld [vmem:[#allocation2 + $0x2c] sm:$0xf]
    %v155 = vld [vmem:[#allocation2 + $0x30] sm:$0xf]
    %v156 = vld [vmem:[#allocation2 + $0x34] sm:$0xf]
    %v157 = vld [vmem:[#allocation2 + $0x38] sm:$0xf]
    %v158 = vld [vmem:[#allocation2 + $0x3c] sm:$0xf]
    %v159 = vld [vmem:[#allocation2 + $0x40] sm:$0xf]
    %v160 = vld [vmem:[#allocation2 + $0x44] sm:$0xf]
    %v161 = vld [vmem:[#allocation2 + $0xa8] sm:$0xf]
    %v162 = vld [vmem:[#allocation2 + $0xac] sm:$0xf]
    %v163 = vld [vmem:[#allocation2 + $0xb0] sm:$0xf]
    %v164 = vld [vmem:[#allocation2 + $0xb4] sm:$0xf]
    %v165 = vld [vmem:[#allocation2 + $0xb8] sm:$0xf]
    %v166 = vld [vmem:[#allocation2 + $0xbc] sm:$0xf]
    %v167 = vld [vmem:[#allocation2 + $0xc0] sm:$0xf]
    %v168 = vld [vmem:[#allocation2 + $0xc4] sm:$0xf]
    %v177 = vunpack.c.l.b16 %v153
    %v178 = vunpack.c.l.b16 %v154
    %v179 = vunpack.c.l.b16 %v155
    %v180 = vunpack.c.l.b16 %v156
    %v181 = vunpack.c.l.b16 %v157
    %v182 = vunpack.c.l.b16 %v158
    %v183 = vunpack.c.l.b16 %v159
    %v184 = vunpack.c.l.b16 %v160
    %v185 = vpack.c.b16 %v178, %v177
    %v186 = vpack.c.b16 %v180, %v179
    %v187 = vpack.c.b16 %v182, %v181
    %v188 = vpack.c.b16 %v184, %v183
    %v194 = vsel %vm112, %v152, 0
    %196 = vmatprep.subr.bf16.mxu0 0
    %197 = vmatpush1.bf16.msra.mxu0 %v185
    %198 = vmatprep.subr.bf16.mxu0 0
    %199 = vmatpush1.bf16.msra.mxu0 %v186
    %200 = vmatprep.subr.bf16.mxu0 0
    %201 = vmatpush1.bf16.msra.mxu0 %v187
    %202 = vmatprep.subr.bf16.mxu0 0
    %203 = vmatpush1.bf16.msra.mxu0 %v188
    %204 = vmatprep.subr.bf16.mxu0 0
    %205 = vmatpush1.bf16.msra.mxu0 0
    %206 = vmatprep.subr.bf16.mxu0 0
    %207 = vmatpush1.bf16.msra.mxu0 0
    %208 = vmatprep.subr.bf16.mxu0 0
    %209 = vmatpush1.bf16.msra.mxu0 0
    %210 = vmatprep.subr.bf16.mxu0 0
    %211 = vmatpush1.bf16.msra.mxu0 0
    %212 = vmatprep.subr.bf16.mxu0 0
    %213 = vmatpush1.bf16.msra.mxu0 0
    %214 = vmatprep.subr.bf16.mxu0 0
    %215 = vmatpush1.bf16.msra.mxu0 0
    %216 = vmatprep.subr.bf16.mxu0 0
    %217 = vmatpush1.bf16.msra.mxu0 0
    %218 = vmatprep.subr.bf16.mxu0 0
    %219 = vmatpush1.bf16.msra.mxu0 0
    %220 = vmatprep.subr.bf16.mxu0 0
    %221 = vmatpush1.bf16.msra.mxu0 0
    %222 = vmatprep.subr.bf16.mxu0 0
    %223 = vmatpush1.bf16.msra.mxu0 0
    %224 = vmatprep.subr.bf16.mxu0 0
    %225 = vmatpush1.bf16.msra.mxu0 0
    %226 = vmatprep.subr.bf16.mxu0 0
    %227 = vmatpush1.bf16.msra.mxu0 0
    %228 = vmatprep.mubr.bf16.mxu0 0
    %229 = vmatmul.mubr.bf16.gmra.mrb[0].mxu0 %v194
    %v230 = vpop.f32.mrb[0].mxu0
    %v231 = vadd.f32 0.0, %v230
    %v232 = vpop.f32.mrb[0].mxu0
    %v233 = vpop.f32.mrb[0].mxu0
    %v234 = vadd.f32 0.0, %v233
    %v235 = vpop.f32.mrb[0].mxu0
    %236 = vdwg.mxu0
    %v237 = vpack.c.bf16 %v234, %v231
    %v239 = vsel %vm112, %v237, 0
    %241 = vmatprep.subr.bf16.mxu0 0
    %242 = vmatpush1.bf16.xpose.msra.mxu0 %v194
    %243 = vmatprep.subr.bf16.mxu0 0
    %244 = vmatpush1.bf16.xpose.msra.mxu0 0
    %245 = vmatprep.subr.bf16.mxu0 0
    %246 = vmatpush1.bf16.xpose.msra.mxu0 0
    %247 = vmatprep.subr.bf16.mxu0 0
    %248 = vmatpush1.bf16.xpose.msra.mxu0 0
    %249 = vmatprep.subr.bf16.mxu0 0
    %250 = vmatpush1.bf16.xpose.msra.mxu0 0
    %251 = vmatprep.subr.bf16.mxu0 0
    %252 = vmatpush1.bf16.xpose.msra.mxu0 0
    %253 = vmatprep.subr.bf16.mxu0 0
    %254 = vmatpush1.bf16.xpose.msra.mxu0 0
    %255 = vmatprep.subr.bf16.mxu0 0
    %256 = vmatpush1.bf16.xpose.msra.mxu0 0
    %257 = vmatprep.subr.bf16.mxu0 0
    %258 = vmatpush1.bf16.xpose.msra.mxu0 0
    %259 = vmatprep.subr.bf16.mxu0 0
    %260 = vmatpush1.bf16.xpose.msra.mxu0 0
    %261 = vmatprep.subr.bf16.mxu0 0
    %262 = vmatpush1.bf16.xpose.msra.mxu0 0
    %263 = vmatprep.subr.bf16.mxu0 0
    %264 = vmatpush1.bf16.xpose.msra.mxu0 0
    %265 = vmatprep.subr.bf16.mxu0 0
    %266 = vmatpush1.bf16.xpose.msra.mxu0 0
    %267 = vmatprep.subr.bf16.mxu0 0
    %268 = vmatpush1.bf16.xpose.msra.mxu0 0
    %269 = vmatprep.subr.bf16.mxu0 0
    %270 = vmatpush1.bf16.xpose.msra.mxu0 0
    %271 = vmatprep.subr.bf16.mxu0 0
    %272 = vmatpush1.bf16.xpose.msra.mxu0 0
    %273 = vmatprep.mubr.bf16.mxu0 0
    %274 = vmatmul.mubr.bf16.gmra.mrb[0].mxu0 %v239
    %v275 = vpop.f32.mrb[0].mxu0
    %v276 = vadd.f32 %v29, %v275
    %v277 = vpop.f32.mrb[0].mxu0
    %v278 = vpop.f32.mrb[0].mxu0
    %v279 = vadd.f32 %v30, %v278
    %v280 = vpop.f32.mrb[0].mxu0
    %281 = vdwg.mxu0
    %v282 = vsel %vm59, %v276, -inf
    %283 = vmax.xlane.f32.xlu0 %v282
    %v284 = vpop.xlane.xlu0 %283
    %v285 = vsel %vm59, %v279, -inf
    %286 = vmax.xlane.f32.xlu0 %v285
    %v287 = vpop.xlane.xlu0 %286
    %v288 = vsub.f32 %v276, %v284
    %v289 = vsub.f32 %v279, %v287
    %v290 = vmul.f32 %v288, 1.442695
    %v291 = vpow.pop %v290
    %v292 = vmul.f32 %v289, 1.442695
    %v293 = vpow.pop %v292
    %v294 = vsel %vm59, %v291, 0.0
    %295 = vadd.xlane.f32.xlu0 %v294
    %v296 = vpop.xlane.xlu0 %295
    %v297 = vsel %vm59, %v293, 0.0
    %298 = vadd.xlane.f32.xlu0 %v297
    %v299 = vpop.xlane.xlu0 %298
    %v300 = vrcp.pop %v296
    %v301 = vrcp.pop %v299
    %v302 = vmul.f32 %v291, %v300
    %v303 = vmul.f32 %v293, %v301
    %v312 = vunpack.c.l.b16 %v161
    %v313 = vunpack.c.l.b16 %v162
    %v314 = vunpack.c.l.b16 %v163
    %v315 = vunpack.c.l.b16 %v164
    %v316 = vunpack.c.l.b16 %v165
    %v317 = vunpack.c.l.b16 %v166
    %v318 = vunpack.c.l.b16 %v167
    %v319 = vunpack.c.l.b16 %v168
    %v320 = vpack.c.b16 %v313, %v312
    %v321 = vpack.c.b16 %v315, %v314
    %v322 = vpack.c.b16 %v317, %v316
    %v323 = vpack.c.b16 %v319, %v318
    %328 = vmatprep.subr.bf16.mxu0 0
    %329 = vmatpush1.bf16.msra.mxu0 %v320
    %330 = vmatprep.subr.bf16.mxu0 0
    %331 = vmatpush1.bf16.msra.mxu0 %v321
    %332 = vmatprep.subr.bf16.mxu0 0
    %333 = vmatpush1.bf16.msra.mxu0 %v322
    %334 = vmatprep.subr.bf16.mxu0 0
    %335 = vmatpush1.bf16.msra.mxu0 %v323
    %336 = vmatprep.subr.bf16.mxu0 0
    %337 = vmatpush1.bf16.msra.mxu0 0
    %338 = vmatprep.subr.bf16.mxu0 0
    %339 = vmatpush1.bf16.msra.mxu0 0
    %340 = vmatprep.subr.bf16.mxu0 0
    %341 = vmatpush1.bf16.msra.mxu0 0
    %342 = vmatprep.subr.bf16.mxu0 0
    %343 = vmatpush1.bf16.msra.mxu0 0
    %344 = vmatprep.subr.bf16.mxu0 0
    %345 = vmatpush1.bf16.msra.mxu0 0
    %346 = vmatprep.subr.bf16.mxu0 0
    %347 = vmatpush1.bf16.msra.mxu0 0
    %348 = vmatprep.subr.bf16.mxu0 0
    %349 = vmatpush1.bf16.msra.mxu0 0
    %350 = vmatprep.subr.bf16.mxu0 0
    %351 = vmatpush1.bf16.msra.mxu0 0
    %352 = vmatprep.subr.bf16.mxu0 0
    %353 = vmatpush1.bf16.msra.mxu0 0
    %354 = vmatprep.subr.bf16.mxu0 0
    %355 = vmatpush1.bf16.msra.mxu0 0
    %356 = vmatprep.subr.bf16.mxu0 0
    %357 = vmatpush1.bf16.msra.mxu0 0
    %358 = vmatprep.subr.bf16.mxu0 0
    %359 = vmatpush1.bf16.msra.mxu0 0
    %360 = vmatprep.mubr.bf16.mxu0 0
    %361 = vmatmul.mubr.bf16.gmra.mrb[0].mxu0 %v194
    %v362 = vpop.f32.mrb[0].mxu0
    %v363 = vadd.f32 0.0, %v362
    %v364 = vpop.f32.mrb[0].mxu0
    %v365 = vpop.f32.mrb[0].mxu0
    %v366 = vadd.f32 0.0, %v365
    %v367 = vpop.f32.mrb[0].mxu0
    %368 = vdwg.mxu0
    %v369 = vpack.c.bf16 %v303, %v302
    %v370 = vpack.c.bf16 %v366, %v363
    %v371 = vld [vmem:[#allocation2 + $0x48] sm:$0xf]
    %v372 = vld [vmem:[#allocation2 + $0x4c] sm:$0xf]
    %v373 = vld [vmem:[#allocation2 + $0x50] sm:$0xf]
    %v374 = vld [vmem:[#allocation2 + $0x54] sm:$0xf]
    %v375 = vld [vmem:[#allocation2 + $0x58] sm:$0xf]
    %v376 = vld [vmem:[#allocation2 + $0x5c] sm:$0xf]
    %v377 = vld [vmem:[#allocation2 + $0x60] sm:$0xf]
    %v378 = vld [vmem:[#allocation2 + $0x64] sm:$0xf]
    %v379 = vld [vmem:[#allocation2 + $0xc8] sm:$0xf]
    %v380 = vld [vmem:[#allocation2 + $0xcc] sm:$0xf]
    %v381 = vld [vmem:[#allocation2 + $0xd0] sm:$0xf]
    %v382 = vld [vmem:[#allocation2 + $0xd4] sm:$0xf]
    %v383 = vld [vmem:[#allocation2 + $0xd8] sm:$0xf]
    %v384 = vld [vmem:[#allocation2 + $0xdc] sm:$0xf]
    %v385 = vld [vmem:[#allocation2 + $0xe0] sm:$0xf]
    %v386 = vld [vmem:[#allocation2 + $0xe4] sm:$0xf]
    %v395 = vunpack.c.l.b16 %v371
    %v396 = vunpack.c.l.b16 %v372
    %v397 = vunpack.c.l.b16 %v373
    %v398 = vunpack.c.l.b16 %v374
    %v399 = vunpack.c.l.b16 %v375
    %v400 = vunpack.c.l.b16 %v376
    %v401 = vunpack.c.l.b16 %v377
    %v402 = vunpack.c.l.b16 %v378
    %v403 = vpack.c.b16 %v396, %v395
    %v404 = vpack.c.b16 %v398, %v397
    %v405 = vpack.c.b16 %v400, %v399
    %v406 = vpack.c.b16 %v402, %v401
    %411 = vmatprep.subr.bf16.mxu0 0
    %412 = vmatpush1.bf16.msra.mxu0 %v403
    %413 = vmatprep.subr.bf16.mxu0 0
    %414 = vmatpush1.bf16.msra.mxu0 %v404
    %415 = vmatprep.subr.bf16.mxu0 0
    %416 = vmatpush1.bf16.msra.mxu0 %v405
    %417 = vmatprep.subr.bf16.mxu0 0
    %418 = vmatpush1.bf16.msra.mxu0 %v406
    %419 = vmatprep.subr.bf16.mxu0 0
    %420 = vmatpush1.bf16.msra.mxu0 0
    %421 = vmatprep.subr.bf16.mxu0 0
    %422 = vmatpush1.bf16.msra.mxu0 0
    %423 = vmatprep.subr.bf16.mxu0 0
    %424 = vmatpush1.bf16.msra.mxu0 0
    %425 = vmatprep.subr.bf16.mxu0 0
    %426 = vmatpush1.bf16.msra.mxu0 0
    %427 = vmatprep.subr.bf16.mxu0 0
    %428 = vmatpush1.bf16.msra.mxu0 0
    %429 = vmatprep.subr.bf16.mxu0 0
    %430 = vmatpush1.bf16.msra.mxu0 0
    %431 = vmatprep.subr.bf16.mxu0 0
    %432 = vmatpush1.bf16.msra.mxu0 0
    %433 = vmatprep.subr.bf16.mxu0 0
    %434 = vmatpush1.bf16.msra.mxu0 0
    %435 = vmatprep.subr.bf16.mxu0 0
    %436 = vmatpush1.bf16.msra.mxu0 0
    %437 = vmatprep.subr.bf16.mxu0 0
    %438 = vmatpush1.bf16.msra.mxu0 0
    %439 = vmatprep.subr.bf16.mxu0 0
    %440 = vmatpush1.bf16.msra.mxu0 0
    %441 = vmatprep.subr.bf16.mxu0 0
    %442 = vmatpush1.bf16.msra.mxu0 0
    %443 = vmatprep.mubr.bf16.mxu0 0
    %444 = vmatmul.mubr.bf16.gmra.mrb[0].mxu0 %v194
    %v445 = vpop.f32.mrb[0].mxu0
    %v446 = vadd.f32 0.0, %v445
    %v447 = vpop.f32.mrb[0].mxu0
    %v448 = vpop.f32.mrb[0].mxu0
    %v449 = vadd.f32 0.0, %v448
    %v450 = vpop.f32.mrb[0].mxu0
    %451 = vdwg.mxu0
    %v452 = vpack.c.bf16 %v449, %v446
    %v454 = vsel %vm112, %v452, 0
    %456 = vmatprep.subr.bf16.mxu0 0
    %457 = vmatpush1.bf16.xpose.msra.mxu0 %v194
    %458 = vmatprep.subr.bf16.mxu0 0
    %459 = vmatpush1.bf16.xpose.msra.mxu0 0
    %460 = vmatprep.subr.bf16.mxu0 0
    %461 = vmatpush1.bf16.xpose.msra.mxu0 0
    %462 = vmatprep.subr.bf16.mxu0 0
    %463 = vmatpush1.bf16.xpose.msra.mxu0 0
    %464 = vmatprep.subr.bf16.mxu0 0
    %465 = vmatpush1.bf16.xpose.msra.mxu0 0
    %466 = vmatprep.subr.bf16.mxu0 0
    %467 = vmatpush1.bf16.xpose.msra.mxu0 0
    %468 = vmatprep.subr.bf16.mxu0 0
    %469 = vmatpush1.bf16.xpose.msra.mxu0 0
    %470 = vmatprep.subr.bf16.mxu0 0
    %471 = vmatpush1.bf16.xpose.msra.mxu0 0
    %472 = vmatprep.subr.bf16.mxu0 0
    %473 = vmatpush1.bf16.xpose.msra.mxu0 0
    %474 = vmatprep.subr.bf16.mxu0 0
    %475 = vmatpush1.bf16.xpose.msra.mxu0 0
    %476 = vmatprep.subr.bf16.mxu0 0
    %477 = vmatpush1.bf16.xpose.msra.mxu0 0
    %478 = vmatprep.subr.bf16.mxu0 0
    %479 = vmatpush1.bf16.xpose.msra.mxu0 0
    %480 = vmatprep.subr.bf16.mxu0 0
    %481 = vmatpush1.bf16.xpose.msra.mxu0 0
    %482 = vmatprep.subr.bf16.mxu0 0
    %483 = vmatpush1.bf16.xpose.msra.mxu0 0
    %484 = vmatprep.subr.bf16.mxu0 0
    %485 = vmatpush1.bf16.xpose.msra.mxu0 0
    %486 = vmatprep.subr.bf16.mxu0 0
    %487 = vmatpush1.bf16.xpose.msra.mxu0 0
    %488 = vmatprep.mubr.bf16.mxu0 0
    %489 = vmatmul.mubr.bf16.gmra.mrb[0].mxu0 %v454
    %v490 = vpop.f32.mrb[0].mxu0
    %v491 = vadd.f32 %v29, %v490
    %v492 = vpop.f32.mrb[0].mxu0
    %v493 = vpop.f32.mrb[0].mxu0
    %v494 = vadd.f32 %v30, %v493
    %v495 = vpop.f32.mrb[0].mxu0
    %496 = vdwg.mxu0
    %v497 = vsel %vm59, %v491, -inf
    %498 = vmax.xlane.f32.xlu0 %v497
    %v499 = vpop.xlane.xlu0 %498
    %v500 = vsel %vm59, %v494, -inf
    %501 = vmax.xlane.f32.xlu0 %v500
    %v502 = vpop.xlane.xlu0 %501
    %v503 = vsub.f32 %v491, %v499
    %v504 = vsub.f32 %v494, %v502
    %v505 = vmul.f32 %v503, 1.442695
    %v506 = vpow.pop %v505
    %v507 = vmul.f32 %v504, 1.442695
    %v508 = vpow.pop %v507
    %v509 = vsel %vm59, %v506, 0.0
    %510 = vadd.xlane.f32.xlu0 %v509
    %v511 = vpop.xlane.xlu0 %510
    %v512 = vsel %vm59, %v508, 0.0
    %513 = vadd.xlane.f32.xlu0 %v512
    %v514 = vpop.xlane.xlu0 %513
    %v515 = vrcp.pop %v511
    %v516 = vrcp.pop %v514
    %v517 = vmul.f32 %v506, %v515
    %v518 = vmul.f32 %v508, %v516
    %v527 = vunpack.c.l.b16 %v379
    %v528 = vunpack.c.l.b16 %v380
    %v529 = vunpack.c.l.b16 %v381
    %v530 = vunpack.c.l.b16 %v382
    %v531 = vunpack.c.l.b16 %v383
    %v532 = vunpack.c.l.b16 %v384
    %v533 = vunpack.c.l.b16 %v385
    %v534 = vunpack.c.l.b16 %v386
    %v535 = vpack.c.b16 %v528, %v527
    %v536 = vpack.c.b16 %v530, %v529
    %v537 = vpack.c.b16 %v532, %v531
    %v538 = vpack.c.b16 %v534, %v533
    %543 = vmatprep.subr.bf16.mxu0 0
    %544 = vmatpush1.bf16.msra.mxu0 %v535
    %545 = vmatprep.subr.bf16.mxu0 0
    %546 = vmatpush1.bf16.msra.mxu0 %v536
    %547 = vmatprep.subr.bf16.mxu0 0
    %548 = vmatpush1.bf16.msra.mxu0 %v537
    %549 = vmatprep.subr.bf16.mxu0 0
    %550 = vmatpush1.bf16.msra.mxu0 %v538
    %551 = vmatprep.subr.bf16.mxu0 0
    %552 = vmatpush1.bf16.msra.mxu0 0
    %553 = vmatprep.subr.bf16.mxu0 0
    %554 = vmatpush1.bf16.msra.mxu0 0
    %555 = vmatprep.subr.bf16.mxu0 0
    %556 = vmatpush1.bf16.msra.mxu0 0
    %557 = vmatprep.subr.bf16.mxu0 0
    %558 = vmatpush1.bf16.msra.mxu0 0
    %559 = vmatprep.subr.bf16.mxu0 0
    %560 = vmatpush1.bf16.msra.mxu0 0
    %561 = vmatprep.subr.bf16.mxu0 0
    %562 = vmatpush1.bf16.msra.mxu0 0
    %563 = vmatprep.subr.bf16.mxu0 0
    %564 = vmatpush1.bf16.msra.mxu0 0
    %565 = vmatprep.subr.bf16.mxu0 0
    %566 = vmatpush1.bf16.msra.mxu0 0
    %567 = vmatprep.subr.bf16.mxu0 0
    %568 = vmatpush1.bf16.msra.mxu0 0
    %569 = vmatprep.subr.bf16.mxu0 0
    %570 = vmatpush1.bf16.msra.mxu0 0
    %571 = vmatprep.subr.bf16.mxu0 0
    %572 = vmatpush1.bf16.msra.mxu0 0
    %573 = vmatprep.subr.bf16.mxu0 0
    %574 = vmatpush1.bf16.msra.mxu0 0
    %575 = vmatprep.mubr.bf16.mxu0 0
    %576 = vmatmul.mubr.bf16.gmra.mrb[0].mxu0 %v194
    %v577 = vpop.f32.mrb[0].mxu0
    %v578 = vadd.f32 0.0, %v577
    %v579 = vpop.f32.mrb[0].mxu0
    %v580 = vpop.f32.mrb[0].mxu0
    %v581 = vadd.f32 0.0, %v580
    %v582 = vpop.f32.mrb[0].mxu0
    %583 = vdwg.mxu0
    %v584 = vpack.c.bf16 %v518, %v517
    %v585 = vpack.c.bf16 %v581, %v578
    %v587 = vsel %vm59, %v584, 0
    %589 = vmatprep.subr.bf16.mxu0 0
    %590 = vmatpush1.bf16.msra.mxu0 %v585
    %591 = vmatprep.subr.bf16.mxu0 0
    %592 = vmatpush1.bf16.msra.mxu0 0
    %593 = vmatprep.subr.bf16.mxu0 0
    %594 = vmatpush1.bf16.msra.mxu0 0
    %595 = vmatprep.subr.bf16.mxu0 0
    %596 = vmatpush1.bf16.msra.mxu0 0
    %597 = vmatprep.subr.bf16.mxu0 0
    %598 = vmatpush1.bf16.msra.mxu0 0
    %599 = vmatprep.subr.bf16.mxu0 0
    %600 = vmatpush1.bf16.msra.mxu0 0
    %601 = vmatprep.subr.bf16.mxu0 0
    %602 = vmatpush1.bf16.msra.mxu0 0
    %603 = vmatprep.subr.bf16.mxu0 0
    %604 = vmatpush1.bf16.msra.mxu0 0
    %605 = vmatprep.subr.bf16.mxu0 0
    %606 = vmatpush1.bf16.msra.mxu0 0
    %607 = vmatprep.subr.bf16.mxu0 0
    %608 = vmatpush1.bf16.msra.mxu0 0
    %609 = vmatprep.subr.bf16.mxu0 0
    %610 = vmatpush1.bf16.msra.mxu0 0
    %611 = vmatprep.subr.bf16.mxu0 0
    %612 = vmatpush1.bf16.msra.mxu0 0
    %613 = vmatprep.subr.bf16.mxu0 0
    %614 = vmatpush1.bf16.msra.mxu0 0
    %615 = vmatprep.subr.bf16.mxu0 0
    %616 = vmatpush1.bf16.msra.mxu0 0
    %617 = vmatprep.subr.bf16.mxu0 0
    %618 = vmatpush1.bf16.msra.mxu0 0
    %619 = vmatprep.subr.bf16.mxu0 0
    %620 = vmatpush1.bf16.msra.mxu0 0
    %621 = vmatprep.mubr.bf16.mxu0 0
    %622 = vmatmul.mubr.bf16.gmra.mrb[0].mxu0 %v587
    %v623 = vpop.f32.mrb[0].mxu0
    %v624 = vadd.f32 0.0, %v623
    %v625 = vpop.f32.mrb[0].mxu0
    %v626 = vpop.f32.mrb[0].mxu0
    %v627 = vadd.f32 0.0, %v626
    %v628 = vpop.f32.mrb[0].mxu0
    %629 = vdwg.mxu0
    %v631 = vsel %vm59, %v369, 0
    %633 = vmatprep.subr.bf16.mxu0 0
    %634 = vmatpush1.bf16.msra.mxu0 %v370
    %635 = vmatprep.subr.bf16.mxu0 0
    %636 = vmatpush1.bf16.msra.mxu0 0
    %637 = vmatprep.subr.bf16.mxu0 0
    %638 = vmatpush1.bf16.msra.mxu0 0
    %639 = vmatprep.subr.bf16.mxu0 0
    %640 = vmatpush1.bf16.msra.mxu0 0
    %641 = vmatprep.subr.bf16.mxu0 0
    %642 = vmatpush1.bf16.msra.mxu0 0
    %643 = vmatprep.subr.bf16.mxu0 0
    %644 = vmatpush1.bf16.msra.mxu0 0
    %645 = vmatprep.subr.bf16.mxu0 0
    %646 = vmatpush1.bf16.msra.mxu0 0
    %647 = vmatprep.subr.bf16.mxu0 0
    %648 = vmatpush1.bf16.msra.mxu0 0
    %649 = vmatprep.subr.bf16.mxu0 0
    %650 = vmatpush1.bf16.msra.mxu0 0
    %651 = vmatprep.subr.bf16.mxu0 0
    %652 = vmatpush1.bf16.msra.mxu0 0
    %653 = vmatprep.subr.bf16.mxu0 0
    %654 = vmatpush1.bf16.msra.mxu0 0
    %655 = vmatprep.subr.bf16.mxu0 0
    %656 = vmatpush1.bf16.msra.mxu0 0
    %657 = vmatprep.subr.bf16.mxu0 0
    %658 = vmatpush1.bf16.msra.mxu0 0
    %659 = vmatprep.subr.bf16.mxu0 0
    %660 = vmatpush1.bf16.msra.mxu0 0
    %661 = vmatprep.subr.bf16.mxu0 0
    %662 = vmatpush1.bf16.msra.mxu0 0
    %663 = vmatprep.subr.bf16.mxu0 0
    %664 = vmatpush1.bf16.msra.mxu0 0
    %665 = vmatprep.mubr.bf16.mxu0 0
    %666 = vmatmul.mubr.bf16.gmra.mrb[0].mxu0 %v631
    %v667 = vpop.f32.mrb[0].mxu0
    %v668 = vadd.f32 %v624, %v667
    %v669 = vpop.f32.mrb[0].mxu0
    %v670 = vpop.f32.mrb[0].mxu0
    %v671 = vadd.f32 %v627, %v670
    %v672 = vpop.f32.mrb[0].mxu0
    %673 = vdwg.mxu0
    %v674 = vld [vmem:[#allocation2 + $0x68] sm:$0xf]
    %v675 = vld [vmem:[#allocation2 + $0x6c] sm:$0xf]
    %v676 = vld [vmem:[#allocation2 + $0x70] sm:$0xf]
    %v677 = vld [vmem:[#allocation2 + $0x74] sm:$0xf]
    %v678 = vld [vmem:[#allocation2 + $0x78] sm:$0xf]
    %v679 = vld [vmem:[#allocation2 + $0x7c] sm:$0xf]
    %v680 = vld [vmem:[#allocation2 + $0x80] sm:$0xf]
    %v681 = vld [vmem:[#allocation2 + $0x84] sm:$0xf]
    %v682 = vld [vmem:[#allocation2 + $0xe8] sm:$0xf]
    %v683 = vld [vmem:[#allocation2 + $0xec] sm:$0xf]
    %v684 = vld [vmem:[#allocation2 + $0xf0] sm:$0xf]
    %v685 = vld [vmem:[#allocation2 + $0xf4] sm:$0xf]
    %v686 = vld [vmem:[#allocation2 + $0xf8] sm:$0xf]
    %v687 = vld [vmem:[#allocation2 + $0xfc] sm:$0xf]
    %v688 = vld [vmem:[#allocation2 + $0x100] sm:$0xf]
    %v689 = vld [vmem:[#allocation2 + $0x104] sm:$0xf]
    %v698 = vunpack.c.l.b16 %v674
    %v699 = vunpack.c.l.b16 %v675
    %v700 = vunpack.c.l.b16 %v676
    %v701 = vunpack.c.l.b16 %v677
    %v702 = vunpack.c.l.b16 %v678
    %v703 = vunpack.c.l.b16 %v679
    %v704 = vunpack.c.l.b16 %v680
    %v705 = vunpack.c.l.b16 %v681
    %v706 = vpack.c.b16 %v699, %v698
    %v707 = vpack.c.b16 %v701, %v700
    %v708 = vpack.c.b16 %v703, %v702
    %v709 = vpack.c.b16 %v705, %v704
    %714 = vmatprep.subr.bf16.mxu0 0
    %715 = vmatpush1.bf16.msra.mxu0 %v706
    %716 = vmatprep.subr.bf16.mxu0 0
    %717 = vmatpush1.bf16.msra.mxu0 %v707
    %718 = vmatprep.subr.bf16.mxu0 0
    %719 = vmatpush1.bf16.msra.mxu0 %v708
    %720 = vmatprep.subr.bf16.mxu0 0
    %721 = vmatpush1.bf16.msra.mxu0 %v709
    %722 = vmatprep.subr.bf16.mxu0 0
    %723 = vmatpush1.bf16.msra.mxu0 0
    %724 = vmatprep.subr.bf16.mxu0 0
    %725 = vmatpush1.bf16.msra.mxu0 0
    %726 = vmatprep.subr.bf16.mxu0 0
    %727 = vmatpush1.bf16.msra.mxu0 0
    %728 = vmatprep.subr.bf16.mxu0 0
    %729 = vmatpush1.bf16.msra.mxu0 0
    %730 = vmatprep.subr.bf16.mxu0 0
    %731 = vmatpush1.bf16.msra.mxu0 0
    %732 = vmatprep.subr.bf16.mxu0 0
    %733 = vmatpush1.bf16.msra.mxu0 0
    %734 = vmatprep.subr.bf16.mxu0 0
    %735 = vmatpush1.bf16.msra.mxu0 0
    %736 = vmatprep.subr.bf16.mxu0 0
    %737 = vmatpush1.bf16.msra.mxu0 0
    %738 = vmatprep.subr.bf16.mxu0 0
    %739 = vmatpush1.bf16.msra.mxu0 0
    %740 = vmatprep.subr.bf16.mxu0 0
    %741 = vmatpush1.bf16.msra.mxu0 0
    %742 = vmatprep.subr.bf16.mxu0 0
    %743 = vmatpush1.bf16.msra.mxu0 0
    %744 = vmatprep.subr.bf16.mxu0 0
    %745 = vmatpush1.bf16.msra.mxu0 0
    %746 = vmatprep.mubr.bf16.mxu0 0
    %747 = vmatmul.mubr.bf16.gmra.mrb[0].mxu0 %v194
    %v748 = vpop.f32.mrb[0].mxu0
    %v749 = vadd.f32 0.0, %v748
    %v750 = vpop.f32.mrb[0].mxu0
    %v751 = vpop.f32.mrb[0].mxu0
    %v752 = vadd.f32 0.0, %v751
    %v753 = vpop.f32.mrb[0].mxu0
    %754 = vdwg.mxu0
    %v755 = vpack.c.bf16 %v752, %v749
    %v757 = vsel %vm112, %v755, 0
    %759 = vmatprep.subr.bf16.mxu0 0
    %760 = vmatpush1.bf16.xpose.msra.mxu0 %v194
    %761 = vmatprep.subr.bf16.mxu0 0
    %762 = vmatpush1.bf16.xpose.msra.mxu0 0
    %763 = vmatprep.subr.bf16.mxu0 0
    %764 = vmatpush1.bf16.xpose.msra.mxu0 0
    %765 = vmatprep.subr.bf16.mxu0 0
    %766 = vmatpush1.bf16.xpose.msra.mxu0 0
    %767 = vmatprep.subr.bf16.mxu0 0
    %768 = vmatpush1.bf16.xpose.msra.mxu0 0
    %769 = vmatprep.subr.bf16.mxu0 0
    %770 = vmatpush1.bf16.xpose.msra.mxu0 0
    %771 = vmatprep.subr.bf16.mxu0 0
    %772 = vmatpush1.bf16.xpose.msra.mxu0 0
    %773 = vmatprep.subr.bf16.mxu0 0
    %774 = vmatpush1.bf16.xpose.msra.mxu0 0
    %775 = vmatprep.subr.bf16.mxu0 0
    %776 = vmatpush1.bf16.xpose.msra.mxu0 0
    %777 = vmatprep.subr.bf16.mxu0 0
    %778 = vmatpush1.bf16.xpose.msra.mxu0 0
    %779 = vmatprep.subr.bf16.mxu0 0
    %780 = vmatpush1.bf16.xpose.msra.mxu0 0
    %781 = vmatprep.subr.bf16.mxu0 0
    %782 = vmatpush1.bf16.xpose.msra.mxu0 0
    %783 = vmatprep.subr.bf16.mxu0 0
    %784 = vmatpush1.bf16.xpose.msra.mxu0 0
    %785 = vmatprep.subr.bf16.mxu0 0
    %786 = vmatpush1.bf16.xpose.msra.mxu0 0
    %787 = vmatprep.subr.bf16.mxu0 0
    %788 = vmatpush1.bf16.xpose.msra.mxu0 0
    %789 = vmatprep.subr.bf16.mxu0 0
    %790 = vmatpush1.bf16.xpose.msra.mxu0 0
    %791 = vmatprep.mubr.bf16.mxu0 0
    %792 = vmatmul.mubr.bf16.gmra.mrb[0].mxu0 %v757
    %v793 = vpop.f32.mrb[0].mxu0
    %v794 = vadd.f32 %v29, %v793
    %v795 = vpop.f32.mrb[0].mxu0
    %v796 = vpop.f32.mrb[0].mxu0
    %v797 = vadd.f32 %v30, %v796
    %v798 = vpop.f32.mrb[0].mxu0
    %799 = vdwg.mxu0
    %v800 = vsel %vm59, %v794, -inf
    %801 = vmax.xlane.f32.xlu0 %v800
    %v802 = vpop.xlane.xlu0 %801
    %v803 = vsel %vm59, %v797, -inf
    %804 = vmax.xlane.f32.xlu0 %v803
    %v805 = vpop.xlane.xlu0 %804
    %v806 = vsub.f32 %v794, %v802
    %v807 = vsub.f32 %v797, %v805
    %v808 = vmul.f32 %v806, 1.442695
    %v809 = vpow.pop %v808
    %v810 = vmul.f32 %v807, 1.442695
    %v811 = vpow.pop %v810
    %v812 = vsel %vm59, %v809, 0.0
    %813 = vadd.xlane.f32.xlu0 %v812
    %v814 = vpop.xlane.xlu0 %813
    %v815 = vsel %vm59, %v811, 0.0
    %816 = vadd.xlane.f32.xlu0 %v815
    %v817 = vpop.xlane.xlu0 %816
    %v818 = vrcp.pop %v814
    %v819 = vrcp.pop %v817
    %v820 = vmul.f32 %v809, %v818
    %v821 = vmul.f32 %v811, %v819
    %v830 = vunpack.c.l.b16 %v682
    %v831 = vunpack.c.l.b16 %v683
    %v832 = vunpack.c.l.b16 %v684
    %v833 = vunpack.c.l.b16 %v685
    %v834 = vunpack.c.l.b16 %v686
    %v835 = vunpack.c.l.b16 %v687
    %v836 = vunpack.c.l.b16 %v688
    %v837 = vunpack.c.l.b16 %v689
    %v838 = vpack.c.b16 %v831, %v830
    %v839 = vpack.c.b16 %v833, %v832
    %v840 = vpack.c.b16 %v835, %v834
    %v841 = vpack.c.b16 %v837, %v836
    %846 = vmatprep.subr.bf16.mxu0 0
    %847 = vmatpush1.bf16.msra.mxu0 %v838
    %848 = vmatprep.subr.bf16.mxu0 0
    %849 = vmatpush1.bf16.msra.mxu0 %v839
    %850 = vmatprep.subr.bf16.mxu0 0
    %851 = vmatpush1.bf16.msra.mxu0 %v840
    %852 = vmatprep.subr.bf16.mxu0 0
    %853 = vmatpush1.bf16.msra.mxu0 %v841
    %854 = vmatprep.subr.bf16.mxu0 0
    %855 = vmatpush1.bf16.msra.mxu0 0
    %856 = vmatprep.subr.bf16.mxu0 0
    %857 = vmatpush1.bf16.msra.mxu0 0
    %858 = vmatprep.subr.bf16.mxu0 0
    %859 = vmatpush1.bf16.msra.mxu0 0
    %860 = vmatprep.subr.bf16.mxu0 0
    %861 = vmatpush1.bf16.msra.mxu0 0
    %862 = vmatprep.subr.bf16.mxu0 0
    %863 = vmatpush1.bf16.msra.mxu0 0
    %864 = vmatprep.subr.bf16.mxu0 0
    %865 = vmatpush1.bf16.msra.mxu0 0
    %866 = vmatprep.subr.bf16.mxu0 0
    %867 = vmatpush1.bf16.msra.mxu0 0
    %868 = vmatprep.subr.bf16.mxu0 0
    %869 = vmatpush1.bf16.msra.mxu0 0
    %870 = vmatprep.subr.bf16.mxu0 0
    %871 = vmatpush1.bf16.msra.mxu0 0
    %872 = vmatprep.subr.bf16.mxu0 0
    %873 = vmatpush1.bf16.msra.mxu0 0
    %874 = vmatprep.subr.bf16.mxu0 0
    %875 = vmatpush1.bf16.msra.mxu0 0
    %876 = vmatprep.subr.bf16.mxu0 0
    %877 = vmatpush1.bf16.msra.mxu0 0
    %878 = vmatprep.mubr.bf16.mxu0 0
    %879 = vmatmul.mubr.bf16.gmra.mrb[0].mxu0 %v194
    %v880 = vpop.f32.mrb[0].mxu0
    %v881 = vadd.f32 0.0, %v880
    %v882 = vpop.f32.mrb[0].mxu0
    %v883 = vpop.f32.mrb[0].mxu0
    %v884 = vadd.f32 0.0, %v883
    %v885 = vpop.f32.mrb[0].mxu0
    %886 = vdwg.mxu0
    %v887 = vpack.c.bf16 %v821, %v820
    %v888 = vpack.c.bf16 %v884, %v881
    %v890 = vsel %vm59, %v887, 0
    %892 = vmatprep.subr.bf16.mxu0 0
    %893 = vmatpush1.bf16.msra.mxu0 %v888
    %894 = vmatprep.subr.bf16.mxu0 0
    %895 = vmatpush1.bf16.msra.mxu0 0
    %896 = vmatprep.subr.bf16.mxu0 0
    %897 = vmatpush1.bf16.msra.mxu0 0
    %898 = vmatprep.subr.bf16.mxu0 0
    %899 = vmatpush1.bf16.msra.mxu0 0
    %900 = vmatprep.subr.bf16.mxu0 0
    %901 = vmatpush1.bf16.msra.mxu0 0
    %902 = vmatprep.subr.bf16.mxu0 0
    %903 = vmatpush1.bf16.msra.mxu0 0
    %904 = vmatprep.subr.bf16.mxu0 0
    %905 = vmatpush1.bf16.msra.mxu0 0
    %906 = vmatprep.subr.bf16.mxu0 0
    %907 = vmatpush1.bf16.msra.mxu0 0
    %908 = vmatprep.subr.bf16.mxu0 0
    %909 = vmatpush1.bf16.msra.mxu0 0
    %910 = vmatprep.subr.bf16.mxu0 0
    %911 = vmatpush1.bf16.msra.mxu0 0
    %912 = vmatprep.subr.bf16.mxu0 0
    %913 = vmatpush1.bf16.msra.mxu0 0
    %914 = vmatprep.subr.bf16.mxu0 0
    %915 = vmatpush1.bf16.msra.mxu0 0
    %916 = vmatprep.subr.bf16.mxu0 0
    %917 = vmatpush1.bf16.msra.mxu0 0
    %918 = vmatprep.subr.bf16.mxu0 0
    %919 = vmatpush1.bf16.msra.mxu0 0
    %920 = vmatprep.subr.bf16.mxu0 0
    %921 = vmatpush1.bf16.msra.mxu0 0
    %922 = vmatprep.subr.bf16.mxu0 0
    %923 = vmatpush1.bf16.msra.mxu0 0
    %924 = vmatprep.mubr.bf16.mxu0 0
    %925 = vmatmul.mubr.bf16.gmra.mrb[0].mxu0 %v890
    %v926 = vpop.f32.mrb[0].mxu0
    %v927 = vadd.f32 0.0, %v926
    %v928 = vpop.f32.mrb[0].mxu0
    %v929 = vpop.f32.mrb[0].mxu0
    %v930 = vadd.f32 0.0, %v929
    %v931 = vpop.f32.mrb[0].mxu0
    %932 = vdwg.mxu0
    %v933 = vadd.f32 %v668, %v927
    %v934 = vadd.f32 %v671, %v930
    %v935 = vld [vmem:[#allocation2 + $0x88] sm:$0xf]
    %v936 = vld [vmem:[#allocation2 + $0x8c] sm:$0xf]
    %v937 = vld [vmem:[#allocation2 + $0x90] sm:$0xf]
    %v938 = vld [vmem:[#allocation2 + $0x94] sm:$0xf]
    %v939 = vld [vmem:[#allocation2 + $0x98] sm:$0xf]
    %v940 = vld [vmem:[#allocation2 + $0x9c] sm:$0xf]
    %v941 = vld [vmem:[#allocation2 + $0xa0] sm:$0xf]
    %v942 = vld [vmem:[#allocation2 + $0xa4] sm:$0xf]
    %v943 = vld [vmem:[#allocation2 + $0x108] sm:$0xf]
    %v944 = vld [vmem:[#allocation2 + $0x10c] sm:$0xf]
    %v945 = vld [vmem:[#allocation2 + $0x110] sm:$0xf]
    %v946 = vld [vmem:[#allocation2 + $0x114] sm:$0xf]
    %v947 = vld [vmem:[#allocation2 + $0x118] sm:$0xf]
    %v948 = vld [vmem:[#allocation2 + $0x11c] sm:$0xf]
    %v949 = vld [vmem:[#allocation2 + $0x120] sm:$0xf]
    %v950 = vld [vmem:[#allocation2 + $0x124] sm:$0xf]
    %v959 = vunpack.c.l.b16 %v935
    %v960 = vunpack.c.l.b16 %v936
    %v961 = vunpack.c.l.b16 %v937
    %v962 = vunpack.c.l.b16 %v938
    %v963 = vunpack.c.l.b16 %v939
    %v964 = vunpack.c.l.b16 %v940
    %v965 = vunpack.c.l.b16 %v941
    %v966 = vunpack.c.l.b16 %v942
    %v967 = vpack.c.b16 %v960, %v959
    %v968 = vpack.c.b16 %v962, %v961
    %v969 = vpack.c.b16 %v964, %v963
    %v970 = vpack.c.b16 %v966, %v965
    %975 = vmatprep.subr.bf16.mxu0 0
    %976 = vmatpush1.bf16.msra.mxu0 %v967
    %977 = vmatprep.subr.bf16.mxu0 0
    %978 = vmatpush1.bf16.msra.mxu0 %v968
    %979 = vmatprep.subr.bf16.mxu0 0
    %980 = vmatpush1.bf16.msra.mxu0 %v969
    %981 = vmatprep.subr.bf16.mxu0 0
    %982 = vmatpush1.bf16.msra.mxu0 %v970
    %983 = vmatprep.subr.bf16.mxu0 0
    %984 = vmatpush1.bf16.msra.mxu0 0
    %985 = vmatprep.subr.bf16.mxu0 0
    %986 = vmatpush1.bf16.msra.mxu0 0
    %987 = vmatprep.subr.bf16.mxu0 0
    %988 = vmatpush1.bf16.msra.mxu0 0
    %989 = vmatprep.subr.bf16.mxu0 0
    %990 = vmatpush1.bf16.msra.mxu0 0
    %991 = vmatprep.subr.bf16.mxu0 0
    %992 = vmatpush1.bf16.msra.mxu0 0
    %993 = vmatprep.subr.bf16.mxu0 0
    %994 = vmatpush1.bf16.msra.mxu0 0
    %995 = vmatprep.subr.bf16.mxu0 0
    %996 = vmatpush1.bf16.msra.mxu0 0
    %997 = vmatprep.subr.bf16.mxu0 0
    %998 = vmatpush1.bf16.msra.mxu0 0
    %999 = vmatprep.subr.bf16.mxu0 0
    %1000 = vmatpush1.bf16.msra.mxu0 0
    %1001 = vmatprep.subr.bf16.mxu0 0
    %1002 = vmatpush1.bf16.msra.mxu0 0
    %1003 = vmatprep.subr.bf16.mxu0 0
    %1004 = vmatpush1.bf16.msra.mxu0 0
    %1005 = vmatprep.subr.bf16.mxu0 0
    %1006 = vmatpush1.bf16.msra.mxu0 0
    %1007 = vmatprep.mubr.bf16.mxu0 0
    %1008 = vmatmul.mubr.bf16.gmra.mrb[0].mxu0 %v194
    %v1009 = vpop.f32.mrb[0].mxu0
    %v1010 = vadd.f32 0.0, %v1009
    %v1011 = vpop.f32.mrb[0].mxu0
    %v1012 = vpop.f32.mrb[0].mxu0
    %v1013 = vadd.f32 0.0, %v1012
    %v1014 = vpop.f32.mrb[0].mxu0
    %1015 = vdwg.mxu0
    %v1016 = vpack.c.bf16 %v1013, %v1010
    %v1018 = vsel %vm112, %v1016, 0
    %1020 = vmatprep.subr.bf16.mxu0 0
    %1021 = vmatpush1.bf16.xpose.msra.mxu0 %v194
    %1022 = vmatprep.subr.bf16.mxu0 0
    %1023 = vmatpush1.bf16.xpose.msra.mxu0 0
    %1024 = vmatprep.subr.bf16.mxu0 0
    %1025 = vmatpush1.bf16.xpose.msra.mxu0 0
    %1026 = vmatprep.subr.bf16.mxu0 0
    %1027 = vmatpush1.bf16.xpose.msra.mxu0 0
    %1028 = vmatprep.subr.bf16.mxu0 0
    %1029 = vmatpush1.bf16.xpose.msra.mxu0 0
    %1030 = vmatprep.subr.bf16.mxu0 0
    %1031 = vmatpush1.bf16.xpose.msra.mxu0 0
    %1032 = vmatprep.subr.bf16.mxu0 0
    %1033 = vmatpush1.bf16.xpose.msra.mxu0 0
    %1034 = vmatprep.subr.bf16.mxu0 0
    %1035 = vmatpush1.bf16.xpose.msra.mxu0 0
    %1036 = vmatprep.subr.bf16.mxu0 0
    %1037 = vmatpush1.bf16.xpose.msra.mxu0 0
    %1038 = vmatprep.subr.bf16.mxu0 0
    %1039 = vmatpush1.bf16.xpose.msra.mxu0 0
    %1040 = vmatprep.subr.bf16.mxu0 0
    %1041 = vmatpush1.bf16.xpose.msra.mxu0 0
    %1042 = vmatprep.subr.bf16.mxu0 0
    %1043 = vmatpush1.bf16.xpose.msra.mxu0 0
    %1044 = vmatprep.subr.bf16.mxu0 0
    %1045 = vmatpush1.bf16.xpose.msra.mxu0 0
    %1046 = vmatprep.subr.bf16.mxu0 0
    %1047 = vmatpush1.bf16.xpose.msra.mxu0 0
    %1048 = vmatprep.subr.bf16.mxu0 0
    %1049 = vmatpush1.bf16.xpose.msra.mxu0 0
    %1050 = vmatprep.subr.bf16.mxu0 0
    %1051 = vmatpush1.bf16.xpose.msra.mxu0 0
    %1052 = vmatprep.mubr.bf16.mxu0 0
    %1053 = vmatmul.mubr.bf16.gmra.mrb[0].mxu0 %v1018
    %v1054 = vpop.f32.mrb[0].mxu0
    %v1055 = vadd.f32 %v29, %v1054
    %v1056 = vpop.f32.mrb[0].mxu0
    %v1057 = vpop.f32.mrb[0].mxu0
    %v1058 = vadd.f32 %v30, %v1057
    %v1059 = vpop.f32.mrb[0].mxu0
    %1060 = vdwg.mxu0
    %v1061 = vsel %vm59, %v1055, -inf
    %1062 = vmax.xlane.f32.xlu0 %v1061
    %v1063 = vpop.xlane.xlu0 %1062
    %v1064 = vsel %vm59, %v1058, -inf
    %1065 = vmax.xlane.f32.xlu0 %v1064
    %v1066 = vpop.xlane.xlu0 %1065
    %v1067 = vsub.f32 %v1055, %v1063
    %v1068 = vsub.f32 %v1058, %v1066
    %v1069 = vmul.f32 %v1067, 1.442695
    %v1070 = vpow.pop %v1069
    %v1071 = vmul.f32 %v1068, 1.442695
    %v1072 = vpow.pop %v1071
    %v1073 = vsel %vm59, %v1070, 0.0
    %1074 = vadd.xlane.f32.xlu0 %v1073
    %v1075 = vpop.xlane.xlu0 %1074
    %v1076 = vsel %vm59, %v1072, 0.0
    %1077 = vadd.xlane.f32.xlu0 %v1076
    %v1078 = vpop.xlane.xlu0 %1077
    %v1079 = vrcp.pop %v1075
    %v1080 = vrcp.pop %v1078
    %v1081 = vmul.f32 %v1070, %v1079
    %v1082 = vmul.f32 %v1072, %v1080
    %v1091 = vunpack.c.l.b16 %v943
    %v1092 = vunpack.c.l.b16 %v944
    %v1093 = vunpack.c.l.b16 %v945
    %v1094 = vunpack.c.l.b16 %v946
    %v1095 = vunpack.c.l.b16 %v947
    %v1096 = vunpack.c.l.b16 %v948
    %v1097 = vunpack.c.l.b16 %v949
    %v1098 = vunpack.c.l.b16 %v950
    %v1099 = vpack.c.b16 %v1092, %v1091
    %v1100 = vpack.c.b16 %v1094, %v1093
    %v1101 = vpack.c.b16 %v1096, %v1095
    %v1102 = vpack.c.b16 %v1098, %v1097
    %1107 = vmatprep.subr.bf16.mxu0 0
    %1108 = vmatpush1.bf16.msra.mxu0 %v1099
    %1109 = vmatprep.subr.bf16.mxu0 0
    %1110 = vmatpush1.bf16.msra.mxu0 %v1100
    %1111 = vmatprep.subr.bf16.mxu0 0
    %1112 = vmatpush1.bf16.msra.mxu0 %v1101
    %1113 = vmatprep.subr.bf16.mxu0 0
    %1114 = vmatpush1.bf16.msra.mxu0 %v1102
    %1115 = vmatprep.subr.bf16.mxu0 0
    %1116 = vmatpush1.bf16.msra.mxu0 0
    %1117 = vmatprep.subr.bf16.mxu0 0
    %1118 = vmatpush1.bf16.msra.mxu0 0
    %1119 = vmatprep.subr.bf16.mxu0 0
    %1120 = vmatpush1.bf16.msra.mxu0 0
    %1121 = vmatprep.subr.bf16.mxu0 0
    %1122 = vmatpush1.bf16.msra.mxu0 0
    %1123 = vmatprep.subr.bf16.mxu0 0
    %1124 = vmatpush1.bf16.msra.mxu0 0
    %1125 = vmatprep.subr.bf16.mxu0 0
    %1126 = vmatpush1.bf16.msra.mxu0 0
    %1127 = vmatprep.subr.bf16.mxu0 0
    %1128 = vmatpush1.bf16.msra.mxu0 0
    %1129 = vmatprep.subr.bf16.mxu0 0
    %1130 = vmatpush1.bf16.msra.mxu0 0
    %1131 = vmatprep.subr.bf16.mxu0 0
    %1132 = vmatpush1.bf16.msra.mxu0 0
    %1133 = vmatprep.subr.bf16.mxu0 0
    %1134 = vmatpush1.bf16.msra.mxu0 0
    %1135 = vmatprep.subr.bf16.mxu0 0
    %1136 = vmatpush1.bf16.msra.mxu0 0
    %1137 = vmatprep.subr.bf16.mxu0 0
    %1138 = vmatpush1.bf16.msra.mxu0 0
    %1139 = vmatprep.mubr.bf16.mxu0 0
    %1140 = vmatmul.mubr.bf16.gmra.mrb[0].mxu0 %v194
    %v1141 = vpop.f32.mrb[0].mxu0
    %v1142 = vadd.f32 0.0, %v1141
    %v1143 = vpop.f32.mrb[0].mxu0
    %v1144 = vpop.f32.mrb[0].mxu0
    %v1145 = vadd.f32 0.0, %v1144
    %v1146 = vpop.f32.mrb[0].mxu0
    %1147 = vdwg.mxu0
    %v1148 = vpack.c.bf16 %v1082, %v1081
    %v1149 = vpack.c.bf16 %v1145, %v1142
    %v1151 = vsel %vm59, %v1148, 0
    %1153 = vmatprep.subr.bf16.mxu0 0
    %1154 = vmatpush1.bf16.msra.mxu0 %v1149
    %1155 = vmatprep.subr.bf16.mxu0 0
    %1156 = vmatpush1.bf16.msra.mxu0 0
    %1157 = vmatprep.subr.bf16.mxu0 0
    %1158 = vmatpush1.bf16.msra.mxu0 0
    %1159 = vmatprep.subr.bf16.mxu0 0
    %1160 = vmatpush1.bf16.msra.mxu0 0
    %1161 = vmatprep.subr.bf16.mxu0 0
    %1162 = vmatpush1.bf16.msra.mxu0 0
    %1163 = vmatprep.subr.bf16.mxu0 0
    %1164 = vmatpush1.bf16.msra.mxu0 0
    %1165 = vmatprep.subr.bf16.mxu0 0
    %1166 = vmatpush1.bf16.msra.mxu0 0
    %1167 = vmatprep.subr.bf16.mxu0 0
    %1168 = vmatpush1.bf16.msra.mxu0 0
    %1169 = vmatprep.subr.bf16.mxu0 0
    %1170 = vmatpush1.bf16.msra.mxu0 0
    %1171 = vmatprep.subr.bf16.mxu0 0
    %1172 = vmatpush1.bf16.msra.mxu0 0
    %1173 = vmatprep.subr.bf16.mxu0 0
    %1174 = vmatpush1.bf16.msra.mxu0 0
    %1175 = vmatprep.subr.bf16.mxu0 0
    %1176 = vmatpush1.bf16.msra.mxu0 0
    %1177 = vmatprep.subr.bf16.mxu0 0
    %1178 = vmatpush1.bf16.msra.mxu0 0
    %1179 = vmatprep.subr.bf16.mxu0 0
    %1180 = vmatpush1.bf16.msra.mxu0 0
    %1181 = vmatprep.subr.bf16.mxu0 0
    %1182 = vmatpush1.bf16.msra.mxu0 0
    %1183 = vmatprep.subr.bf16.mxu0 0
    %1184 = vmatpush1.bf16.msra.mxu0 0
    %1185 = vmatprep.mubr.bf16.mxu0 0
    %1186 = vmatmul.mubr.bf16.gmra.mrb[0].mxu0 %v1151
    %v1187 = vpop.f32.mrb[0].mxu0
    %v1188 = vadd.f32 0.0, %v1187
    %v1189 = vpop.f32.mrb[0].mxu0
    %v1190 = vpop.f32.mrb[0].mxu0
    %v1191 = vadd.f32 0.0, %v1190
    %v1192 = vpop.f32.mrb[0].mxu0
    %1193 = vdwg.mxu0
    %v1194 = vadd.f32 %v933, %v1188
    %v1195 = vadd.f32 %v934, %v1191
    %v1196 = vadd.f32 %v1194, %v150
    %v1197 = vadd.f32 %v1195, %v151
    %v1198 = vld [vmem:[%s2 + $0x12] sm:$0x1]
    %v1199 = vld [vmem:[%s2 + $0x13] sm:$0x1]
    %v1200 = vsel %vm112, %v1196, 0.0
    %1201 = vadd.xlane.f32.xlu0 %v1200
    %v1202 = vpop.xlane.xlu0 %1201
    %v1203 = vsel %vm112, %v1197, 0.0
    %1204 = vadd.xlane.f32.xlu0 %v1203
    %v1205 = vpop.xlane.xlu0 %1204
    %v1206 = vmul.f32 %v1202, %v119
    %v1207 = vmul.f32 %v1205, %v119
    %v1208 = vsub.f32 %v1196, %v1206
    %v1209 = vsub.f32 %v1197, %v1207
    %v1210 = vmul.f32 %v1208, %v1208
    %v1211 = vmul.f32 %v1209, %v1209
    %v1212 = vsel %vm112, %v1210, 0.0
    %1213 = vadd.xlane.f32.xlu0 %v1212
    %v1214 = vpop.xlane.xlu0 %1213
    %v1215 = vsel %vm112, %v1211, 0.0
    %1216 = vadd.xlane.f32.xlu0 %v1215
    %v1217 = vpop.xlane.xlu0 %1216
    %v1218 = vmul.f32 %v1214, %v119
    %v1219 = vmul.f32 %v1217, %v119
    %v1220 = vadd.f32 %v1218, 1e-06
    %v1221 = vadd.f32 %v1219, 1e-06
    %v1222 = vrsqrt.pop %v1220
    %v1223 = vrsqrt.pop %v1221
    %v1224 = vmul.f32 %v1208, %v1222
    %v1225 = vmul.f32 %v1209, %v1223
    %v1226 = vlaneseq
    %v1227 = vshrl.u32 %v1226, 7
    %v1228 = vsub.s32 0, %v1227
    %v1229 = vrot.slane %v1198, %v1228
    %v1230 = vmul.f32 %v1224, %v1229
    %v1231 = vmul.f32 %v1225, %v1229
    %v1232 = vlaneseq
    %v1233 = vshrl.u32 %v1232, 7
    %v1234 = vsub.s32 0, %v1233
    %v1235 = vrot.slane %v1199, %v1234
    %v1236 = vadd.f32 %v1230, %v1235
    %v1237 = vadd.f32 %v1231, %v1235
    %v1238 = vpack.c.bf16 %v1237, %v1236
    %v1239 = vld [vmem:[#allocation2 + $0x128] sm:$0xf]
    %v1240 = vld [vmem:[#allocation2 + $0x12c] sm:$0xf]
    %v1241 = vld [vmem:[#allocation2 + $0x130] sm:$0xf]
    %v1242 = vld [vmem:[#allocation2 + $0x134] sm:$0xf]
    %v1243 = vld [vmem:[#allocation2 + $0x138] sm:$0xf]
    %v1244 = vld [vmem:[#allocation2 + $0x13c] sm:$0xf]
    %v1245 = vld [vmem:[#allocation2 + $0x140] sm:$0xf]
    %v1246 = vld [vmem:[#allocation2 + $0x144] sm:$0xf]
    %v1247 = vld [vmem:[#allocation2 + $0x148] sm:$0xf]
    %v1248 = vld [vmem:[#allocation2 + $0x14c] sm:$0xf]
    %v1249 = vld [vmem:[#allocation2 + $0x150] sm:$0xf]
    %v1250 = vld [vmem:[#allocation2 + $0x154] sm:$0xf]
    %v1251 = vld [vmem:[#allocation2 + $0x158] sm:$0xf]
    %v1252 = vld [vmem:[#allocation2 + $0x15c] sm:$0xf]
    %v1253 = vld [vmem:[#allocation2 + $0x160] sm:$0xf]
    %v1254 = vld [vmem:[#allocation2 + $0x164] sm:$0xf]
    %v1255 = vld [vmem:[#allocation2 + $0x168] sm:$0xf]
    %v1256 = vld [vmem:[#allocation2 + $0x16c] sm:$0xf]
    %v1257 = vld [vmem:[#allocation2 + $0x170] sm:$0xf]
    %v1258 = vld [vmem:[#allocation2 + $0x174] sm:$0xf]
    %v1259 = vld [vmem:[#allocation2 + $0x178] sm:$0xf]
    %v1260 = vld [vmem:[#allocation2 + $0x17c] sm:$0xf]
    %v1261 = vld [vmem:[#allocation2 + $0x180] sm:$0xf]
    %v1262 = vld [vmem:[#allocation2 + $0x184] sm:$0xf]
    %v1263 = vld [vmem:[%s2 + $0x16] sm:$0x1]
    %v1264 = vld [vmem:[%s2 + $0x17] sm:$0x1]
    %v1265 = vlaneseq
    %v1266 = vshrl.u32 %v1265, 7
    %v1267 = vsub.s32 0, %v1266
    %v1268 = vrot.slane %v1263, %v1267
    %v1277 = vunpack.c.l.b16 %v1239
    %v1278 = vunpack.c.l.b16 %v1240
    %v1279 = vunpack.c.l.b16 %v1241
    %v1280 = vunpack.c.l.b16 %v1242
    %v1281 = vunpack.c.l.b16 %v1243
    %v1282 = vunpack.c.l.b16 %v1244
    %v1283 = vunpack.c.l.b16 %v1245
    %v1284 = vunpack.c.l.b16 %v1246
    %v1285 = vpack.c.b16 %v1278, %v1277
    %v1286 = vpack.c.b16 %v1280, %v1279
    %v1287 = vpack.c.b16 %v1282, %v1281
    %v1288 = vpack.c.b16 %v1284, %v1283
    %v1294 = vsel %vm112, %v1238, 0
    %1296 = vmatprep.subr.bf16.mxu0 0
    %1297 = vmatpush1.bf16.msra.mxu0 %v1285
    %1298 = vmatprep.subr.bf16.mxu0 0
    %1299 = vmatpush1.bf16.msra.mxu0 %v1286
    %1300 = vmatprep.subr.bf16.mxu0 0
    %1301 = vmatpush1.bf16.msra.mxu0 %v1287
    %1302 = vmatprep.subr.bf16.mxu0 0
    %1303 = vmatpush1.bf16.msra.mxu0 %v1288
    %1304 = vmatprep.subr.bf16.mxu0 0
    %1305 = vmatpush1.bf16.msra.mxu0 0
    %1306 = vmatprep.subr.bf16.mxu0 0
    %1307 = vmatpush1.bf16.msra.mxu0 0
    %1308 = vmatprep.subr.bf16.mxu0 0
    %1309 = vmatpush1.bf16.msra.mxu0 0
    %1310 = vmatprep.subr.bf16.mxu0 0
    %1311 = vmatpush1.bf16.msra.mxu0 0
    %1312 = vmatprep.subr.bf16.mxu0 0
    %1313 = vmatpush1.bf16.msra.mxu0 0
    %1314 = vmatprep.subr.bf16.mxu0 0
    %1315 = vmatpush1.bf16.msra.mxu0 0
    %1316 = vmatprep.subr.bf16.mxu0 0
    %1317 = vmatpush1.bf16.msra.mxu0 0
    %1318 = vmatprep.subr.bf16.mxu0 0
    %1319 = vmatpush1.bf16.msra.mxu0 0
    %1320 = vmatprep.subr.bf16.mxu0 0
    %1321 = vmatpush1.bf16.msra.mxu0 0
    %1322 = vmatprep.subr.bf16.mxu0 0
    %1323 = vmatpush1.bf16.msra.mxu0 0
    %1324 = vmatprep.subr.bf16.mxu0 0
    %1325 = vmatpush1.bf16.msra.mxu0 0
    %1326 = vmatprep.subr.bf16.mxu0 0
    %1327 = vmatpush1.bf16.msra.mxu0 0
    %1328 = vmatprep.mubr.bf16.mxu0 0
    %1329 = vmatmul.mubr.bf16.gmra.mrb[0].mxu0 %v1294
    %v1330 = vpop.f32.mrb[0].mxu0
    %v1331 = vadd.f32 %v1268, %v1330
    %v1332 = vpop.f32.mrb[0].mxu0
    %v1333 = vpop.f32.mrb[0].mxu0
    %v1334 = vadd.f32 %v1268, %v1333
    %v1335 = vpop.f32.mrb[0].mxu0
    %1336 = vdwg.mxu0
    %v1337 = vmax.f32 %v1331, 0.0
    %v1338 = vmax.f32 %v1334, 0.0
    %v1339 = vpack.c.bf16 %v1338, %v1337
    %v1340 = vlaneseq
    %v1341 = vshrl.u32 %v1340, 7
    %v1342 = vsub.s32 0, %v1341
    %v1343 = vrot.slane %v1264, %v1342
    %v1360 = vunpack.c.l.b16 %v1247
    %v1361 = vunpack.c.l.b16 %v1248
    %v1362 = vunpack.c.l.b16 %v1249
    %v1363 = vunpack.c.l.b16 %v1250
    %v1364 = vunpack.c.l.b16 %v1251
    %v1365 = vunpack.c.l.b16 %v1252
    %v1366 = vunpack.c.l.b16 %v1253
    %v1367 = vunpack.c.l.b16 %v1254
    %v1368 = vunpack.c.l.b16 %v1255
    %v1369 = vunpack.c.l.b16 %v1256
    %v1370 = vunpack.c.l.b16 %v1257
    %v1371 = vunpack.c.l.b16 %v1258
    %v1372 = vunpack.c.l.b16 %v1259
    %v1373 = vunpack.c.l.b16 %v1260
    %v1374 = vunpack.c.l.b16 %v1261
    %v1375 = vunpack.c.l.b16 %v1262
    %v1376 = vpack.c.b16 %v1361, %v1360
    %v1377 = vpack.c.b16 %v1363, %v1362
    %v1378 = vpack.c.b16 %v1365, %v1364
    %v1379 = vpack.c.b16 %v1367, %v1366
    %v1380 = vpack.c.b16 %v1369, %v1368
    %v1381 = vpack.c.b16 %v1371, %v1370
    %v1382 = vpack.c.b16 %v1373, %v1372
    %v1383 = vpack.c.b16 %v1375, %v1374
    %1392 = vmatprep.subr.bf16.mxu0 0
    %1393 = vmatpush1.bf16.msra.mxu0 %v1376
    %1394 = vmatprep.subr.bf16.mxu0 0
    %1395 = vmatpush1.bf16.msra.mxu0 %v1377
    %1396 = vmatprep.subr.bf16.mxu0 0
    %1397 = vmatpush1.bf16.msra.mxu0 %v1378
    %1398 = vmatprep.subr.bf16.mxu0 0
    %1399 = vmatpush1.bf16.msra.mxu0 %v1379
    %1400 = vmatprep.subr.bf16.mxu0 0
    %1401 = vmatpush1.bf16.msra.mxu0 %v1380
    %1402 = vmatprep.subr.bf16.mxu0 0
    %1403 = vmatpush1.bf16.msra.mxu0 %v1381
    %1404 = vmatprep.subr.bf16.mxu0 0
    %1405 = vmatpush1.bf16.msra.mxu0 %v1382
    %1406 = vmatprep.subr.bf16.mxu0 0
    %1407 = vmatpush1.bf16.msra.mxu0 %v1383
    %1408 = vmatprep.subr.bf16.mxu0 0
    %1409 = vmatpush1.bf16.msra.mxu0 0
    %1410 = vmatprep.subr.bf16.mxu0 0
    %1411 = vmatpush1.bf16.msra.mxu0 0
    %1412 = vmatprep.subr.bf16.mxu0 0
    %1413 = vmatpush1.bf16.msra.mxu0 0
    %1414 = vmatprep.subr.bf16.mxu0 0
    %1415 = vmatpush1.bf16.msra.mxu0 0
    %1416 = vmatprep.subr.bf16.mxu0 0
    %1417 = vmatpush1.bf16.msra.mxu0 0
    %1418 = vmatprep.subr.bf16.mxu0 0
    %1419 = vmatpush1.bf16.msra.mxu0 0
    %1420 = vmatprep.subr.bf16.mxu0 0
    %1421 = vmatpush1.bf16.msra.mxu0 0
    %1422 = vmatprep.subr.bf16.mxu0 0
    %1423 = vmatpush1.bf16.msra.mxu0 0
    %1424 = vmatprep.mubr.bf16.mxu0 0
    %1425 = vmatmul.mubr.bf16.gmra.mrb[0].mxu0 %v1339
    %v1426 = vpop.f32.mrb[0].mxu0
    %v1427 = vadd.f32 %v1343, %v1426
    %v1428 = vpop.f32.mrb[0].mxu0
    %v1429 = vpop.f32.mrb[0].mxu0
    %v1430 = vadd.f32 %v1343, %v1429
    %v1431 = vpop.f32.mrb[0].mxu0
    %1432 = vdwg.mxu0
    %v1433 = vadd.f32 %v1427, %v1236
    %v1434 = vadd.f32 %v1430, %v1237
    %v1435 = vld [vmem:[%s2 + $0x14] sm:$0x1]
    %v1436 = vld [vmem:[%s2 + $0x15] sm:$0x1]
    %v1437 = vsel %vm112, %v1433, 0.0
    %1438 = vadd.xlane.f32.xlu0 %v1437
    %v1439 = vpop.xlane.xlu0 %1438
    %v1440 = vsel %vm112, %v1434, 0.0
    %1441 = vadd.xlane.f32.xlu0 %v1440
    %v1442 = vpop.xlane.xlu0 %1441
    %v1443 = vmul.f32 %v1439, %v119
    %v1444 = vmul.f32 %v1442, %v119
    %v1445 = vsub.f32 %v1433, %v1443
    %v1446 = vsub.f32 %v1434, %v1444
    %v1447 = vmul.f32 %v1445, %v1445
    %v1448 = vmul.f32 %v1446, %v1446
    %v1449 = vsel %vm112, %v1447, 0.0
    %1450 = vadd.xlane.f32.xlu0 %v1449
    %v1451 = vpop.xlane.xlu0 %1450
    %v1452 = vsel %vm112, %v1448, 0.0
    %1453 = vadd.xlane.f32.xlu0 %v1452
    %v1454 = vpop.xlane.xlu0 %1453
    %v1455 = vmul.f32 %v1451, %v119
    %v1456 = vmul.f32 %v1454, %v119
    %v1457 = vadd.f32 %v1455, 1e-06
    %v1458 = vadd.f32 %v1456, 1e-06
    %v1459 = vrsqrt.pop %v1457
    %v1460 = vrsqrt.pop %v1458
    %v1461 = vmul.f32 %v1445, %v1459
    %v1462 = vmul.f32 %v1446, %v1460
    %v1463 = vlaneseq
    %v1464 = vshrl.u32 %v1463, 7
    %v1465 = vsub.s32 0, %v1464
    %v1466 = vrot.slane %v1435, %v1465
    %v1467 = vmul.f32 %v1461, %v1466
    %v1468 = vmul.f32 %v1462, %v1466
    %v1469 = vlaneseq
    %v1470 = vshrl.u32 %v1469, 7
    %v1471 = vsub.s32 0, %v1470
    %v1472 = vrot.slane %v1436, %v1471
    %v1473 = vadd.f32 %v1467, %v1472
    %v1474 = vadd.f32 %v1468, %v1472
    %v1475 = vpack.c.bf16 %v1474, %v1473
    %v1476 = vld [vmem:[#allocation2 + $0x188] sm:$0xf]
    %v1477 = vld [vmem:[#allocation2 + $0x18c] sm:$0xf]
    %v1478 = vld [vmem:[#allocation2 + $0x190] sm:$0xf]
    %v1479 = vld [vmem:[#allocation2 + $0x194] sm:$0xf]
    %v1480 = vld [vmem:[#allocation2 + $0x198] sm:$0xf]
    %v1481 = vld [vmem:[#allocation2 + $0x19c] sm:$0xf]
    %v1482 = vld [vmem:[#allocation2 + $0x1a0] sm:$0xf]
    %v1483 = vld [vmem:[#allocation2 + $0x1a4] sm:$0xf]
    %v1484 = vld [vmem:[#allocation2 + $0x208] sm:$0xf]
    %v1485 = vld [vmem:[#allocation2 + $0x20c] sm:$0xf]
    %v1486 = vld [vmem:[#allocation2 + $0x210] sm:$0xf]
    %v1487 = vld [vmem:[#allocation2 + $0x214] sm:$0xf]
    %v1488 = vld [vmem:[#allocation2 + $0x218] sm:$0xf]
    %v1489 = vld [vmem:[#allocation2 + $0x21c] sm:$0xf]
    %v1490 = vld [vmem:[#allocation2 + $0x220] sm:$0xf]
    %v1491 = vld [vmem:[#allocation2 + $0x224] sm:$0xf]
    %v1500 = vunpack.c.l.b16 %v1476
    %v1501 = vunpack.c.l.b16 %v1477
    %v1502 = vunpack.c.l.b16 %v1478
    %v1503 = vunpack.c.l.b16 %v1479
    %v1504 = vunpack.c.l.b16 %v1480
    %v1505 = vunpack.c.l.b16 %v1481
    %v1506 = vunpack.c.l.b16 %v1482
    %v1507 = vunpack.c.l.b16 %v1483
    %v1508 = vpack.c.b16 %v1501, %v1500
    %v1509 = vpack.c.b16 %v1503, %v1502
    %v1510 = vpack.c.b16 %v1505, %v1504
    %v1511 = vpack.c.b16 %v1507, %v1506
    %v1517 = vsel %vm112, %v1475, 0
    %1519 = vmatprep.subr.bf16.mxu0 0
    %1520 = vmatpush1.bf16.msra.mxu0 %v1508
    %1521 = vmatprep.subr.bf16.mxu0 0
    %1522 = vmatpush1.bf16.msra.mxu0 %v1509
    %1523 = vmatprep.subr.bf16.mxu0 0
    %1524 = vmatpush1.bf16.msra.mxu0 %v1510
    %1525 = vmatprep.subr.bf16.mxu0 0
    %1526 = vmatpush1.bf16.msra.mxu0 %v1511
    %1527 = vmatprep.subr.bf16.mxu0 0
    %1528 = vmatpush1.bf16.msra.mxu0 0
    %1529 = vmatprep.subr.bf16.mxu0 0
    %1530 = vmatpush1.bf16.msra.mxu0 0
    %1531 = vmatprep.subr.bf16.mxu0 0
    %1532 = vmatpush1.bf16.msra.mxu0 0
    %1533 = vmatprep.subr.bf16.mxu0 0
    %1534 = vmatpush1.bf16.msra.mxu0 0
    %1535 = vmatprep.subr.bf16.mxu0 0
    %1536 = vmatpush1.bf16.msra.mxu0 0
    %1537 = vmatprep.subr.bf16.mxu0 0
    %1538 = vmatpush1.bf16.msra.mxu0 0
    %1539 = vmatprep.subr.bf16.mxu0 0
    %1540 = vmatpush1.bf16.msra.mxu0 0
    %1541 = vmatprep.subr.bf16.mxu0 0
    %1542 = vmatpush1.bf16.msra.mxu0 0
    %1543 = vmatprep.subr.bf16.mxu0 0
    %1544 = vmatpush1.bf16.msra.mxu0 0
    %1545 = vmatprep.subr.bf16.mxu0 0
    %1546 = vmatpush1.bf16.msra.mxu0 0
    %1547 = vmatprep.subr.bf16.mxu0 0
    %1548 = vmatpush1.bf16.msra.mxu0 0
    %1549 = vmatprep.subr.bf16.mxu0 0
    %1550 = vmatpush1.bf16.msra.mxu0 0
    %1551 = vmatprep.mubr.bf16.mxu0 0
    %1552 = vmatmul.mubr.bf16.gmra.mrb[0].mxu0 %v1517
    %v1553 = vpop.f32.mrb[0].mxu0
    %v1554 = vadd.f32 0.0, %v1553
    %v1555 = vpop.f32.mrb[0].mxu0
    %v1556 = vpop.f32.mrb[0].mxu0
    %v1557 = vadd.f32 0.0, %v1556
    %v1558 = vpop.f32.mrb[0].mxu0
    %1559 = vdwg.mxu0
    %v1560 = vpack.c.bf16 %v1557, %v1554
    %v1562 = vsel %vm112, %v1560, 0
    %1564 = vmatprep.subr.bf16.mxu0 0
    %1565 = vmatpush1.bf16.xpose.msra.mxu0 %v1517
    %1566 = vmatprep.subr.bf16.mxu0 0
    %1567 = vmatpush1.bf16.xpose.msra.mxu0 0
    %1568 = vmatprep.subr.bf16.mxu0 0
    %1569 = vmatpush1.bf16.xpose.msra.mxu0 0
    %1570 = vmatprep.subr.bf16.mxu0 0
    %1571 = vmatpush1.bf16.xpose.msra.mxu0 0
    %1572 = vmatprep.subr.bf16.mxu0 0
    %1573 = vmatpush1.bf16.xpose.msra.mxu0 0
    %1574 = vmatprep.subr.bf16.mxu0 0
    %1575 = vmatpush1.bf16.xpose.msra.mxu0 0
    %1576 = vmatprep.subr.bf16.mxu0 0
    %1577 = vmatpush1.bf16.xpose.msra.mxu0 0
    %1578 = vmatprep.subr.bf16.mxu0 0
    %1579 = vmatpush1.bf16.xpose.msra.mxu0 0
    %1580 = vmatprep.subr.bf16.mxu0 0
    %1581 = vmatpush1.bf16.xpose.msra.mxu0 0
    %1582 = vmatprep.subr.bf16.mxu0 0
    %1583 = vmatpush1.bf16.xpose.msra.mxu0 0
    %1584 = vmatprep.subr.bf16.mxu0 0
    %1585 = vmatpush1.bf16.xpose.msra.mxu0 0
    %1586 = vmatprep.subr.bf16.mxu0 0
    %1587 = vmatpush1.bf16.xpose.msra.mxu0 0
    %1588 = vmatprep.subr.bf16.mxu0 0
    %1589 = vmatpush1.bf16.xpose.msra.mxu0 0
    %1590 = vmatprep.subr.bf16.mxu0 0
    %1591 = vmatpush1.bf16.xpose.msra.mxu0 0
    %1592 = vmatprep.subr.bf16.mxu0 0
    %1593 = vmatpush1.bf16.xpose.msra.mxu0 0
    %1594 = vmatprep.subr.bf16.mxu0 0
    %1595 = vmatpush1.bf16.xpose.msra.mxu0 0
    %1596 = vmatprep.mubr.bf16.mxu0 0
    %1597 = vmatmul.mubr.bf16.gmra.mrb[0].mxu0 %v1562
    %v1598 = vpop.f32.mrb[0].mxu0
    %v1599 = vadd.f32 %v29, %v1598
    %v1600 = vpop.f32.mrb[0].mxu0
    %v1601 = vpop.f32.mrb[0].mxu0
    %v1602 = vadd.f32 %v30, %v1601
    %v1603 = vpop.f32.mrb[0].mxu0
    %1604 = vdwg.mxu0
    %v1605 = vsel %vm59, %v1599, -inf
    %1606 = vmax.xlane.f32.xlu0 %v1605
    %v1607 = vpop.xlane.xlu0 %1606
    %v1608 = vsel %vm59, %v1602, -inf
    %1609 = vmax.xlane.f32.xlu0 %v1608
    %v1610 = vpop.xlane.xlu0 %1609
    %v1611 = vsub.f32 %v1599, %v1607
    %v1612 = vsub.f32 %v1602, %v1610
    %v1613 = vmul.f32 %v1611, 1.442695
    %v1614 = vpow.pop %v1613
    %v1615 = vmul.f32 %v1612, 1.442695
    %v1616 = vpow.pop %v1615
    %v1617 = vsel %vm59, %v1614, 0.0
    %1618 = vadd.xlane.f32.xlu0 %v1617
    %v1619 = vpop.xlane.xlu0 %1618
    %v1620 = vsel %vm59, %v1616, 0.0
    %1621 = vadd.xlane.f32.xlu0 %v1620
    %v1622 = vpop.xlane.xlu0 %1621
    %v1623 = vrcp.pop %v1619
    %v1624 = vrcp.pop %v1622
    %v1625 = vmul.f32 %v1614, %v1623
    %v1626 = vmul.f32 %v1616, %v1624
    %v1635 = vunpack.c.l.b16 %v1484
    %v1636 = vunpack.c.l.b16 %v1485
    %v1637 = vunpack.c.l.b16 %v1486
    %v1638 = vunpack.c.l.b16 %v1487
    %v1639 = vunpack.c.l.b16 %v1488
    %v1640 = vunpack.c.l.b16 %v1489
    %v1641 = vunpack.c.l.b16 %v1490
    %v1642 = vunpack.c.l.b16 %v1491
    %v1643 = vpack.c.b16 %v1636, %v1635
    %v1644 = vpack.c.b16 %v1638, %v1637
    %v1645 = vpack.c.b16 %v1640, %v1639
    %v1646 = vpack.c.b16 %v1642, %v1641
    %1651 = vmatprep.subr.bf16.mxu0 0
    %1652 = vmatpush1.bf16.msra.mxu0 %v1643
    %1653 = vmatprep.subr.bf16.mxu0 0
    %1654 = vmatpush1.bf16.msra.mxu0 %v1644
    %1655 = vmatprep.subr.bf16.mxu0 0
    %1656 = vmatpush1.bf16.msra.mxu0 %v1645
    %1657 = vmatprep.subr.bf16.mxu0 0
    %1658 = vmatpush1.bf16.msra.mxu0 %v1646
    %1659 = vmatprep.subr.bf16.mxu0 0
    %1660 = vmatpush1.bf16.msra.mxu0 0
    %1661 = vmatprep.subr.bf16.mxu0 0
    %1662 = vmatpush1.bf16.msra.mxu0 0
    %1663 = vmatprep.subr.bf16.mxu0 0
    %1664 = vmatpush1.bf16.msra.mxu0 0
    %1665 = vmatprep.subr.bf16.mxu0 0
    %1666 = vmatpush1.bf16.msra.mxu0 0
    %1667 = vmatprep.subr.bf16.mxu0 0
    %1668 = vmatpush1.bf16.msra.mxu0 0
    %1669 = vmatprep.subr.bf16.mxu0 0
    %1670 = vmatpush1.bf16.msra.mxu0 0
    %1671 = vmatprep.subr.bf16.mxu0 0
    %1672 = vmatpush1.bf16.msra.mxu0 0
    %1673 = vmatprep.subr.bf16.mxu0 0
    %1674 = vmatpush1.bf16.msra.mxu0 0
    %1675 = vmatprep.subr.bf16.mxu0 0
    %1676 = vmatpush1.bf16.msra.mxu0 0
    %1677 = vmatprep.subr.bf16.mxu0 0
    %1678 = vmatpush1.bf16.msra.mxu0 0
    %1679 = vmatprep.subr.bf16.mxu0 0
    %1680 = vmatpush1.bf16.msra.mxu0 0
    %1681 = vmatprep.subr.bf16.mxu0 0
    %1682 = vmatpush1.bf16.msra.mxu0 0
    %1683 = vmatprep.mubr.bf16.mxu0 0
    %1684 = vmatmul.mubr.bf16.gmra.mrb[0].mxu0 %v1517
    %v1685 = vpop.f32.mrb[0].mxu0
    %v1686 = vadd.f32 0.0, %v1685
    %v1687 = vpop.f32.mrb[0].mxu0
    %v1688 = vpop.f32.mrb[0].mxu0
    %v1689 = vadd.f32 0.0, %v1688
    %v1690 = vpop.f32.mrb[0].mxu0
    %1691 = vdwg.mxu0
    %v1692 = vpack.c.bf16 %v1626, %v1625
    %v1693 = vpack.c.bf16 %v1689, %v1686
    %v1694 = vld [vmem:[#allocation2 + $0x1a8] sm:$0xf]
    %v1695 = vld [vmem:[#allocation2 + $0x1ac] sm:$0xf]
    %v1696 = vld [vmem:[#allocation2 + $0x1b0] sm:$0xf]
    %v1697 = vld [vmem:[#allocation2 + $0x1b4] sm:$0xf]
    %v1698 = vld [vmem:[#allocation2 + $0x1b8] sm:$0xf]
    %v1699 = vld [vmem:[#allocation2 + $0x1bc] sm:$0xf]
    %v1700 = vld [vmem:[#allocation2 + $0x1c0] sm:$0xf]
    %v1701 = vld [vmem:[#allocation2 + $0x1c4] sm:$0xf]
    %v1702 = vld [vmem:[#allocation2 + $0x228] sm:$0xf]
    %v1703 = vld [vmem:[#allocation2 + $0x22c] sm:$0xf]
    %v1704 = vld [vmem:[#allocation2 + $0x230] sm:$0xf]
    %v1705 = vld [vmem:[#allocation2 + $0x234] sm:$0xf]
    %v1706 = vld [vmem:[#allocation2 + $0x238] sm:$0xf]
    %v1707 = vld [vmem:[#allocation2 + $0x23c] sm:$0xf]
    %v1708 = vld [vmem:[#allocation2 + $0x240] sm:$0xf]
    %v1709 = vld [vmem:[#allocation2 + $0x244] sm:$0xf]
    %v1718 = vunpack.c.l.b16 %v1694
    %v1719 = vunpack.c.l.b16 %v1695
    %v1720 = vunpack.c.l.b16 %v1696
    %v1721 = vunpack.c.l.b16 %v1697
    %v1722 = vunpack.c.l.b16 %v1698
    %v1723 = vunpack.c.l.b16 %v1699
    %v1724 = vunpack.c.l.b16 %v1700
    %v1725 = vunpack.c.l.b16 %v1701
    %v1726 = vpack.c.b16 %v1719, %v1718
    %v1727 = vpack.c.b16 %v1721, %v1720
    %v1728 = vpack.c.b16 %v1723, %v1722
    %v1729 = vpack.c.b16 %v1725, %v1724
    %1734 = vmatprep.subr.bf16.mxu0 0
    %1735 = vmatpush1.bf16.msra.mxu0 %v1726
    %1736 = vmatprep.subr.bf16.mxu0 0
    %1737 = vmatpush1.bf16.msra.mxu0 %v1727
    %1738 = vmatprep.subr.bf16.mxu0 0
    %1739 = vmatpush1.bf16.msra.mxu0 %v1728
    %1740 = vmatprep.subr.bf16.mxu0 0
    %1741 = vmatpush1.bf16.msra.mxu0 %v1729
    %1742 = vmatprep.subr.bf16.mxu0 0
    %1743 = vmatpush1.bf16.msra.mxu0 0
    %1744 = vmatprep.subr.bf16.mxu0 0
    %1745 = vmatpush1.bf16.msra.mxu0 0
    %1746 = vmatprep.subr.bf16.mxu0 0
    %1747 = vmatpush1.bf16.msra.mxu0 0
    %1748 = vmatprep.subr.bf16.mxu0 0
    %1749 = vmatpush1.bf16.msra.mxu0 0
    %1750 = vmatprep.subr.bf16.mxu0 0
    %1751 = vmatpush1.bf16.msra.mxu0 0
    %1752 = vmatprep.subr.bf16.mxu0 0
    %1753 = vmatpush1.bf16.msra.mxu0 0
    %1754 = vmatprep.subr.bf16.mxu0 0
    %1755 = vmatpush1.bf16.msra.mxu0 0
    %1756 = vmatprep.subr.bf16.mxu0 0
    %1757 = vmatpush1.bf16.msra.mxu0 0
    %1758 = vmatprep.subr.bf16.mxu0 0
    %1759 = vmatpush1.bf16.msra.mxu0 0
    %1760 = vmatprep.subr.bf16.mxu0 0
    %1761 = vmatpush1.bf16.msra.mxu0 0
    %1762 = vmatprep.subr.bf16.mxu0 0
    %1763 = vmatpush1.bf16.msra.mxu0 0
    %1764 = vmatprep.subr.bf16.mxu0 0
    %1765 = vmatpush1.bf16.msra.mxu0 0
    %1766 = vmatprep.mubr.bf16.mxu0 0
    %1767 = vmatmul.mubr.bf16.gmra.mrb[0].mxu0 %v1517
    %v1768 = vpop.f32.mrb[0].mxu0
    %v1769 = vadd.f32 0.0, %v1768
    %v1770 = vpop.f32.mrb[0].mxu0
    %v1771 = vpop.f32.mrb[0].mxu0
    %v1772 = vadd.f32 0.0, %v1771
    %v1773 = vpop.f32.mrb[0].mxu0
    %1774 = vdwg.mxu0
    %v1775 = vpack.c.bf16 %v1772, %v1769
    %v1777 = vsel %vm112, %v1775, 0
    %1779 = vmatprep.subr.bf16.mxu0 0
    %1780 = vmatpush1.bf16.xpose.msra.mxu0 %v1517
    %1781 = vmatprep.subr.bf16.mxu0 0
    %1782 = vmatpush1.bf16.xpose.msra.mxu0 0
    %1783 = vmatprep.subr.bf16.mxu0 0
    %1784 = vmatpush1.bf16.xpose.msra.mxu0 0
    %1785 = vmatprep.subr.bf16.mxu0 0
    %1786 = vmatpush1.bf16.xpose.msra.mxu0 0
    %1787 = vmatprep.subr.bf16.mxu0 0
    %1788 = vmatpush1.bf16.xpose.msra.mxu0 0
    %1789 = vmatprep.subr.bf16.mxu0 0
    %1790 = vmatpush1.bf16.xpose.msra.mxu0 0
    %1791 = vmatprep.subr.bf16.mxu0 0
    %1792 = vmatpush1.bf16.xpose.msra.mxu0 0
    %1793 = vmatprep.subr.bf16.mxu0 0
    %1794 = vmatpush1.bf16.xpose.msra.mxu0 0
    %1795 = vmatprep.subr.bf16.mxu0 0
    %1796 = vmatpush1.bf16.xpose.msra.mxu0 0
    %1797 = vmatprep.subr.bf16.mxu0 0
    %1798 = vmatpush1.bf16.xpose.msra.mxu0 0
    %1799 = vmatprep.subr.bf16.mxu0 0
    %1800 = vmatpush1.bf16.xpose.msra.mxu0 0
    %1801 = vmatprep.subr.bf16.mxu0 0
    %1802 = vmatpush1.bf16.xpose.msra.mxu0 0
    %1803 = vmatprep.subr.bf16.mxu0 0
    %1804 = vmatpush1.bf16.xpose.msra.mxu0 0
    %1805 = vmatprep.subr.bf16.mxu0 0
    %1806 = vmatpush1.bf16.xpose.msra.mxu0 0
    %1807 = vmatprep.subr.bf16.mxu0 0
    %1808 = vmatpush1.bf16.xpose.msra.mxu0 0
    %1809 = vmatprep.subr.bf16.mxu0 0
    %1810 = vmatpush1.bf16.xpose.msra.mxu0 0
    %1811 = vmatprep.mubr.bf16.mxu0 0
    %1812 = vmatmul.mubr.bf16.gmra.mrb[0].mxu0 %v1777
    %v1813 = vpop.f32.mrb[0].mxu0
    %v1814 = vadd.f32 %v29, %v1813
    %v1815 = vpop.f32.mrb[0].mxu0
    %v1816 = vpop.f32.mrb[0].mxu0
    %v1817 = vadd.f32 %v30, %v1816
    %v1818 = vpop.f32.mrb[0].mxu0
    %1819 = vdwg.mxu0
    %v1820 = vsel %vm59, %v1814, -inf
    %1821 = vmax.xlane.f32.xlu0 %v1820
    %v1822 = vpop.xlane.xlu0 %1821
    %v1823 = vsel %vm59, %v1817, -inf
    %1824 = vmax.xlane.f32.xlu0 %v1823
    %v1825 = vpop.xlane.xlu0 %1824
    %v1826 = vsub.f32 %v1814, %v1822
    %v1827 = vsub.f32 %v1817, %v1825
    %v1828 = vmul.f32 %v1826, 1.442695
    %v1829 = vpow.pop %v1828
    %v1830 = vmul.f32 %v1827, 1.442695
    %v1831 = vpow.pop %v1830
    %v1832 = vsel %vm59, %v1829, 0.0
    %1833 = vadd.xlane.f32.xlu0 %v1832
    %v1834 = vpop.xlane.xlu0 %1833
    %v1835 = vsel %vm59, %v1831, 0.0
    %1836 = vadd.xlane.f32.xlu0 %v1835
    %v1837 = vpop.xlane.xlu0 %1836
    %v1838 = vrcp.pop %v1834
    %v1839 = vrcp.pop %v1837
    %v1840 = vmul.f32 %v1829, %v1838
    %v1841 = vmul.f32 %v1831, %v1839
    %v1850 = vunpack.c.l.b16 %v1702
    %v1851 = vunpack.c.l.b16 %v1703
    %v1852 = vunpack.c.l.b16 %v1704
    %v1853 = vunpack.c.l.b16 %v1705
    %v1854 = vunpack.c.l.b16 %v1706
    %v1855 = vunpack.c.l.b16 %v1707
    %v1856 = vunpack.c.l.b16 %v1708
    %v1857 = vunpack.c.l.b16 %v1709
    %v1858 = vpack.c.b16 %v1851, %v1850
    %v1859 = vpack.c.b16 %v1853, %v1852
    %v1860 = vpack.c.b16 %v1855, %v1854
    %v1861 = vpack.c.b16 %v1857, %v1856
    %1866 = vmatprep.subr.bf16.mxu0 0
    %1867 = vmatpush1.bf16.msra.mxu0 %v1858
    %1868 = vmatprep.subr.bf16.mxu0 0
    %1869 = vmatpush1.bf16.msra.mxu0 %v1859
    %1870 = vmatprep.subr.bf16.mxu0 0
    %1871 = vmatpush1.bf16.msra.mxu0 %v1860
    %1872 = vmatprep.subr.bf16.mxu0 0
    %1873 = vmatpush1.bf16.msra.mxu0 %v1861
    %1874 = vmatprep.subr.bf16.mxu0 0
    %1875 = vmatpush1.bf16.msra.mxu0 0
    %1876 = vmatprep.subr.bf16.mxu0 0
    %1877 = vmatpush1.bf16.msra.mxu0 0
    %1878 = vmatprep.subr.bf16.mxu0 0
    %1879 = vmatpush1.bf16.msra.mxu0 0
    %1880 = vmatprep.subr.bf16.mxu0 0
    %1881 = vmatpush1.bf16.msra.mxu0 0
    %1882 = vmatprep.subr.bf16.mxu0 0
    %1883 = vmatpush1.bf16.msra.mxu0 0
    %1884 = vmatprep.subr.bf16.mxu0 0
    %1885 = vmatpush1.bf16.msra.mxu0 0
    %1886 = vmatprep.subr.bf16.mxu0 0
    %1887 = vmatpush1.bf16.msra.mxu0 0
    %1888 = vmatprep.subr.bf16.mxu0 0
    %1889 = vmatpush1.bf16.msra.mxu0 0
    %1890 = vmatprep.subr.bf16.mxu0 0
    %1891 = vmatpush1.bf16.msra.mxu0 0
    %1892 = vmatprep.subr.bf16.mxu0 0
    %1893 = vmatpush1.bf16.msra.mxu0 0
    %1894 = vmatprep.subr.bf16.mxu0 0
    %1895 = vmatpush1.bf16.msra.mxu0 0
    %1896 = vmatprep.subr.bf16.mxu0 0
    %1897 = vmatpush1.bf16.msra.mxu0 0
    %1898 = vmatprep.mubr.bf16.mxu0 0
    %1899 = vmatmul.mubr.bf16.gmra.mrb[0].mxu0 %v1517
    %v1900 = vpop.f32.mrb[0].mxu0
    %v1901 = vadd.f32 0.0, %v1900
    %v1902 = vpop.f32.mrb[0].mxu0
    %v1903 = vpop.f32.mrb[0].mxu0
    %v1904 = vadd.f32 0.0, %v1903
    %v1905 = vpop.f32.mrb[0].mxu0
    %1906 = vdwg.mxu0
    %v1907 = vpack.c.bf16 %v1841, %v1840
    %v1908 = vpack.c.bf16 %v1904, %v1901
    %v1910 = vsel %vm59, %v1907, 0
    %1912 = vmatprep.subr.bf16.mxu0 0
    %1913 = vmatpush1.bf16.msra.mxu0 %v1908
    %1914 = vmatprep.subr.bf16.mxu0 0
    %1915 = vmatpush1.bf16.msra.mxu0 0
    %1916 = vmatprep.subr.bf16.mxu0 0
    %1917 = vmatpush1.bf16.msra.mxu0 0
    %1918 = vmatprep.subr.bf16.mxu0 0
    %1919 = vmatpush1.bf16.msra.mxu0 0
    %1920 = vmatprep.subr.bf16.mxu0 0
    %1921 = vmatpush1.bf16.msra.mxu0 0
    %1922 = vmatprep.subr.bf16.mxu0 0
    %1923 = vmatpush1.bf16.msra.mxu0 0
    %1924 = vmatprep.subr.bf16.mxu0 0
    %1925 = vmatpush1.bf16.msra.mxu0 0
    %1926 = vmatprep.subr.bf16.mxu0 0
    %1927 = vmatpush1.bf16.msra.mxu0 0
    %1928 = vmatprep.subr.bf16.mxu0 0
    %1929 = vmatpush1.bf16.msra.mxu0 0
    %1930 = vmatprep.subr.bf16.mxu0 0
    %1931 = vmatpush1.bf16.msra.mxu0 0
    %1932 = vmatprep.subr.bf16.mxu0 0
    %1933 = vmatpush1.bf16.msra.mxu0 0
    %1934 = vmatprep.subr.bf16.mxu0 0
    %1935 = vmatpush1.bf16.msra.mxu0 0
    %1936 = vmatprep.subr.bf16.mxu0 0
    %1937 = vmatpush1.bf16.msra.mxu0 0
    %1938 = vmatprep.subr.bf16.mxu0 0
    %1939 = vmatpush1.bf16.msra.mxu0 0
    %1940 = vmatprep.subr.bf16.mxu0 0
    %1941 = vmatpush1.bf16.msra.mxu0 0
    %1942 = vmatprep.subr.bf16.mxu0 0
    %1943 = vmatpush1.bf16.msra.mxu0 0
    %1944 = vmatprep.mubr.bf16.mxu0 0
    %1945 = vmatmul.mubr.bf16.gmra.mrb[0].mxu0 %v1910
    %v1946 = vpop.f32.mrb[0].mxu0
    %v1947 = vadd.f32 0.0, %v1946
    %v1948 = vpop.f32.mrb[0].mxu0
    %v1949 = vpop.f32.mrb[0].mxu0
    %v1950 = vadd.f32 0.0, %v1949
    %v1951 = vpop.f32.mrb[0].mxu0
    %1952 = vdwg.mxu0
    %v1954 = vsel %vm59, %v1692, 0
    %1956 = vmatprep.subr.bf16.mxu0 0
    %1957 = vmatpush1.bf16.msra.mxu0 %v1693
    %1958 = vmatprep.subr.bf16.mxu0 0
    %1959 = vmatpush1.bf16.msra.mxu0 0
    %1960 = vmatprep.subr.bf16.mxu0 0
    %1961 = vmatpush1.bf16.msra.mxu0 0
    %1962 = vmatprep.subr.bf16.mxu0 0
    %1963 = vmatpush1.bf16.msra.mxu0 0
    %1964 = vmatprep.subr.bf16.mxu0 0
    %1965 = vmatpush1.bf16.msra.mxu0 0
    %1966 = vmatprep.subr.bf16.mxu0 0
    %1967 = vmatpush1.bf16.msra.mxu0 0
    %1968 = vmatprep.subr.bf16.mxu0 0
    %1969 = vmatpush1.bf16.msra.mxu0 0
    %1970 = vmatprep.subr.bf16.mxu0 0
    %1971 = vmatpush1.bf16.msra.mxu0 0
    %1972 = vmatprep.subr.bf16.mxu0 0
    %1973 = vmatpush1.bf16.msra.mxu0 0
    %1974 = vmatprep.subr.bf16.mxu0 0
    %1975 = vmatpush1.bf16.msra.mxu0 0
    %1976 = vmatprep.subr.bf16.mxu0 0
    %1977 = vmatpush1.bf16.msra.mxu0 0
    %1978 = vmatprep.subr.bf16.mxu0 0
    %1979 = vmatpush1.bf16.msra.mxu0 0
    %1980 = vmatprep.subr.bf16.mxu0 0
    %1981 = vmatpush1.bf16.msra.mxu0 0
    %1982 = vmatprep.subr.bf16.mxu0 0
    %1983 = vmatpush1.bf16.msra.mxu0 0
    %1984 = vmatprep.subr.bf16.mxu0 0
    %1985 = vmatpush1.bf16.msra.mxu0 0
    %1986 = vmatprep.subr.bf16.mxu0 0
    %1987 = vmatpush1.bf16.msra.mxu0 0
    %1988 = vmatprep.mubr.bf16.mxu0 0
    %1989 = vmatmul.mubr.bf16.gmra.mrb[0].mxu0 %v1954
    %v1990 = vpop.f32.mrb[0].mxu0
    %v1991 = vadd.f32 %v1947, %v1990
    %v1992 = vpop.f32.mrb[0].mxu0
    %v1993 = vpop.f32.mrb[0].mxu0
    %v1994 = vadd.f32 %v1950, %v1993
    %v1995 = vpop.f32.mrb[0].mxu0
    %1996 = vdwg.mxu0
    %v1997 = vld [vmem:[#allocation2 + $0x1c8] sm:$0xf]
    %v1998 = vld [vmem:[#allocation2 + $0x1cc] sm:$0xf]
    %v1999 = vld [vmem:[#allocation2 + $0x1d0] sm:$0xf]
    %v2000 = vld [vmem:[#allocation2 + $0x1d4] sm:$0xf]
    %v2001 = vld [vmem:[#allocation2 + $0x1d8] sm:$0xf]
    %v2002 = vld [vmem:[#allocation2 + $0x1dc] sm:$0xf]
    %v2003 = vld [vmem:[#allocation2 + $0x1e0] sm:$0xf]
    %v2004 = vld [vmem:[#allocation2 + $0x1e4] sm:$0xf]
    %v2005 = vld [vmem:[#allocation2 + $0x248] sm:$0xf]
    %v2006 = vld [vmem:[#allocation2 + $0x24c] sm:$0xf]
    %v2007 = vld [vmem:[#allocation2 + $0x250] sm:$0xf]
    %v2008 = vld [vmem:[#allocation2 + $0x254] sm:$0xf]
    %v2009 = vld [vmem:[#allocation2 + $0x258] sm:$0xf]
    %v2010 = vld [vmem:[#allocation2 + $0x25c] sm:$0xf]
    %v2011 = vld [vmem:[#allocation2 + $0x260] sm:$0xf]
    %v2012 = vld [vmem:[#allocation2 + $0x264] sm:$0xf]
    %v2021 = vunpack.c.l.b16 %v1997
    %v2022 = vunpack.c.l.b16 %v1998
    %v2023 = vunpack.c.l.b16 %v1999
    %v2024 = vunpack.c.l.b16 %v2000
    %v2025 = vunpack.c.l.b16 %v2001
    %v2026 = vunpack.c.l.b16 %v2002
    %v2027 = vunpack.c.l.b16 %v2003
    %v2028 = vunpack.c.l.b16 %v2004
    %v2029 = vpack.c.b16 %v2022, %v2021
    %v2030 = vpack.c.b16 %v2024, %v2023
    %v2031 = vpack.c.b16 %v2026, %v2025
    %v2032 = vpack.c.b16 %v2028, %v2027
    %2037 = vmatprep.subr.bf16.mxu0 0
    %2038 = vmatpush1.bf16.msra.mxu0 %v2029
    %2039 = vmatprep.subr.bf16.mxu0 0
    %2040 = vmatpush1.bf16.msra.mxu0 %v2030
    %2041 = vmatprep.subr.bf16.mxu0 0
    %2042 = vmatpush1.bf16.msra.mxu0 %v2031
    %2043 = vmatprep.subr.bf16.mxu0 0
    %2044 = vmatpush1.bf16.msra.mxu0 %v2032
    %2045 = vmatprep.subr.bf16.mxu0 0
    %2046 = vmatpush1.bf16.msra.mxu0 0
    %2047 = vmatprep.subr.bf16.mxu0 0
    %2048 = vmatpush1.bf16.msra.mxu0 0
    %2049 = vmatprep.subr.bf16.mxu0 0
    %2050 = vmatpush1.bf16.msra.mxu0 0
    %2051 = vmatprep.subr.bf16.mxu0 0
    %2052 = vmatpush1.bf16.msra.mxu0 0
    %2053 = vmatprep.subr.bf16.mxu0 0
    %2054 = vmatpush1.bf16.msra.mxu0 0
    %2055 = vmatprep.subr.bf16.mxu0 0
    %2056 = vmatpush1.bf16.msra.mxu0 0
    %2057 = vmatprep.subr.bf16.mxu0 0
    %2058 = vmatpush1.bf16.msra.mxu0 0
    %2059 = vmatprep.subr.bf16.mxu0 0
    %2060 = vmatpush1.bf16.msra.mxu0 0
    %2061 = vmatprep.subr.bf16.mxu0 0
    %2062 = vmatpush1.bf16.msra.mxu0 0
    %2063 = vmatprep.subr.bf16.mxu0 0
    %2064 = vmatpush1.bf16.msra.mxu0 0
    %2065 = vmatprep.subr.bf16.mxu0 0
    %2066 = vmatpush1.bf16.msra.mxu0 0
    %2067 = vmatprep.subr.bf16.mxu0 0
    %2068 = vmatpush1.bf16.msra.mxu0 0
    %2069 = vmatprep.mubr.bf16.mxu0 0
    %2070 = vmatmul.mubr.bf16.gmra.mrb[0].mxu0 %v1517
    %v2071 = vpop.f32.mrb[0].mxu0
    %v2072 = vadd.f32 0.0, %v2071
    %v2073 = vpop.f32.mrb[0].mxu0
    %v2074 = vpop.f32.mrb[0].mxu0
    %v2075 = vadd.f32 0.0, %v2074
    %v2076 = vpop.f32.mrb[0].mxu0
    %2077 = vdwg.mxu0
    %v2078 = vpack.c.bf16 %v2075, %v2072
    %v2080 = vsel %vm112, %v2078, 0
    %2082 = vmatprep.subr.bf16.mxu0 0
    %2083 = vmatpush1.bf16.xpose.msra.mxu0 %v1517
    %2084 = vmatprep.subr.bf16.mxu0 0
    %2085 = vmatpush1.bf16.xpose.msra.mxu0 0
    %2086 = vmatprep.subr.bf16.mxu0 0
    %2087 = vmatpush1.bf16.xpose.msra.mxu0 0
    %2088 = vmatprep.subr.bf16.mxu0 0
    %2089 = vmatpush1.bf16.xpose.msra.mxu0 0
    %2090 = vmatprep.subr.bf16.mxu0 0
    %2091 = vmatpush1.bf16.xpose.msra.mxu0 0
    %2092 = vmatprep.subr.bf16.mxu0 0
    %2093 = vmatpush1.bf16.xpose.msra.mxu0 0
    %2094 = vmatprep.subr.bf16.mxu0 0
    %2095 = vmatpush1.bf16.xpose.msra.mxu0 0
    %2096 = vmatprep.subr.bf16.mxu0 0
    %2097 = vmatpush1.bf16.xpose.msra.mxu0 0
    %2098 = vmatprep.subr.bf16.mxu0 0
    %2099 = vmatpush1.bf16.xpose.msra.mxu0 0
    %2100 = vmatprep.subr.bf16.mxu0 0
    %2101 = vmatpush1.bf16.xpose.msra.mxu0 0
    %2102 = vmatprep.subr.bf16.mxu0 0
    %2103 = vmatpush1.bf16.xpose.msra.mxu0 0
    %2104 = vmatprep.subr.bf16.mxu0 0
    %2105 = vmatpush1.bf16.xpose.msra.mxu0 0
    %2106 = vmatprep.subr.bf16.mxu0 0
    %2107 = vmatpush1.bf16.xpose.msra.mxu0 0
    %2108 = vmatprep.subr.bf16.mxu0 0
    %2109 = vmatpush1.bf16.xpose.msra.mxu0 0
    %2110 = vmatprep.subr.bf16.mxu0 0
    %2111 = vmatpush1.bf16.xpose.msra.mxu0 0
    %2112 = vmatprep.subr.bf16.mxu0 0
    %2113 = vmatpush1.bf16.xpose.msra.mxu0 0
    %2114 = vmatprep.mubr.bf16.mxu0 0
    %2115 = vmatmul.mubr.bf16.gmra.mrb[0].mxu0 %v2080
    %v2116 = vpop.f32.mrb[0].mxu0
    %v2117 = vadd.f32 %v29, %v2116
    %v2118 = vpop.f32.mrb[0].mxu0
    %v2119 = vpop.f32.mrb[0].mxu0
    %v2120 = vadd.f32 %v30, %v2119
    %v2121 = vpop.f32.mrb[0].mxu0
    %2122 = vdwg.mxu0
    %v2123 = vsel %vm59, %v2117, -inf
    %2124 = vmax.xlane.f32.xlu0 %v2123
    %v2125 = vpop.xlane.xlu0 %2124
    %v2126 = vsel %vm59, %v2120, -inf
    %2127 = vmax.xlane.f32.xlu0 %v2126
    %v2128 = vpop.xlane.xlu0 %2127
    %v2129 = vsub.f32 %v2117, %v2125
    %v2130 = vsub.f32 %v2120, %v2128
    %v2131 = vmul.f32 %v2129, 1.442695
    %v2132 = vpow.pop %v2131
    %v2133 = vmul.f32 %v2130, 1.442695
    %v2134 = vpow.pop %v2133
    %v2135 = vsel %vm59, %v2132, 0.0
    %2136 = vadd.xlane.f32.xlu0 %v2135
    %v2137 = vpop.xlane.xlu0 %2136
    %v2138 = vsel %vm59, %v2134, 0.0
    %2139 = vadd.xlane.f32.xlu0 %v2138
    %v2140 = vpop.xlane.xlu0 %2139
    %v2141 = vrcp.pop %v2137
    %v2142 = vrcp.pop %v2140
    %v2143 = vmul.f32 %v2132, %v2141
    %v2144 = vmul.f32 %v2134, %v2142
    %v2153 = vunpack.c.l.b16 %v2005
    %v2154 = vunpack.c.l.b16 %v2006
    %v2155 = vunpack.c.l.b16 %v2007
    %v2156 = vunpack.c.l.b16 %v2008
    %v2157 = vunpack.c.l.b16 %v2009
    %v2158 = vunpack.c.l.b16 %v2010
    %v2159 = vunpack.c.l.b16 %v2011
    %v2160 = vunpack.c.l.b16 %v2012
    %v2161 = vpack.c.b16 %v2154, %v2153
    %v2162 = vpack.c.b16 %v2156, %v2155
    %v2163 = vpack.c.b16 %v2158, %v2157
    %v2164 = vpack.c.b16 %v2160, %v2159
    %2169 = vmatprep.subr.bf16.mxu0 0
    %2170 = vmatpush1.bf16.msra.mxu0 %v2161
    %2171 = vmatprep.subr.bf16.mxu0 0
    %2172 = vmatpush1.bf16.msra.mxu0 %v2162
    %2173 = vmatprep.subr.bf16.mxu0 0
    %2174 = vmatpush1.bf16.msra.mxu0 %v2163
    %2175 = vmatprep.subr.bf16.mxu0 0
    %2176 = vmatpush1.bf16.msra.mxu0 %v2164
    %2177 = vmatprep.subr.bf16.mxu0 0
    %2178 = vmatpush1.bf16.msra.mxu0 0
    %2179 = vmatprep.subr.bf16.mxu0 0
    %2180 = vmatpush1.bf16.msra.mxu0 0
    %2181 = vmatprep.subr.bf16.mxu0 0
    %2182 = vmatpush1.bf16.msra.mxu0 0
    %2183 = vmatprep.subr.bf16.mxu0 0
    %2184 = vmatpush1.bf16.msra.mxu0 0
    %2185 = vmatprep.subr.bf16.mxu0 0
    %2186 = vmatpush1.bf16.msra.mxu0 0
    %2187 = vmatprep.subr.bf16.mxu0 0
    %2188 = vmatpush1.bf16.msra.mxu0 0
    %2189 = vmatprep.subr.bf16.mxu0 0
    %2190 = vmatpush1.bf16.msra.mxu0 0
    %2191 = vmatprep.subr.bf16.mxu0 0
    %2192 = vmatpush1.bf16.msra.mxu0 0
    %2193 = vmatprep.subr.bf16.mxu0 0
    %2194 = vmatpush1.bf16.msra.mxu0 0
    %2195 = vmatprep.subr.bf16.mxu0 0
    %2196 = vmatpush1.bf16.msra.mxu0 0
    %2197 = vmatprep.subr.bf16.mxu0 0
    %2198 = vmatpush1.bf16.msra.mxu0 0
    %2199 = vmatprep.subr.bf16.mxu0 0
    %2200 = vmatpush1.bf16.msra.mxu0 0
    %2201 = vmatprep.mubr.bf16.mxu0 0
    %2202 = vmatmul.mubr.bf16.gmra.mrb[0].mxu0 %v1517
    %v2203 = vpop.f32.mrb[0].mxu0
    %v2204 = vadd.f32 0.0, %v2203
    %v2205 = vpop.f32.mrb[0].mxu0
    %v2206 = vpop.f32.mrb[0].mxu0
    %v2207 = vadd.f32 0.0, %v2206
    %v2208 = vpop.f32.mrb[0].mxu0
    %2209 = vdwg.mxu0
    %v2210 = vpack.c.bf16 %v2144, %v2143
    %v2211 = vpack.c.bf16 %v2207, %v2204
    %v2213 = vsel %vm59, %v2210, 0
    %2215 = vmatprep.subr.bf16.mxu0 0
    %2216 = vmatpush1.bf16.msra.mxu0 %v2211
    %2217 = vmatprep.subr.bf16.mxu0 0
    %2218 = vmatpush1.bf16.msra.mxu0 0
    %2219 = vmatprep.subr.bf16.mxu0 0
    %2220 = vmatpush1.bf16.msra.mxu0 0
    %2221 = vmatprep.subr.bf16.mxu0 0
    %2222 = vmatpush1.bf16.msra.mxu0 0
    %2223 = vmatprep.subr.bf16.mxu0 0
    %2224 = vmatpush1.bf16.msra.mxu0 0
    %2225 = vmatprep.subr.bf16.mxu0 0
    %2226 = vmatpush1.bf16.msra.mxu0 0
    %2227 = vmatprep.subr.bf16.mxu0 0
    %2228 = vmatpush1.bf16.msra.mxu0 0
    %2229 = vmatprep.subr.bf16.mxu0 0
    %2230 = vmatpush1.bf16.msra.mxu0 0
    %2231 = vmatprep.subr.bf16.mxu0 0
    %2232 = vmatpush1.bf16.msra.mxu0 0
    %2233 = vmatprep.subr.bf16.mxu0 0
    %2234 = vmatpush1.bf16.msra.mxu0 0
    %2235 = vmatprep.subr.bf16.mxu0 0
    %2236 = vmatpush1.bf16.msra.mxu0 0
    %2237 = vmatprep.subr.bf16.mxu0 0
    %2238 = vmatpush1.bf16.msra.mxu0 0
    %2239 = vmatprep.subr.bf16.mxu0 0
    %2240 = vmatpush1.bf16.msra.mxu0 0
    %2241 = vmatprep.subr.bf16.mxu0 0
    %2242 = vmatpush1.bf16.msra.mxu0 0
    %2243 = vmatprep.subr.bf16.mxu0 0
    %2244 = vmatpush1.bf16.msra.mxu0 0
    %2245 = vmatprep.subr.bf16.mxu0 0
    %2246 = vmatpush1.bf16.msra.mxu0 0
    %2247 = vmatprep.mubr.bf16.mxu0 0
    %2248 = vmatmul.mubr.bf16.gmra.mrb[0].mxu0 %v2213
    %v2249 = vpop.f32.mrb[0].mxu0
    %v2250 = vadd.f32 0.0, %v2249
    %v2251 = vpop.f32.mrb[0].mxu0
    %v2252 = vpop.f32.mrb[0].mxu0
    %v2253 = vadd.f32 0.0, %v2252
    %v2254 = vpop.f32.mrb[0].mxu0
    %2255 = vdwg.mxu0
    %v2256 = vadd.f32 %v1991, %v2250
    %v2257 = vadd.f32 %v1994, %v2253
    %v2258 = vld [vmem:[#allocation2 + $0x1e8] sm:$0xf]
    %v2259 = vld [vmem:[#allocation2 + $0x1ec] sm:$0xf]
    %v2260 = vld [vmem:[#allocation2 + $0x1f0] sm:$0xf]
    %v2261 = vld [vmem:[#allocation2 + $0x1f4] sm:$0xf]
    %v2262 = vld [vmem:[#allocation2 + $0x1f8] sm:$0xf]
    %v2263 = vld [vmem:[#allocation2 + $0x1fc] sm:$0xf]
    %v2264 = vld [vmem:[#allocation2 + $0x200] sm:$0xf]
    %v2265 = vld [vmem:[#allocation2 + $0x204] sm:$0xf]
    %v2266 = vld [vmem:[#allocation2 + $0x268] sm:$0xf]
    %v2267 = vld [vmem:[#allocation2 + $0x26c] sm:$0xf]
    %v2268 = vld [vmem:[#allocation2 + $0x270] sm:$0xf]
    %v2269 = vld [vmem:[#allocation2 + $0x274] sm:$0xf]
    %v2270 = vld [vmem:[#allocation2 + $0x278] sm:$0xf]
    %v2271 = vld [vmem:[#allocation2 + $0x27c] sm:$0xf]
    %v2272 = vld [vmem:[#allocation2 + $0x280] sm:$0xf]
    %v2273 = vld [vmem:[#allocation2 + $0x284] sm:$0xf]
    %v2282 = vunpack.c.l.b16 %v2258
    %v2283 = vunpack.c.l.b16 %v2259
    %v2284 = vunpack.c.l.b16 %v2260
    %v2285 = vunpack.c.l.b16 %v2261
    %v2286 = vunpack.c.l.b16 %v2262
    %v2287 = vunpack.c.l.b16 %v2263
    %v2288 = vunpack.c.l.b16 %v2264
    %v2289 = vunpack.c.l.b16 %v2265
    %v2290 = vpack.c.b16 %v2283, %v2282
    %v2291 = vpack.c.b16 %v2285, %v2284
    %v2292 = vpack.c.b16 %v2287, %v2286
    %v2293 = vpack.c.b16 %v2289, %v2288
    %2298 = vmatprep.subr.bf16.mxu0 0
    %2299 = vmatpush1.bf16.msra.mxu0 %v2290
    %2300 = vmatprep.subr.bf16.mxu0 0
    %2301 = vmatpush1.bf16.msra.mxu0 %v2291
    %2302 = vmatprep.subr.bf16.mxu0 0
    %2303 = vmatpush1.bf16.msra.mxu0 %v2292
    %2304 = vmatprep.subr.bf16.mxu0 0
    %2305 = vmatpush1.bf16.msra.mxu0 %v2293
    %2306 = vmatprep.subr.bf16.mxu0 0
    %2307 = vmatpush1.bf16.msra.mxu0 0
    %2308 = vmatprep.subr.bf16.mxu0 0
    %2309 = vmatpush1.bf16.msra.mxu0 0
    %2310 = vmatprep.subr.bf16.mxu0 0
    %2311 = vmatpush1.bf16.msra.mxu0 0
    %2312 = vmatprep.subr.bf16.mxu0 0
    %2313 = vmatpush1.bf16.msra.mxu0 0
    %2314 = vmatprep.subr.bf16.mxu0 0
    %2315 = vmatpush1.bf16.msra.mxu0 0
    %2316 = vmatprep.subr.bf16.mxu0 0
    %2317 = vmatpush1.bf16.msra.mxu0 0
    %2318 = vmatprep.subr.bf16.mxu0 0
    %2319 = vmatpush1.bf16.msra.mxu0 0
    %2320 = vmatprep.subr.bf16.mxu0 0
    %2321 = vmatpush1.bf16.msra.mxu0 0
    %2322 = vmatprep.subr.bf16.mxu0 0
    %2323 = vmatpush1.bf16.msra.mxu0 0
    %2324 = vmatprep.subr.bf16.mxu0 0
    %2325 = vmatpush1.bf16.msra.mxu0 0
    %2326 = vmatprep.subr.bf16.mxu0 0
    %2327 = vmatpush1.bf16.msra.mxu0 0
    %2328 = vmatprep.subr.bf16.mxu0 0
    %2329 = vmatpush1.bf16.msra.mxu0 0
    %2330 = vmatprep.mubr.bf16.mxu0 0
    %2331 = vmatmul.mubr.bf16.gmra.mrb[0].mxu0 %v1517
    %v2332 = vpop.f32.mrb[0].mxu0
    %v2333 = vadd.f32 0.0, %v2332
    %v2334 = vpop.f32.mrb[0].mxu0
    %v2335 = vpop.f32.mrb[0].mxu0
    %v2336 = vadd.f32 0.0, %v2335
    %v2337 = vpop.f32.mrb[0].mxu0
    %2338 = vdwg.mxu0
    %v2339 = vpack.c.bf16 %v2336, %v2333
    %v2341 = vsel %vm112, %v2339, 0
    %2343 = vmatprep.subr.bf16.mxu0 0
    %2344 = vmatpush1.bf16.xpose.msra.mxu0 %v1517
    %2345 = vmatprep.subr.bf16.mxu0 0
    %2346 = vmatpush1.bf16.xpose.msra.mxu0 0
    %2347 = vmatprep.subr.bf16.mxu0 0
    %2348 = vmatpush1.bf16.xpose.msra.mxu0 0
    %2349 = vmatprep.subr.bf16.mxu0 0
    %2350 = vmatpush1.bf16.xpose.msra.mxu0 0
    %2351 = vmatprep.subr.bf16.mxu0 0
    %2352 = vmatpush1.bf16.xpose.msra.mxu0 0
    %2353 = vmatprep.subr.bf16.mxu0 0
    %2354 = vmatpush1.bf16.xpose.msra.mxu0 0
    %2355 = vmatprep.subr.bf16.mxu0 0
    %2356 = vmatpush1.bf16.xpose.msra.mxu0 0
    %2357 = vmatprep.subr.bf16.mxu0 0
    %2358 = vmatpush1.bf16.xpose.msra.mxu0 0
    %2359 = vmatprep.subr.bf16.mxu0 0
    %2360 = vmatpush1.bf16.xpose.msra.mxu0 0
    %2361 = vmatprep.subr.bf16.mxu0 0
    %2362 = vmatpush1.bf16.xpose.msra.mxu0 0
    %2363 = vmatprep.subr.bf16.mxu0 0
    %2364 = vmatpush1.bf16.xpose.msra.mxu0 0
    %2365 = vmatprep.subr.bf16.mxu0 0
    %2366 = vmatpush1.bf16.xpose.msra.mxu0 0
    %2367 = vmatprep.subr.bf16.mxu0 0
    %2368 = vmatpush1.bf16.xpose.msra.mxu0 0
    %2369 = vmatprep.subr.bf16.mxu0 0
    %2370 = vmatpush1.bf16.xpose.msra.mxu0 0
    %2371 = vmatprep.subr.bf16.mxu0 0
    %2372 = vmatpush1.bf16.xpose.msra.mxu0 0
    %2373 = vmatprep.subr.bf16.mxu0 0
    %2374 = vmatpush1.bf16.xpose.msra.mxu0 0
    %2375 = vmatprep.mubr.bf16.mxu0 0
    %2376 = vmatmul.mubr.bf16.gmra.mrb[0].mxu0 %v2341
    %v2377 = vpop.f32.mrb[0].mxu0
    %v2378 = vadd.f32 %v29, %v2377
    %v2379 = vpop.f32.mrb[0].mxu0
    %v2380 = vpop.f32.mrb[0].mxu0
    %v2381 = vadd.f32 %v30, %v2380
    %v2382 = vpop.f32.mrb[0].mxu0
    %2383 = vdwg.mxu0
    %v2384 = vsel %vm59, %v2378, -inf
    %2385 = vmax.xlane.f32.xlu0 %v2384
    %v2386 = vpop.xlane.xlu0 %2385
    %v2387 = vsel %vm59, %v2381, -inf
    %2388 = vmax.xlane.f32.xlu0 %v2387
    %v2389 = vpop.xlane.xlu0 %2388
    %v2390 = vsub.f32 %v2378, %v2386
    %v2391 = vsub.f32 %v2381, %v2389
    %v2392 = vmul.f32 %v2390, 1.442695
    %v2393 = vpow.pop %v2392
    %v2394 = vmul.f32 %v2391, 1.442695
    %v2395 = vpow.pop %v2394
    %v2396 = vsel %vm59, %v2393, 0.0
    %2397 = vadd.xlane.f32.xlu0 %v2396
    %v2398 = vpop.xlane.xlu0 %2397
    %v2399 = vsel %vm59, %v2395, 0.0
    %2400 = vadd.xlane.f32.xlu0 %v2399
    %v2401 = vpop.xlane.xlu0 %2400
    %v2402 = vrcp.pop %v2398
    %v2403 = vrcp.pop %v2401
    %v2404 = vmul.f32 %v2393, %v2402
    %v2405 = vmul.f32 %v2395, %v2403
    %v2414 = vunpack.c.l.b16 %v2266
    %v2415 = vunpack.c.l.b16 %v2267
    %v2416 = vunpack.c.l.b16 %v2268
    %v2417 = vunpack.c.l.b16 %v2269
    %v2418 = vunpack.c.l.b16 %v2270
    %v2419 = vunpack.c.l.b16 %v2271
    %v2420 = vunpack.c.l.b16 %v2272
    %v2421 = vunpack.c.l.b16 %v2273
    %v2422 = vpack.c.b16 %v2415, %v2414
    %v2423 = vpack.c.b16 %v2417, %v2416
    %v2424 = vpack.c.b16 %v2419, %v2418
    %v2425 = vpack.c.b16 %v2421, %v2420
    %2430 = vmatprep.subr.bf16.mxu0 0
    %2431 = vmatpush1.bf16.msra.mxu0 %v2422
    %2432 = vmatprep.subr.bf16.mxu0 0
    %2433 = vmatpush1.bf16.msra.mxu0 %v2423
    %2434 = vmatprep.subr.bf16.mxu0 0
    %2435 = vmatpush1.bf16.msra.mxu0 %v2424
    %2436 = vmatprep.subr.bf16.mxu0 0
    %2437 = vmatpush1.bf16.msra.mxu0 %v2425
    %2438 = vmatprep.subr.bf16.mxu0 0
    %2439 = vmatpush1.bf16.msra.mxu0 0
    %2440 = vmatprep.subr.bf16.mxu0 0
    %2441 = vmatpush1.bf16.msra.mxu0 0
    %2442 = vmatprep.subr.bf16.mxu0 0
    %2443 = vmatpush1.bf16.msra.mxu0 0
    %2444 = vmatprep.subr.bf16.mxu0 0
    %2445 = vmatpush1.bf16.msra.mxu0 0
    %2446 = vmatprep.subr.bf16.mxu0 0
    %2447 = vmatpush1.bf16.msra.mxu0 0
    %2448 = vmatprep.subr.bf16.mxu0 0
    %2449 = vmatpush1.bf16.msra.mxu0 0
    %2450 = vmatprep.subr.bf16.mxu0 0
    %2451 = vmatpush1.bf16.msra.mxu0 0
    %2452 = vmatprep.subr.bf16.mxu0 0
    %2453 = vmatpush1.bf16.msra.mxu0 0
    %2454 = vmatprep.subr.bf16.mxu0 0
    %2455 = vmatpush1.bf16.msra.mxu0 0
    %2456 = vmatprep.subr.bf16.mxu0 0
    %2457 = vmatpush1.bf16.msra.mxu0 0
    %2458 = vmatprep.subr.bf16.mxu0 0
    %2459 = vmatpush1.bf16.msra.mxu0 0
    %2460 = vmatprep.subr.bf16.mxu0 0
    %2461 = vmatpush1.bf16.msra.mxu0 0
    %2462 = vmatprep.mubr.bf16.mxu0 0
    %2463 = vmatmul.mubr.bf16.gmra.mrb[0].mxu0 %v1517
    %v2464 = vpop.f32.mrb[0].mxu0
    %v2465 = vadd.f32 0.0, %v2464
    %v2466 = vpop.f32.mrb[0].mxu0
    %v2467 = vpop.f32.mrb[0].mxu0
    %v2468 = vadd.f32 0.0, %v2467
    %v2469 = vpop.f32.mrb[0].mxu0
    %2470 = vdwg.mxu0
    %v2471 = vpack.c.bf16 %v2405, %v2404
    %v2472 = vpack.c.bf16 %v2468, %v2465
    %v2474 = vsel %vm59, %v2471, 0
    %2476 = vmatprep.subr.bf16.mxu0 0
    %2477 = vmatpush1.bf16.msra.mxu0 %v2472
    %2478 = vmatprep.subr.bf16.mxu0 0
    %2479 = vmatpush1.bf16.msra.mxu0 0
    %2480 = vmatprep.subr.bf16.mxu0 0
    %2481 = vmatpush1.bf16.msra.mxu0 0
    %2482 = vmatprep.subr.bf16.mxu0 0
    %2483 = vmatpush1.bf16.msra.mxu0 0
    %2484 = vmatprep.subr.bf16.mxu0 0
    %2485 = vmatpush1.bf16.msra.mxu0 0
    %2486 = vmatprep.subr.bf16.mxu0 0
    %2487 = vmatpush1.bf16.msra.mxu0 0
    %2488 = vmatprep.subr.bf16.mxu0 0
    %2489 = vmatpush1.bf16.msra.mxu0 0
    %2490 = vmatprep.subr.bf16.mxu0 0
    %2491 = vmatpush1.bf16.msra.mxu0 0
    %2492 = vmatprep.subr.bf16.mxu0 0
    %2493 = vmatpush1.bf16.msra.mxu0 0
    %2494 = vmatprep.subr.bf16.mxu0 0
    %2495 = vmatpush1.bf16.msra.mxu0 0
    %2496 = vmatprep.subr.bf16.mxu0 0
    %2497 = vmatpush1.bf16.msra.mxu0 0
    %2498 = vmatprep.subr.bf16.mxu0 0
    %2499 = vmatpush1.bf16.msra.mxu0 0
    %2500 = vmatprep.subr.bf16.mxu0 0
    %2501 = vmatpush1.bf16.msra.mxu0 0
    %2502 = vmatprep.subr.bf16.mxu0 0
    %2503 = vmatpush1.bf16.msra.mxu0 0
    %2504 = vmatprep.subr.bf16.mxu0 0
    %2505 = vmatpush1.bf16.msra.mxu0 0
    %2506 = vmatprep.subr.bf16.mxu0 0
    %2507 = vmatpush1.bf16.msra.mxu0 0
    %2508 = vmatprep.mubr.bf16.mxu0 0
    %2509 = vmatmul.mubr.bf16.gmra.mrb[0].mxu0 %v2474
    %v2510 = vpop.f32.mrb[0].mxu0
    %v2511 = vadd.f32 0.0, %v2510
    %v2512 = vpop.f32.mrb[0].mxu0
    %v2513 = vpop.f32.mrb[0].mxu0
    %v2514 = vadd.f32 0.0, %v2513
    %v2515 = vpop.f32.mrb[0].mxu0
    %2516 = vdwg.mxu0
    %v2517 = vadd.f32 %v2256, %v2511
    %v2518 = vadd.f32 %v2257, %v2514
    %v2519 = vadd.f32 %v2517, %v1473
    %v2520 = vadd.f32 %v2518, %v1474
    %v2521 = vld [vmem:[%s2 + $0x18] sm:$0x1]
    %v2522 = vld [vmem:[%s2 + $0x19] sm:$0x1]
    %v2523 = vsel %vm112, %v2519, 0.0
    %2524 = vadd.xlane.f32.xlu0 %v2523
    %v2525 = vpop.xlane.xlu0 %2524
    %v2526 = vsel %vm112, %v2520, 0.0
    %2527 = vadd.xlane.f32.xlu0 %v2526
    %v2528 = vpop.xlane.xlu0 %2527
    %v2529 = vmul.f32 %v2525, %v119
    %v2530 = vmul.f32 %v2528, %v119
    %v2531 = vsub.f32 %v2519, %v2529
    %v2532 = vsub.f32 %v2520, %v2530
    %v2533 = vmul.f32 %v2531, %v2531
    %v2534 = vmul.f32 %v2532, %v2532
    %v2535 = vsel %vm112, %v2533, 0.0
    %2536 = vadd.xlane.f32.xlu0 %v2535
    %v2537 = vpop.xlane.xlu0 %2536
    %v2538 = vsel %vm112, %v2534, 0.0
    %2539 = vadd.xlane.f32.xlu0 %v2538
    %v2540 = vpop.xlane.xlu0 %2539
    %v2541 = vmul.f32 %v2537, %v119
    %v2542 = vmul.f32 %v2540, %v119
    %v2543 = vadd.f32 %v2541, 1e-06
    %v2544 = vadd.f32 %v2542, 1e-06
    %v2545 = vrsqrt.pop %v2543
    %v2546 = vrsqrt.pop %v2544
    %v2547 = vmul.f32 %v2531, %v2545
    %v2548 = vmul.f32 %v2532, %v2546
    %v2549 = vlaneseq
    %v2550 = vshrl.u32 %v2549, 7
    %v2551 = vsub.s32 0, %v2550
    %v2552 = vrot.slane %v2521, %v2551
    %v2553 = vmul.f32 %v2547, %v2552
    %v2554 = vmul.f32 %v2548, %v2552
    %v2555 = vlaneseq
    %v2556 = vshrl.u32 %v2555, 7
    %v2557 = vsub.s32 0, %v2556
    %v2558 = vrot.slane %v2522, %v2557
    %v2559 = vadd.f32 %v2553, %v2558
    %v2560 = vadd.f32 %v2554, %v2558
    %v2561 = vpack.c.bf16 %v2560, %v2559
    %v2562 = vld [vmem:[#allocation2 + $0x288] sm:$0xf]
    %v2563 = vld [vmem:[#allocation2 + $0x28c] sm:$0xf]
    %v2564 = vld [vmem:[#allocation2 + $0x290] sm:$0xf]
    %v2565 = vld [vmem:[#allocation2 + $0x294] sm:$0xf]
    %v2566 = vld [vmem:[#allocation2 + $0x298] sm:$0xf]
    %v2567 = vld [vmem:[#allocation2 + $0x29c] sm:$0xf]
    %v2568 = vld [vmem:[#allocation2 + $0x2a0] sm:$0xf]
    %v2569 = vld [vmem:[#allocation2 + $0x2a4] sm:$0xf]
    %v2570 = vld [vmem:[#allocation2 + $0x2a8] sm:$0xf]
    %v2571 = vld [vmem:[#allocation2 + $0x2ac] sm:$0xf]
    %v2572 = vld [vmem:[#allocation2 + $0x2b0] sm:$0xf]
    %v2573 = vld [vmem:[#allocation2 + $0x2b4] sm:$0xf]
    %v2574 = vld [vmem:[#allocation2 + $0x2b8] sm:$0xf]
    %v2575 = vld [vmem:[#allocation2 + $0x2bc] sm:$0xf]
    %v2576 = vld [vmem:[#allocation2 + $0x2c0] sm:$0xf]
    %v2577 = vld [vmem:[#allocation2 + $0x2c4] sm:$0xf]
    %v2578 = vld [vmem:[#allocation2 + $0x2c8] sm:$0xf]
    %v2579 = vld [vmem:[#allocation2 + $0x2cc] sm:$0xf]
    %v2580 = vld [vmem:[#allocation2 + $0x2d0] sm:$0xf]
    %v2581 = vld [vmem:[#allocation2 + $0x2d4] sm:$0xf]
    %v2582 = vld [vmem:[#allocation2 + $0x2d8] sm:$0xf]
    %v2583 = vld [vmem:[#allocation2 + $0x2dc] sm:$0xf]
    %v2584 = vld [vmem:[#allocation2 + $0x2e0] sm:$0xf]
    %v2585 = vld [vmem:[#allocation2 + $0x2e4] sm:$0xf]
    %v2586 = vld [vmem:[%s2 + $0x1c] sm:$0x1]
    %v2587 = vld [vmem:[%s2 + $0x1d] sm:$0x1]
    %v2588 = vlaneseq
    %v2589 = vshrl.u32 %v2588, 7
    %v2590 = vsub.s32 0, %v2589
    %v2591 = vrot.slane %v2586, %v2590
    %v2600 = vunpack.c.l.b16 %v2562
    %v2601 = vunpack.c.l.b16 %v2563
    %v2602 = vunpack.c.l.b16 %v2564
    %v2603 = vunpack.c.l.b16 %v2565
    %v2604 = vunpack.c.l.b16 %v2566
    %v2605 = vunpack.c.l.b16 %v2567
    %v2606 = vunpack.c.l.b16 %v2568
    %v2607 = vunpack.c.l.b16 %v2569
    %v2608 = vpack.c.b16 %v2601, %v2600
    %v2609 = vpack.c.b16 %v2603, %v2602
    %v2610 = vpack.c.b16 %v2605, %v2604
    %v2611 = vpack.c.b16 %v2607, %v2606
    %v2617 = vsel %vm112, %v2561, 0
    %2619 = vmatprep.subr.bf16.mxu0 0
    %2620 = vmatpush1.bf16.msra.mxu0 %v2608
    %2621 = vmatprep.subr.bf16.mxu0 0
    %2622 = vmatpush1.bf16.msra.mxu0 %v2609
    %2623 = vmatprep.subr.bf16.mxu0 0
    %2624 = vmatpush1.bf16.msra.mxu0 %v2610
    %2625 = vmatprep.subr.bf16.mxu0 0
    %2626 = vmatpush1.bf16.msra.mxu0 %v2611
    %2627 = vmatprep.subr.bf16.mxu0 0
    %2628 = vmatpush1.bf16.msra.mxu0 0
    %2629 = vmatprep.subr.bf16.mxu0 0
    %2630 = vmatpush1.bf16.msra.mxu0 0
    %2631 = vmatprep.subr.bf16.mxu0 0
    %2632 = vmatpush1.bf16.msra.mxu0 0
    %2633 = vmatprep.subr.bf16.mxu0 0
    %2634 = vmatpush1.bf16.msra.mxu0 0
    %2635 = vmatprep.subr.bf16.mxu0 0
    %2636 = vmatpush1.bf16.msra.mxu0 0
    %2637 = vmatprep.subr.bf16.mxu0 0
    %2638 = vmatpush1.bf16.msra.mxu0 0
    %2639 = vmatprep.subr.bf16.mxu0 0
    %2640 = vmatpush1.bf16.msra.mxu0 0
    %2641 = vmatprep.subr.bf16.mxu0 0
    %2642 = vmatpush1.bf16.msra.mxu0 0
    %2643 = vmatprep.subr.bf16.mxu0 0
    %2644 = vmatpush1.bf16.msra.mxu0 0
    %2645 = vmatprep.subr.bf16.mxu0 0
    %2646 = vmatpush1.bf16.msra.mxu0 0
    %2647 = vmatprep.subr.bf16.mxu0 0
    %2648 = vmatpush1.bf16.msra.mxu0 0
    %2649 = vmatprep.subr.bf16.mxu0 0
    %2650 = vmatpush1.bf16.msra.mxu0 0
    %2651 = vmatprep.mubr.bf16.mxu0 0
    %2652 = vmatmul.mubr.bf16.gmra.mrb[0].mxu0 %v2617
    %v2653 = vpop.f32.mrb[0].mxu0
    %v2654 = vadd.f32 %v2591, %v2653
    %v2655 = vpop.f32.mrb[0].mxu0
    %v2656 = vpop.f32.mrb[0].mxu0
    %v2657 = vadd.f32 %v2591, %v2656
    %v2658 = vpop.f32.mrb[0].mxu0
    %2659 = vdwg.mxu0
    %v2660 = vmax.f32 %v2654, 0.0
    %v2661 = vmax.f32 %v2657, 0.0
    %v2662 = vpack.c.bf16 %v2661, %v2660
    %v2663 = vlaneseq
    %v2664 = vshrl.u32 %v2663, 7
    %v2665 = vsub.s32 0, %v2664
    %v2666 = vrot.slane %v2587, %v2665
    %v2683 = vunpack.c.l.b16 %v2570
    %v2684 = vunpack.c.l.b16 %v2571
    %v2685 = vunpack.c.l.b16 %v2572
    %v2686 = vunpack.c.l.b16 %v2573
    %v2687 = vunpack.c.l.b16 %v2574
    %v2688 = vunpack.c.l.b16 %v2575
    %v2689 = vunpack.c.l.b16 %v2576
    %v2690 = vunpack.c.l.b16 %v2577
    %v2691 = vunpack.c.l.b16 %v2578
    %v2692 = vunpack.c.l.b16 %v2579
    %v2693 = vunpack.c.l.b16 %v2580
    %v2694 = vunpack.c.l.b16 %v2581
    %v2695 = vunpack.c.l.b16 %v2582
    %v2696 = vunpack.c.l.b16 %v2583
    %v2697 = vunpack.c.l.b16 %v2584
    %v2698 = vunpack.c.l.b16 %v2585
    %v2699 = vpack.c.b16 %v2684, %v2683
    %v2700 = vpack.c.b16 %v2686, %v2685
    %v2701 = vpack.c.b16 %v2688, %v2687
    %v2702 = vpack.c.b16 %v2690, %v2689
    %v2703 = vpack.c.b16 %v2692, %v2691
    %v2704 = vpack.c.b16 %v2694, %v2693
    %v2705 = vpack.c.b16 %v2696, %v2695
    %v2706 = vpack.c.b16 %v2698, %v2697
    %2715 = vmatprep.subr.bf16.mxu0 0
    %2716 = vmatpush1.bf16.msra.mxu0 %v2699
    %2717 = vmatprep.subr.bf16.mxu0 0
    %2718 = vmatpush1.bf16.msra.mxu0 %v2700
    %2719 = vmatprep.subr.bf16.mxu0 0
    %2720 = vmatpush1.bf16.msra.mxu0 %v2701
    %2721 = vmatprep.subr.bf16.mxu0 0
    %2722 = vmatpush1.bf16.msra.mxu0 %v2702
    %2723 = vmatprep.subr.bf16.mxu0 0
    %2724 = vmatpush1.bf16.msra.mxu0 %v2703
    %2725 = vmatprep.subr.bf16.mxu0 0
    %2726 = vmatpush1.bf16.msra.mxu0 %v2704
    %2727 = vmatprep.subr.bf16.mxu0 0
    %2728 = vmatpush1.bf16.msra.mxu0 %v2705
    %2729 = vmatprep.subr.bf16.mxu0 0
    %2730 = vmatpush1.bf16.msra.mxu0 %v2706
    %2731 = vmatprep.subr.bf16.mxu0 0
    %2732 = vmatpush1.bf16.msra.mxu0 0
    %2733 = vmatprep.subr.bf16.mxu0 0
    %2734 = vmatpush1.bf16.msra.mxu0 0
    %2735 = vmatprep.subr.bf16.mxu0 0
    %2736 = vmatpush1.bf16.msra.mxu0 0
    %2737 = vmatprep.subr.bf16.mxu0 0
    %2738 = vmatpush1.bf16.msra.mxu0 0
    %2739 = vmatprep.subr.bf16.mxu0 0
    %2740 = vmatpush1.bf16.msra.mxu0 0
    %2741 = vmatprep.subr.bf16.mxu0 0
    %2742 = vmatpush1.bf16.msra.mxu0 0
    %2743 = vmatprep.subr.bf16.mxu0 0
    %2744 = vmatpush1.bf16.msra.mxu0 0
    %2745 = vmatprep.subr.bf16.mxu0 0
    %2746 = vmatpush1.bf16.msra.mxu0 0
    %2747 = vmatprep.mubr.bf16.mxu0 0
    %2748 = vmatmul.mubr.bf16.gmra.mrb[0].mxu0 %v2662
    %v2749 = vpop.f32.mrb[0].mxu0
    %v2750 = vadd.f32 %v2666, %v2749
    %v2751 = vpop.f32.mrb[0].mxu0
    %v2752 = vpop.f32.mrb[0].mxu0
    %v2753 = vadd.f32 %v2666, %v2752
    %v2754 = vpop.f32.mrb[0].mxu0
    %2755 = vdwg.mxu0
    %v2756 = vadd.f32 %v2750, %v2559
    %v2757 = vadd.f32 %v2753, %v2560
    %v2758 = vld [vmem:[%s2 + $0x1a] sm:$0x1]
    %v2759 = vld [vmem:[%s2 + $0x1b] sm:$0x1]
    %v2760 = vsel %vm112, %v2756, 0.0
    %2761 = vadd.xlane.f32.xlu0 %v2760
    %v2762 = vpop.xlane.xlu0 %2761
    %v2763 = vsel %vm112, %v2757, 0.0
    %2764 = vadd.xlane.f32.xlu0 %v2763
    %v2765 = vpop.xlane.xlu0 %2764
    %v2766 = vmul.f32 %v2762, %v119
    %v2767 = vmul.f32 %v2765, %v119
    %v2768 = vsub.f32 %v2756, %v2766
    %v2769 = vsub.f32 %v2757, %v2767
    %v2770 = vmul.f32 %v2768, %v2768
    %v2771 = vmul.f32 %v2769, %v2769
    %v2772 = vsel %vm112, %v2770, 0.0
    %2773 = vadd.xlane.f32.xlu0 %v2772
    %v2774 = vpop.xlane.xlu0 %2773
    %v2775 = vsel %vm112, %v2771, 0.0
    %2776 = vadd.xlane.f32.xlu0 %v2775
    %v2777 = vpop.xlane.xlu0 %2776
    %v2778 = vmul.f32 %v2774, %v119
    %v2779 = vmul.f32 %v2777, %v119
    %v2780 = vadd.f32 %v2778, 1e-06
    %v2781 = vadd.f32 %v2779, 1e-06
    %v2782 = vrsqrt.pop %v2780
    %v2783 = vrsqrt.pop %v2781
    %v2784 = vmul.f32 %v2768, %v2782
    %v2785 = vmul.f32 %v2769, %v2783
    %v2786 = vlaneseq
    %v2787 = vshrl.u32 %v2786, 7
    %v2788 = vsub.s32 0, %v2787
    %v2789 = vrot.slane %v2758, %v2788
    %v2790 = vmul.f32 %v2784, %v2789
    %v2791 = vmul.f32 %v2785, %v2789
    %v2792 = vlaneseq
    %v2793 = vshrl.u32 %v2792, 7
    %v2794 = vsub.s32 0, %v2793
    %v2795 = vrot.slane %v2759, %v2794
    %v2796 = vadd.f32 %v2790, %v2795
    %v2797 = vadd.f32 %v2791, %v2795
    %v2799 = vsel %vm59, %v35, 0
    %2801 = vmatprep.subr.mxu0 0.0
    %2802 = vmatpush1.msra.mxu0 %v2796
    %2803 = vmatprep.subr.mxu0 0.0
    %2804 = vmatpush1.msra.mxu0 %v2797
    %2805 = vmatprep.subr.mxu0 0.0
    %2806 = vmatpush1.msra.mxu0 0.0
    %2807 = vmatprep.subr.mxu0 0.0
    %2808 = vmatpush1.msra.mxu0 0.0
    %2809 = vmatprep.subr.mxu0 0.0
    %2810 = vmatpush1.msra.mxu0 0.0
    %2811 = vmatprep.subr.mxu0 0.0
    %2812 = vmatpush1.msra.mxu0 0.0
    %2813 = vmatprep.subr.mxu0 0.0
    %2814 = vmatpush1.msra.mxu0 0.0
    %2815 = vmatprep.subr.mxu0 0.0
    %2816 = vmatpush1.msra.mxu0 0.0
    %2817 = vmatprep.subr.mxu0 0.0
    %2818 = vmatpush1.msra.mxu0 0.0
    %2819 = vmatprep.subr.mxu0 0.0
    %2820 = vmatpush1.msra.mxu0 0.0
    %2821 = vmatprep.subr.mxu0 0.0
    %2822 = vmatpush1.msra.mxu0 0.0
    %2823 = vmatprep.subr.mxu0 0.0
    %2824 = vmatpush1.msra.mxu0 0.0
    %2825 = vmatprep.subr.mxu0 0.0
    %2826 = vmatpush1.msra.mxu0 0.0
    %2827 = vmatprep.subr.mxu0 0.0
    %2828 = vmatpush1.msra.mxu0 0.0
    %2829 = vmatprep.subr.mxu0 0.0
    %2830 = vmatpush1.msra.mxu0 0.0
    %2831 = vmatprep.subr.mxu0 0.0
    %2832 = vmatpush1.msra.mxu0 0.0
    %2833 = vmatprep.subr.mxu0 0.0
    %2834 = vmatpush1.msra.mxu0 0.0
    %2835 = vmatprep.subr.mxu0 0.0
    %2836 = vmatpush1.msra.mxu0 0.0
    %2837 = vmatprep.subr.mxu0 0.0
    %2838 = vmatpush1.msra.mxu0 0.0
    %2839 = vmatprep.subr.mxu0 0.0
    %2840 = vmatpush1.msra.mxu0 0.0
    %2841 = vmatprep.subr.mxu0 0.0
    %2842 = vmatpush1.msra.mxu0 0.0
    %2843 = vmatprep.subr.mxu0 0.0
    %2844 = vmatpush1.msra.mxu0 0.0
    %2845 = vmatprep.subr.mxu0 0.0
    %2846 = vmatpush1.msra.mxu0 0.0
    %2847 = vmatprep.subr.mxu0 0.0
    %2848 = vmatpush1.msra.mxu0 0.0
    %2849 = vmatprep.subr.mxu0 0.0
    %2850 = vmatpush1.msra.mxu0 0.0
    %2851 = vmatprep.subr.mxu0 0.0
    %2852 = vmatpush1.msra.mxu0 0.0
    %2853 = vmatprep.subr.mxu0 0.0
    %2854 = vmatpush1.msra.mxu0 0.0
    %2855 = vmatprep.subr.mxu0 0.0
    %2856 = vmatpush1.msra.mxu0 0.0
    %2857 = vmatprep.subr.mxu0 0.0
    %2858 = vmatpush1.msra.mxu0 0.0
    %2859 = vmatprep.subr.mxu0 0.0
    %2860 = vmatpush1.msra.mxu0 0.0
    %2861 = vmatprep.subr.mxu0 0.0
    %2862 = vmatpush1.msra.mxu0 0.0
    %2863 = vmatprep.subr.mxu0 0.0
    %2864 = vmatpush1.msra.mxu0 0.0
    %2865 = vmatprep.mubr.f32.mxu0 0.0
    %2866 = vmatmul.mubr.f32.gmra.mrb[0].mxu0 %v2799
    %v2867 = vpop.f32.mrb[0].mxu0
    %v2868 = vadd.f32 0.0, %v2867
    %v2869 = vpop.f32.mrb[0].mxu0
    %2870 = vdwg.mxu0
    %v2871 = vld [vmem:[#allocation2 + $0x8] sm:$0xf]
    %v2872 = vld [vmem:[#allocation2 + $0xc] sm:$0xf]
    %v2873 = vld [vmem:[#allocation2 + $0x10] sm:$0xf]
    %v2874 = vld [vmem:[#allocation2 + $0x14] sm:$0xf]
    %v2875 = vld [vmem:[#allocation2 + $0x18] sm:$0xf]
    %v2876 = vld [vmem:[#allocation2 + $0x1c] sm:$0xf]
    %v2877 = vld [vmem:[#allocation2 + $0x20] sm:$0xf]
    %v2878 = vld [vmem:[#allocation2 + $0x24] sm:$0xf]
    %v2879 = vpack.c.bf16 %v2868, %v2868
    %v2888 = vunpack.c.l.b16 %v2871
    %v2889 = vunpack.c.l.b16 %v2872
    %v2890 = vunpack.c.l.b16 %v2873
    %v2891 = vunpack.c.l.b16 %v2874
    %v2892 = vunpack.c.l.b16 %v2875
    %v2893 = vunpack.c.l.b16 %v2876
    %v2894 = vunpack.c.l.b16 %v2877
    %v2895 = vunpack.c.l.b16 %v2878
    %v2896 = vpack.c.b16 %v2889, %v2888
    %v2897 = vpack.c.b16 %v2891, %v2890
    %v2898 = vpack.c.b16 %v2893, %v2892
    %v2899 = vpack.c.b16 %v2895, %v2894
    %v2905 = vsel %vm112, %v2879, 0
    %2907 = vmatprep.subr.bf16.mxu0 0
    %2908 = vmatpush1.bf16.msra.mxu0 %v2896
    %2909 = vmatprep.subr.bf16.mxu0 0
    %2910 = vmatpush1.bf16.msra.mxu0 %v2897
    %2911 = vmatprep.subr.bf16.mxu0 0
    %2912 = vmatpush1.bf16.msra.mxu0 %v2898
    %2913 = vmatprep.subr.bf16.mxu0 0
    %2914 = vmatpush1.bf16.msra.mxu0 %v2899
    %2915 = vmatprep.subr.bf16.mxu0 0
    %2916 = vmatpush1.bf16.msra.mxu0 0
    %2917 = vmatprep.subr.bf16.mxu0 0
    %2918 = vmatpush1.bf16.msra.mxu0 0
    %2919 = vmatprep.subr.bf16.mxu0 0
    %2920 = vmatpush1.bf16.msra.mxu0 0
    %2921 = vmatprep.subr.bf16.mxu0 0
    %2922 = vmatpush1.bf16.msra.mxu0 0
    %2923 = vmatprep.subr.bf16.mxu0 0
    %2924 = vmatpush1.bf16.msra.mxu0 0
    %2925 = vmatprep.subr.bf16.mxu0 0
    %2926 = vmatpush1.bf16.msra.mxu0 0
    %2927 = vmatprep.subr.bf16.mxu0 0
    %2928 = vmatpush1.bf16.msra.mxu0 0
    %2929 = vmatprep.subr.bf16.mxu0 0
    %2930 = vmatpush1.bf16.msra.mxu0 0
    %2931 = vmatprep.subr.bf16.mxu0 0
    %2932 = vmatpush1.bf16.msra.mxu0 0
    %2933 = vmatprep.subr.bf16.mxu0 0
    %2934 = vmatpush1.bf16.msra.mxu0 0
    %2935 = vmatprep.subr.bf16.mxu0 0
    %2936 = vmatpush1.bf16.msra.mxu0 0
    %2937 = vmatprep.subr.bf16.mxu0 0
    %2938 = vmatpush1.bf16.msra.mxu0 0
    %2939 = vmatprep.mubr.bf16.mxu0 0
    %2940 = vmatmul.mubr.bf16.gmra.mrb[0].mxu0 %v2905
    %v2941 = vpop.f32.mrb[0].mxu0
    %v2942 = vadd.f32 0.0, %v2941
    %v2943 = vpop.f32.mrb[0].mxu0
    %v2944 = vpop.f32.mrb[0].mxu0
    %v2945 = vpop.f32.mrb[0].mxu0
    %2946 = vdwg.mxu0
    %2947 = vst [vmem:[%s3] sm:$0xff] %v2942
    // Predicated region
    $region18: #{_forward.1} parent=1 // pred_check
      _
    $region19: #{_forward.1} parent=1 // pred_check_branch
      %2949 = sbr.rel (0) target = $region21
    $region20: #{_forward.1} parent=1 // pred_region
      _
    $region21: #{_forward.1} parent=1 // pred_fallthru
      _
    // Predicated region
    $region22: #{_forward.1} parent=1 // pred_check
      _
    $region23: #{_forward.1} parent=1 // pred_check_branch
      %2951 = sbr.rel (0) target = $region25
    $region24: #{_forward.1} parent=1 // pred_region
      _
    $region25: #{_forward.1} parent=1 // pred_fallthru
      _
    %2952 = vsyncpa [#allocation3], 1

</llo_original>
